<compile_context>
chip_gen: v6e
topology: v6e:2x2x1
jax: 0.10.0
libtpu: 0.0.40
codegen_flags: <defaults>
</compile_context>

<pallas_src>
import jax
import jax.numpy as jnp
import numpy as np
from jax import lax
from jax.experimental import pallas as pl
from jax.experimental.pallas import tpu as pltpu


# ----------------------------------------------------------------------------
# Fused kernel: conv1 -> lrelu -> bn -> conv2 -> lrelu -> bn -> global avg pool
# ----------------------------------------------------------------------------
def branch_two_fused_kernel(x_ref, w1_ref, w2_ref, a1_ref, a2_ref, o_ref,
                            xp1_ref, xp2_ref, p1_ref, p2_ref):
    # x_ref  : (BB, H, W, Cin)    f32   input tile (BB batch items)
    # w1_ref : (9*Cin, 64)        bf16  conv1 weights, im2col layout (tap-major)
    # w2_ref : (9*64, Cout)       bf16  conv2 weights, im2col layout
    # a1_ref : (3, 64)            f32   rows = [conv bias, bn scale, bn bias]
    # a2_ref : (3, Cout)          f32   rows = [conv bias, bn scale, bn bias]
    # o_ref  : (BB, 1, Cout)      f32   pooled output
    # xp1_ref: (H+2, W+2, Cin)    f32   VMEM scratch: zero-padded conv1 input
    # xp2_ref: (H+2, W+2, 64)     f32   VMEM scratch: zero-padded conv2 input
    # p1_ref : (H*W, 9*Cin)       bf16  VMEM scratch: im2col patches for conv1
    # p2_ref : (H*W, 9*64)        bf16  VMEM scratch: im2col patches for conv2
    BB, H, W, Cin = x_ref.shape
    C1 = xp2_ref.shape[2]          # 64
    HW = H * W

    w1 = w1_ref[...]
    w2 = w2_ref[...]
    a1 = a1_ref[...]
    a2 = a2_ref[...]

    # Zero the padded scratches once per grid step (only the halo matters; the
    # interior is fully overwritten for every batch item below).
    xp1_ref[...] = jnp.zeros_like(xp1_ref)
    xp2_ref[...] = jnp.zeros_like(xp2_ref)

    def im2col_to(xp, C, p_ref):
        # xp: (H+2, W+2, C) padded activation (f32 value)
        # Fill p_ref (H*W, 9*C) with tap-major columns (dy, dx, c), cast to bf16
        # so the MXU sees a dense bf16 operand with a deep K contraction.
        for dy in range(3):
            for dx in range(3):
                t = dy * 3 + dx
                p_ref[:, t * C:(t + 1) * C] = (
                    xp[dy:dy + H, dx:dx + W, :]
                    .reshape(HW, C)
                    .astype(jnp.bfloat16))

    for b in range(BB):
        # ---- conv1: one (HW, 9*Cin) x (9*Cin, 64) matmul -------------------
        xp1_ref[1:H + 1, 1:W + 1, :] = x_ref[b]
        im2col_to(xp1_ref[...], Cin, p1_ref)
        y1 = jnp.dot(p1_ref[...], w1, preferred_element_type=jnp.float32)
        y1 = y1 + a1[0:1, :]                       # conv bias
        y1 = jnp.where(y1 > 0, y1, 0.01 * y1)      # LeakyReLU(0.01)
        y1 = y1 * a1[1:2, :] + a1[2:3, :]          # BatchNorm (eval, folded)
        # TODO(synk): DropBlock is identity in eval mode; training-mode
        # Bernoulli block masking is not implemented here.

        # ---- conv2 + global average pool (intermediate stays in VMEM) ------
        xp2_ref[1:H + 1, 1:W + 1, :] = y1.reshape(H, W, C1)
        im2col_to(xp2_ref[...], C1, p2_ref)
        y2 = jnp.dot(p2_ref[...], w2, preferred_element_type=jnp.float32)
        y2 = y2 + a2[0:1, :]
        y2 = jnp.where(y2 > 0, y2, 0.01 * y2)
        y2 = y2 * a2[1:2, :] + a2[2:3, :]
        o_ref[b, :, :] = jnp.mean(y2, axis=0, keepdims=True)   # (1, Cout)


# ----------------------------------------------------------------------------
# Wrapper
# ----------------------------------------------------------------------------
def fold_bn(gamma, beta, running_mean, running_var, eps=1e-5):
    scale = gamma / jnp.sqrt(running_var + eps)
    bias = beta - running_mean * scale
    return scale, bias


def branch_two_forward(x_nchw, p, *, batch_block=1):
    """Pallas implementation of Branch_two.forward (eval mode).

    batch_block: batch items per grid step. 1 keeps batch as a parallel grid
    axis (shards across the 2 TensorCores on v7x); on single-TC parts
    (v5e/v6e) a larger value amortizes per-grid-step overhead.
    """
    N, Cin, H, W = x_nchw.shape
    C1 = p["w1"].shape[-1]            # 64
    Cout = p["w2"].shape[-1]
    bb = batch_block
    assert N % bb == 0, "batch_block must divide N"

    x = jnp.transpose(x_nchw, (0, 2, 3, 1)).astype(jnp.float32)   # NCHW -> NHWC

    # im2col weight layout: row index = (dy*3 + dx)*C + c ; bf16 MXU operands.
    w1m = p["w1"].reshape(9 * Cin, C1).astype(jnp.bfloat16)
    w2m = p["w2"].reshape(9 * C1, Cout).astype(jnp.bfloat16)

    # Pack conv bias + folded eval-mode BN into a single (3, C) operand each.
    s1, b1 = fold_bn(p["g1"], p["be1"], p["rm1"], p["rv1"])
    s2, b2 = fold_bn(p["g2"], p["be2"], p["rm2"], p["rv2"])
    a1 = jnp.stack([p["cb1"], s1, b1]).astype(jnp.float32)        # (3, 64)
    a2 = jnp.stack([p["cb2"], s2, b2]).astype(jnp.float32)        # (3, Cout)

    out = pl.pallas_call(
        branch_two_fused_kernel,
        out_shape=jax.ShapeDtypeStruct((N, 1, Cout), jnp.float32),
        grid=(N // bb,),
        in_specs=[
            pl.BlockSpec((bb, H, W, Cin), lambda n: (n, 0, 0, 0)),
            pl.BlockSpec((9 * Cin, C1), lambda n: (0, 0)),
            pl.BlockSpec((9 * C1, Cout), lambda n: (0, 0)),
            pl.BlockSpec((3, C1), lambda n: (0, 0)),
            pl.BlockSpec((3, Cout), lambda n: (0, 0)),
        ],
        out_specs=pl.BlockSpec((bb, 1, Cout), lambda n: (n, 0, 0)),
        scratch_shapes=[
            pltpu.VMEM((H + 2, W + 2, Cin), jnp.float32),   # padded conv1 input
            pltpu.VMEM((H + 2, W + 2, C1), jnp.float32),    # padded conv2 input
            pltpu.VMEM((H * W, 9 * Cin), jnp.bfloat16),     # im2col patches 1
            pltpu.VMEM((H * W, 9 * C1), jnp.bfloat16),      # im2col patches 2
        ],
        compiler_params=pltpu.CompilerParams(dimension_semantics=("parallel",)),
    )(x, w1m, w2m, a1, a2)

    return jnp.transpose(out, (0, 2, 1))                          # (N, Cout, 1)


# ----------------------------------------------------------------------------
# Pure-JAX reference (lax.conv, NCHW) for numerical verification.
# matmul_dtype=bf16 mirrors the kernel's bf16 MXU operands (f32 accumulate);
# matmul_dtype=f32 is the exact PyTorch-style f32 reference.
# ----------------------------------------------------------------------------
def branch_two_reference(x_nchw, p, *, matmul_dtype=jnp.float32):
    def block(x, w_hwio, cb, gamma, beta, rm, rv):
        w_oihw = jnp.transpose(w_hwio, (3, 2, 0, 1)).astype(matmul_dtype)
        y = lax.conv_general_dilated(
            x.astype(matmul_dtype), w_oihw, window_strides=(1, 1), padding="SAME",
            dimension_numbers=("NCHW", "OIHW", "NCHW"),
            preferred_element_type=jnp.float32)
        y = y + cb[None, :, None, None]
        y = jnp.where(y > 0, y, 0.01 * y)
        s, b = fold_bn(gamma, beta, rm, rv)
        return y * s[None, :, None, None] + b[None, :, None, None]

    y1 = block(x_nchw, p["w1"], p["cb1"], p["g1"], p["be1"], p["rm1"], p["rv1"])
    y2 = block(y1, p["w2"], p["cb2"], p["g2"], p["be2"], p["rm2"], p["rv2"])
    return jnp.mean(y2, axis=(2, 3))[..., None]                    # (N, Cout, 1)


def make_params(key, in_channels, out_channels):
    ks = jax.random.split(key, 12)
    f32 = jnp.float32
    return {
        "w1": 0.1 * jax.random.normal(ks[0], (3, 3, in_channels, 64), f32),
        "cb1": 0.1 * jax.random.normal(ks[1], (64,), f32),
        "g1": 1.0 + 0.1 * jax.random.normal(ks[2], (64,), f32),
        "be1": 0.1 * jax.random.normal(ks[3], (64,), f32),
        "rm1": 0.1 * jax.random.normal(ks[4], (64,), f32),
        "rv1": 0.5 + jax.random.uniform(ks[5], (64,), f32),
        "w2": 0.1 * jax.random.normal(ks[6], (3, 3, 64, out_channels), f32),
        "cb2": 0.1 * jax.random.normal(ks[7], (out_channels,), f32),
        "g2": 1.0 + 0.1 * jax.random.normal(ks[8], (out_channels,), f32),
        "be2": 0.1 * jax.random.normal(ks[9], (out_channels,), f32),
        "rm2": 0.1 * jax.random.normal(ks[10], (out_channels,), f32),
        "rv2": 0.5 + jax.random.uniform(ks[11], (out_channels,), f32),
    }


if __name__ == "__main__":
    N, Cin, H, W = 2, 4, 16, 16
    Cout = 32

    key = jax.random.PRNGKey(0)
    kx, kp = jax.random.split(key)
    x = jax.random.normal(kx, (N, Cin, H, W), jnp.float32)   # NCHW like PyTorch
    params = make_params(kp, Cin, Cout)

    out = jax.block_until_ready(branch_two_forward(x, params))
    assert out.shape == (N, Cout, 1), out.shape

    # 1) Tight check vs. a reference that uses the same bf16 MXU operands
    #    (isolates im2col / fusion correctness from the bf16 operand cast).
    ref_bf16 = jax.block_until_ready(
        branch_two_reference(x, params, matmul_dtype=jnp.bfloat16))
    np.testing.assert_allclose(np.asarray(out), np.asarray(ref_bf16),
                               rtol=2e-3, atol=2e-3)

    # 2) Looser check vs. the exact f32 reference (documents the bf16-operand,
    #    f32-accumulate approximation recommended for MXU throughput).
    ref_f32 = jax.block_until_ready(
        branch_two_reference(x, params, matmul_dtype=jnp.float32))
    np.testing.assert_allclose(np.asarray(out), np.asarray(ref_f32),
                               rtol=2e-2, atol=2e-2)

    print("KERNEL_OK")
</pallas_src>

<mosaic_0001>
module attributes {stable_mosaic.version = 11 : i64} {
  func.func @branch_two_fused_kernel(%arg0: i32, %arg1: memref<1x16x16x4xf32, #tpu.memory_space<vmem>>, %arg2: memref<36x64xbf16, #tpu.memory_space<vmem>>, %arg3: memref<576x32xbf16, #tpu.memory_space<vmem>>, %arg4: memref<3x64xf32, #tpu.memory_space<vmem>>, %arg5: memref<3x32xf32, #tpu.memory_space<vmem>>, %arg6: memref<1x1x32xf32, #tpu.memory_space<vmem>>, %arg7: memref<18x18x4xf32, #tpu.memory_space<vmem>>, %arg8: memref<18x18x64xf32, #tpu.memory_space<vmem>>, %arg9: memref<256x36xbf16, #tpu.memory_space<vmem>>, %arg10: memref<256x576xbf16, #tpu.memory_space<vmem>>) attributes {dimension_semantics = [#tpu.dimension_semantics<parallel>], iteration_bounds = array<i64: 2>, scalar_prefetch = 0 : i64, scratch_operands = 4 : i64, tpu.core_type = #tpu.core_type<tc>, window_params = [{transform_indices = @transform_0, window_bounds = array<i64: 1, 16, 16, 4>}, {pipeline_mode = #tpu.pipeline_mode<synchronous>, transform_indices = @transform_1, window_bounds = array<i64: 36, 64>}, {pipeline_mode = #tpu.pipeline_mode<synchronous>, transform_indices = @transform_2, window_bounds = array<i64: 576, 32>}, {pipeline_mode = #tpu.pipeline_mode<synchronous>, transform_indices = @transform_3, window_bounds = array<i64: 3, 64>}, {pipeline_mode = #tpu.pipeline_mode<synchronous>, transform_indices = @transform_4, window_bounds = array<i64: 3, 32>}, {transform_indices = @transform_5, window_bounds = array<i64: 1, 1, 32>}]} {
    %c0 = arith.constant 0 : index
    %c0_0 = arith.constant 0 : index
    %0 = vector.load %arg2[%c0, %c0_0] : memref<36x64xbf16, #tpu.memory_space<vmem>>, vector<36x64xbf16>
    %c0_1 = arith.constant 0 : index
    %c0_2 = arith.constant 0 : index
    %1 = vector.load %arg3[%c0_1, %c0_2] : memref<576x32xbf16, #tpu.memory_space<vmem>>, vector<576x32xbf16>
    %c0_3 = arith.constant 0 : index
    %c0_4 = arith.constant 0 : index
    %2 = vector.load %arg4[%c0_3, %c0_4] : memref<3x64xf32, #tpu.memory_space<vmem>>, vector<3x64xf32>
    %c0_5 = arith.constant 0 : index
    %c0_6 = arith.constant 0 : index
    %3 = vector.load %arg5[%c0_5, %c0_6] : memref<3x32xf32, #tpu.memory_space<vmem>>, vector<3x32xf32>
    %cst = arith.constant 0.000000e+00 : f32
    %4 = vector.broadcast %cst : f32 to vector<18x18x4xf32>
    %c0_7 = arith.constant 0 : index
    %c0_8 = arith.constant 0 : index
    %c0_9 = arith.constant 0 : index
    %5 = vector.load %arg7[%c0_7, %c0_8, %c0_9] : memref<18x18x4xf32, #tpu.memory_space<vmem>>, vector<18x18x4xf32>
    tpu.vector_store %arg7[%c0_7, %c0_8, %c0_9], %4 {strides = array<i32>} : memref<18x18x4xf32, #tpu.memory_space<vmem>>, vector<18x18x4xf32>,
    %cst_10 = arith.constant 0.000000e+00 : f32
    %6 = vector.broadcast %cst_10 : f32 to vector<18x18x64xf32>
    %c0_11 = arith.constant 0 : index
    %c0_12 = arith.constant 0 : index
    %c0_13 = arith.constant 0 : index
    %7 = vector.load %arg8[%c0_11, %c0_12, %c0_13] : memref<18x18x64xf32, #tpu.memory_space<vmem>>, vector<18x18x64xf32>
    tpu.vector_store %arg8[%c0_11, %c0_12, %c0_13], %6 {strides = array<i32>} : memref<18x18x64xf32, #tpu.memory_space<vmem>>, vector<18x18x64xf32>,
    %c0_14 = arith.constant 0 : index
    %c0_15 = arith.constant 0 : index
    %c0_16 = arith.constant 0 : index
    %c0_17 = arith.constant 0 : index
    %8 = vector.load %arg1[%c0_14, %c0_15, %c0_16, %c0_17] : memref<1x16x16x4xf32, #tpu.memory_space<vmem>>, vector<1x16x16x4xf32>
    %9 = vector.shape_cast %8 : vector<1x16x16x4xf32> to vector<16x16x4xf32>
    %c1 = arith.constant 1 : index
    %c1_18 = arith.constant 1 : index
    %c0_19 = arith.constant 0 : index
    %10 = vector.load %arg7[%c1, %c1_18, %c0_19] : memref<18x18x4xf32, #tpu.memory_space<vmem>>, vector<16x16x4xf32>
    tpu.vector_store %arg7[%c1, %c1_18, %c0_19], %9 {strides = array<i32>} : memref<18x18x4xf32, #tpu.memory_space<vmem>>, vector<16x16x4xf32>,
    %c0_20 = arith.constant 0 : index
    %c0_21 = arith.constant 0 : index
    %c0_22 = arith.constant 0 : index
    %11 = vector.load %arg7[%c0_20, %c0_21, %c0_22] : memref<18x18x4xf32, #tpu.memory_space<vmem>>, vector<18x18x4xf32>
    %12 = vector.extract_strided_slice %11 {offsets = [0, 0, 0], sizes = [16, 16, 4], strides = [1, 1, 1]} : vector<18x18x4xf32> to vector<16x16x4xf32>
    %13 = vector.shape_cast %12 : vector<16x16x4xf32> to vector<256x4xf32>
    %14 = arith.truncf %13 : vector<256x4xf32> to vector<256x4xbf16>
    %c0_23 = arith.constant 0 : index
    %c0_24 = arith.constant 0 : index
    %15 = vector.load %arg9[%c0_23, %c0_24] : memref<256x36xbf16, #tpu.memory_space<vmem>>, vector<256x4xbf16>
    tpu.vector_store %arg9[%c0_23, %c0_24], %14 {strides = array<i32>} : memref<256x36xbf16, #tpu.memory_space<vmem>>, vector<256x4xbf16>,
    %16 = vector.extract_strided_slice %11 {offsets = [0, 1, 0], sizes = [16, 16, 4], strides = [1, 1, 1]} : vector<18x18x4xf32> to vector<16x16x4xf32>
    %17 = vector.shape_cast %16 : vector<16x16x4xf32> to vector<256x4xf32>
    %18 = arith.truncf %17 : vector<256x4xf32> to vector<256x4xbf16>
    %c0_25 = arith.constant 0 : index
    %c4 = arith.constant 4 : index
    %19 = vector.load %arg9[%c0_25, %c4] : memref<256x36xbf16, #tpu.memory_space<vmem>>, vector<256x4xbf16>
    tpu.vector_store %arg9[%c0_25, %c4], %18 {strides = array<i32>} : memref<256x36xbf16, #tpu.memory_space<vmem>>, vector<256x4xbf16>,
    %20 = vector.extract_strided_slice %11 {offsets = [0, 2, 0], sizes = [16, 16, 4], strides = [1, 1, 1]} : vector<18x18x4xf32> to vector<16x16x4xf32>
    %21 = vector.shape_cast %20 : vector<16x16x4xf32> to vector<256x4xf32>
    %22 = arith.truncf %21 : vector<256x4xf32> to vector<256x4xbf16>
    %c0_26 = arith.constant 0 : index
    %c8 = arith.constant 8 : index
    %23 = vector.load %arg9[%c0_26, %c8] : memref<256x36xbf16, #tpu.memory_space<vmem>>, vector<256x4xbf16>
    tpu.vector_store %arg9[%c0_26, %c8], %22 {strides = array<i32>} : memref<256x36xbf16, #tpu.memory_space<vmem>>, vector<256x4xbf16>,
    %24 = vector.extract_strided_slice %11 {offsets = [1, 0, 0], sizes = [16, 16, 4], strides = [1, 1, 1]} : vector<18x18x4xf32> to vector<16x16x4xf32>
    %25 = vector.shape_cast %24 : vector<16x16x4xf32> to vector<256x4xf32>
    %26 = arith.truncf %25 : vector<256x4xf32> to vector<256x4xbf16>
    %c0_27 = arith.constant 0 : index
    %c12 = arith.constant 12 : index
    %27 = vector.load %arg9[%c0_27, %c12] : memref<256x36xbf16, #tpu.memory_space<vmem>>, vector<256x4xbf16>
    tpu.vector_store %arg9[%c0_27, %c12], %26 {strides = array<i32>} : memref<256x36xbf16, #tpu.memory_space<vmem>>, vector<256x4xbf16>,
    %28 = vector.extract_strided_slice %11 {offsets = [1, 1, 0], sizes = [16, 16, 4], strides = [1, 1, 1]} : vector<18x18x4xf32> to vector<16x16x4xf32>
    %29 = vector.shape_cast %28 : vector<16x16x4xf32> to vector<256x4xf32>
    %30 = arith.truncf %29 : vector<256x4xf32> to vector<256x4xbf16>
    %c0_28 = arith.constant 0 : index
    %c16 = arith.constant 16 : index
    %31 = vector.load %arg9[%c0_28, %c16] : memref<256x36xbf16, #tpu.memory_space<vmem>>, vector<256x4xbf16>
    tpu.vector_store %arg9[%c0_28, %c16], %30 {strides = array<i32>} : memref<256x36xbf16, #tpu.memory_space<vmem>>, vector<256x4xbf16>,
    %32 = vector.extract_strided_slice %11 {offsets = [1, 2, 0], sizes = [16, 16, 4], strides = [1, 1, 1]} : vector<18x18x4xf32> to vector<16x16x4xf32>
    %33 = vector.shape_cast %32 : vector<16x16x4xf32> to vector<256x4xf32>
    %34 = arith.truncf %33 : vector<256x4xf32> to vector<256x4xbf16>
    %c0_29 = arith.constant 0 : index
    %c20 = arith.constant 20 : index
    %35 = vector.load %arg9[%c0_29, %c20] : memref<256x36xbf16, #tpu.memory_space<vmem>>, vector<256x4xbf16>
    tpu.vector_store %arg9[%c0_29, %c20], %34 {strides = array<i32>} : memref<256x36xbf16, #tpu.memory_space<vmem>>, vector<256x4xbf16>,
    %36 = vector.extract_strided_slice %11 {offsets = [2, 0, 0], sizes = [16, 16, 4], strides = [1, 1, 1]} : vector<18x18x4xf32> to vector<16x16x4xf32>
    %37 = vector.shape_cast %36 : vector<16x16x4xf32> to vector<256x4xf32>
    %38 = arith.truncf %37 : vector<256x4xf32> to vector<256x4xbf16>
    %c0_30 = arith.constant 0 : index
    %c24 = arith.constant 24 : index
    %39 = vector.load %arg9[%c0_30, %c24] : memref<256x36xbf16, #tpu.memory_space<vmem>>, vector<256x4xbf16>
    tpu.vector_store %arg9[%c0_30, %c24], %38 {strides = array<i32>} : memref<256x36xbf16, #tpu.memory_space<vmem>>, vector<256x4xbf16>,
    %40 = vector.extract_strided_slice %11 {offsets = [2, 1, 0], sizes = [16, 16, 4], strides = [1, 1, 1]} : vector<18x18x4xf32> to vector<16x16x4xf32>
    %41 = vector.shape_cast %40 : vector<16x16x4xf32> to vector<256x4xf32>
    %42 = arith.truncf %41 : vector<256x4xf32> to vector<256x4xbf16>
    %c0_31 = arith.constant 0 : index
    %c28 = arith.constant 28 : index
    %43 = vector.load %arg9[%c0_31, %c28] : memref<256x36xbf16, #tpu.memory_space<vmem>>, vector<256x4xbf16>
    tpu.vector_store %arg9[%c0_31, %c28], %42 {strides = array<i32>} : memref<256x36xbf16, #tpu.memory_space<vmem>>, vector<256x4xbf16>,
    %44 = vector.extract_strided_slice %11 {offsets = [2, 2, 0], sizes = [16, 16, 4], strides = [1, 1, 1]} : vector<18x18x4xf32> to vector<16x16x4xf32>
    %45 = vector.shape_cast %44 : vector<16x16x4xf32> to vector<256x4xf32>
    %46 = arith.truncf %45 : vector<256x4xf32> to vector<256x4xbf16>
    %c0_32 = arith.constant 0 : index
    %c32 = arith.constant 32 : index
    %47 = vector.load %arg9[%c0_32, %c32] : memref<256x36xbf16, #tpu.memory_space<vmem>>, vector<256x4xbf16>
    tpu.vector_store %arg9[%c0_32, %c32], %46 {strides = array<i32>} : memref<256x36xbf16, #tpu.memory_space<vmem>>, vector<256x4xbf16>,
    %c0_33 = arith.constant 0 : index
    %c0_34 = arith.constant 0 : index
    %48 = vector.load %arg9[%c0_33, %c0_34] : memref<256x36xbf16, #tpu.memory_space<vmem>>, vector<256x36xbf16>
    %cst_35 = arith.constant dense<0.000000e+00> : vector<256x64xf32>
    %49 = tpu.matmul %48, %0, %cst_35 {dimension_numbers = #tpu.dot_dimension_numbers<[1], [0], [0], [1], [0, 0, 1, 1], [], []>} : vector<256x36xbf16>, vector<36x64xbf16>, vector<256x64xf32> -> vector<256x64xf32>
    %50 = vector.extract_strided_slice %2 {offsets = [0, 0], sizes = [1, 64], strides = [1, 1]} : vector<3x64xf32> to vector<1x64xf32>
    %51 = vector.broadcast %50 : vector<1x64xf32> to vector<256x64xf32>
    %52 = arith.addf %49, %51 : vector<256x64xf32>
    %cst_36 = arith.constant 0.000000e+00 : f32
    %53 = vector.broadcast %cst_36 : f32 to vector<256x64xf32>
    %54 = arith.cmpf ogt, %52, %53 : vector<256x64xf32>
    %cst_37 = arith.constant 0.00999999977 : f32
    %55 = vector.broadcast %cst_37 : f32 to vector<256x64xf32>
    %56 = arith.mulf %55, %52 : vector<256x64xf32>
    %57 = arith.select %54, %52, %56 : vector<256x64xi1>, vector<256x64xf32>
    %58 = vector.extract_strided_slice %2 {offsets = [1, 0], sizes = [1, 64], strides = [1, 1]} : vector<3x64xf32> to vector<1x64xf32>
    %59 = vector.broadcast %58 : vector<1x64xf32> to vector<256x64xf32>
    %60 = arith.mulf %57, %59 : vector<256x64xf32>
    %61 = vector.extract_strided_slice %2 {offsets = [2, 0], sizes = [1, 64], strides = [1, 1]} : vector<3x64xf32> to vector<1x64xf32>
    %62 = vector.broadcast %61 : vector<1x64xf32> to vector<256x64xf32>
    %63 = arith.addf %60, %62 : vector<256x64xf32>
    %64 = vector.shape_cast %63 : vector<256x64xf32> to vector<16x16x64xf32>
    %c1_38 = arith.constant 1 : index
    %c1_39 = arith.constant 1 : index
    %c0_40 = arith.constant 0 : index
    %65 = vector.load %arg8[%c1_38, %c1_39, %c0_40] : memref<18x18x64xf32, #tpu.memory_space<vmem>>, vector<16x16x64xf32>
    tpu.vector_store %arg8[%c1_38, %c1_39, %c0_40], %64 {strides = array<i32>} : memref<18x18x64xf32, #tpu.memory_space<vmem>>, vector<16x16x64xf32>,
    %c0_41 = arith.constant 0 : index
    %c0_42 = arith.constant 0 : index
    %c0_43 = arith.constant 0 : index
    %66 = vector.load %arg8[%c0_41, %c0_42, %c0_43] : memref<18x18x64xf32, #tpu.memory_space<vmem>>, vector<18x18x64xf32>
    %67 = vector.extract_strided_slice %66 {offsets = [0, 0, 0], sizes = [16, 16, 64], strides = [1, 1, 1]} : vector<18x18x64xf32> to vector<16x16x64xf32>
    %68 = vector.shape_cast %67 : vector<16x16x64xf32> to vector<256x64xf32>
    %69 = arith.truncf %68 : vector<256x64xf32> to vector<256x64xbf16>
    %c0_44 = arith.constant 0 : index
    %c0_45 = arith.constant 0 : index
    %70 = vector.load %arg10[%c0_44, %c0_45] : memref<256x576xbf16, #tpu.memory_space<vmem>>, vector<256x64xbf16>
    tpu.vector_store %arg10[%c0_44, %c0_45], %69 {strides = array<i32>} : memref<256x576xbf16, #tpu.memory_space<vmem>>, vector<256x64xbf16>,
    %71 = vector.extract_strided_slice %66 {offsets = [0, 1, 0], sizes = [16, 16, 64], strides = [1, 1, 1]} : vector<18x18x64xf32> to vector<16x16x64xf32>
    %72 = vector.shape_cast %71 : vector<16x16x64xf32> to vector<256x64xf32>
    %73 = arith.truncf %72 : vector<256x64xf32> to vector<256x64xbf16>
    %c0_46 = arith.constant 0 : index
    %c64 = arith.constant 64 : index
    %74 = vector.load %arg10[%c0_46, %c64] : memref<256x576xbf16, #tpu.memory_space<vmem>>, vector<256x64xbf16>
    tpu.vector_store %arg10[%c0_46, %c64], %73 {strides = array<i32>} : memref<256x576xbf16, #tpu.memory_space<vmem>>, vector<256x64xbf16>,
    %75 = vector.extract_strided_slice %66 {offsets = [0, 2, 0], sizes = [16, 16, 64], strides = [1, 1, 1]} : vector<18x18x64xf32> to vector<16x16x64xf32>
    %76 = vector.shape_cast %75 : vector<16x16x64xf32> to vector<256x64xf32>
    %77 = arith.truncf %76 : vector<256x64xf32> to vector<256x64xbf16>
    %c0_47 = arith.constant 0 : index
    %c128 = arith.constant 128 : index
    %78 = vector.load %arg10[%c0_47, %c128] : memref<256x576xbf16, #tpu.memory_space<vmem>>, vector<256x64xbf16>
    tpu.vector_store %arg10[%c0_47, %c128], %77 {strides = array<i32>} : memref<256x576xbf16, #tpu.memory_space<vmem>>, vector<256x64xbf16>,
    %79 = vector.extract_strided_slice %66 {offsets = [1, 0, 0], sizes = [16, 16, 64], strides = [1, 1, 1]} : vector<18x18x64xf32> to vector<16x16x64xf32>
    %80 = vector.shape_cast %79 : vector<16x16x64xf32> to vector<256x64xf32>
    %81 = arith.truncf %80 : vector<256x64xf32> to vector<256x64xbf16>
    %c0_48 = arith.constant 0 : index
    %c192 = arith.constant 192 : index
    %82 = vector.load %arg10[%c0_48, %c192] : memref<256x576xbf16, #tpu.memory_space<vmem>>, vector<256x64xbf16>
    tpu.vector_store %arg10[%c0_48, %c192], %81 {strides = array<i32>} : memref<256x576xbf16, #tpu.memory_space<vmem>>, vector<256x64xbf16>,
    %83 = vector.extract_strided_slice %66 {offsets = [1, 1, 0], sizes = [16, 16, 64], strides = [1, 1, 1]} : vector<18x18x64xf32> to vector<16x16x64xf32>
    %84 = vector.shape_cast %83 : vector<16x16x64xf32> to vector<256x64xf32>
    %85 = arith.truncf %84 : vector<256x64xf32> to vector<256x64xbf16>
    %c0_49 = arith.constant 0 : index
    %c256 = arith.constant 256 : index
    %86 = vector.load %arg10[%c0_49, %c256] : memref<256x576xbf16, #tpu.memory_space<vmem>>, vector<256x64xbf16>
    tpu.vector_store %arg10[%c0_49, %c256], %85 {strides = array<i32>} : memref<256x576xbf16, #tpu.memory_space<vmem>>, vector<256x64xbf16>,
    %87 = vector.extract_strided_slice %66 {offsets = [1, 2, 0], sizes = [16, 16, 64], strides = [1, 1, 1]} : vector<18x18x64xf32> to vector<16x16x64xf32>
    %88 = vector.shape_cast %87 : vector<16x16x64xf32> to vector<256x64xf32>
    %89 = arith.truncf %88 : vector<256x64xf32> to vector<256x64xbf16>
    %c0_50 = arith.constant 0 : index
    %c320 = arith.constant 320 : index
    %90 = vector.load %arg10[%c0_50, %c320] : memref<256x576xbf16, #tpu.memory_space<vmem>>, vector<256x64xbf16>
    tpu.vector_store %arg10[%c0_50, %c320], %89 {strides = array<i32>} : memref<256x576xbf16, #tpu.memory_space<vmem>>, vector<256x64xbf16>,
    %91 = vector.extract_strided_slice %66 {offsets = [2, 0, 0], sizes = [16, 16, 64], strides = [1, 1, 1]} : vector<18x18x64xf32> to vector<16x16x64xf32>
    %92 = vector.shape_cast %91 : vector<16x16x64xf32> to vector<256x64xf32>
    %93 = arith.truncf %92 : vector<256x64xf32> to vector<256x64xbf16>
    %c0_51 = arith.constant 0 : index
    %c384 = arith.constant 384 : index
    %94 = vector.load %arg10[%c0_51, %c384] : memref<256x576xbf16, #tpu.memory_space<vmem>>, vector<256x64xbf16>
    tpu.vector_store %arg10[%c0_51, %c384], %93 {strides = array<i32>} : memref<256x576xbf16, #tpu.memory_space<vmem>>, vector<256x64xbf16>,
    %95 = vector.extract_strided_slice %66 {offsets = [2, 1, 0], sizes = [16, 16, 64], strides = [1, 1, 1]} : vector<18x18x64xf32> to vector<16x16x64xf32>
    %96 = vector.shape_cast %95 : vector<16x16x64xf32> to vector<256x64xf32>
    %97 = arith.truncf %96 : vector<256x64xf32> to vector<256x64xbf16>
    %c0_52 = arith.constant 0 : index
    %c448 = arith.constant 448 : index
    %98 = vector.load %arg10[%c0_52, %c448] : memref<256x576xbf16, #tpu.memory_space<vmem>>, vector<256x64xbf16>
    tpu.vector_store %arg10[%c0_52, %c448], %97 {strides = array<i32>} : memref<256x576xbf16, #tpu.memory_space<vmem>>, vector<256x64xbf16>,
    %99 = vector.extract_strided_slice %66 {offsets = [2, 2, 0], sizes = [16, 16, 64], strides = [1, 1, 1]} : vector<18x18x64xf32> to vector<16x16x64xf32>
    %100 = vector.shape_cast %99 : vector<16x16x64xf32> to vector<256x64xf32>
    %101 = arith.truncf %100 : vector<256x64xf32> to vector<256x64xbf16>
    %c0_53 = arith.constant 0 : index
    %c512 = arith.constant 512 : index
    %102 = vector.load %arg10[%c0_53, %c512] : memref<256x576xbf16, #tpu.memory_space<vmem>>, vector<256x64xbf16>
    tpu.vector_store %arg10[%c0_53, %c512], %101 {strides = array<i32>} : memref<256x576xbf16, #tpu.memory_space<vmem>>, vector<256x64xbf16>,
    %c0_54 = arith.constant 0 : index
    %c0_55 = arith.constant 0 : index
    %103 = vector.load %arg10[%c0_54, %c0_55] : memref<256x576xbf16, #tpu.memory_space<vmem>>, vector<256x576xbf16>
    %cst_56 = arith.constant dense<0.000000e+00> : vector<256x32xf32>
    %104 = tpu.matmul %103, %1, %cst_56 {dimension_numbers = #tpu.dot_dimension_numbers<[1], [0], [0], [1], [0, 0, 1, 1], [], []>} : vector<256x576xbf16>, vector<576x32xbf16>, vector<256x32xf32> -> vector<256x32xf32>
    %105 = vector.extract_strided_slice %3 {offsets = [0, 0], sizes = [1, 32], strides = [1, 1]} : vector<3x32xf32> to vector<1x32xf32>
    %106 = vector.broadcast %105 : vector<1x32xf32> to vector<256x32xf32>
    %107 = arith.addf %104, %106 : vector<256x32xf32>
    %cst_57 = arith.constant 0.000000e+00 : f32
    %108 = vector.broadcast %cst_57 : f32 to vector<256x32xf32>
    %109 = arith.cmpf ogt, %107, %108 : vector<256x32xf32>
    %cst_58 = arith.constant 0.00999999977 : f32
    %110 = vector.broadcast %cst_58 : f32 to vector<256x32xf32>
    %111 = arith.mulf %110, %107 : vector<256x32xf32>
    %112 = arith.select %109, %107, %111 : vector<256x32xi1>, vector<256x32xf32>
    %113 = vector.extract_strided_slice %3 {offsets = [1, 0], sizes = [1, 32], strides = [1, 1]} : vector<3x32xf32> to vector<1x32xf32>
    %114 = vector.broadcast %113 : vector<1x32xf32> to vector<256x32xf32>
    %115 = arith.mulf %112, %114 : vector<256x32xf32>
    %116 = vector.extract_strided_slice %3 {offsets = [2, 0], sizes = [1, 32], strides = [1, 1]} : vector<3x32xf32> to vector<1x32xf32>
    %117 = vector.broadcast %116 : vector<1x32xf32> to vector<256x32xf32>
    %118 = arith.addf %115, %117 : vector<256x32xf32>
    %cst_59 = arith.constant dense<0.000000e+00> : vector<32xf32>
    %119 = vector.multi_reduction <add>, %118, %cst_59 [0] : vector<256x32xf32> to vector<32xf32>
    %120 = vector.shape_cast %119 : vector<32xf32> to vector<1x32xf32>
    %cst_60 = arith.constant 2.560000e+02 : f32
    %121 = vector.broadcast %cst_60 : f32 to vector<1x32xf32>
    %122 = arith.divf %120, %121 : vector<1x32xf32>
    %c0_61 = arith.constant 0 : index
    %c0_62 = arith.constant 0 : index
    %c0_63 = arith.constant 0 : index
    %123 = vector.load %arg6[%c0_61, %c0_62, %c0_63] : memref<1x1x32xf32, #tpu.memory_space<vmem>>, vector<1x1x32xf32>
    %124 = vector.shape_cast %123 : vector<1x1x32xf32> to vector<1x32xf32>
    %125 = vector.shape_cast %122 : vector<1x32xf32> to vector<1x1x32xf32>
    tpu.vector_store %arg6[%c0_61, %c0_62, %c0_63], %125 {strides = array<i32>} : memref<1x1x32xf32, #tpu.memory_space<vmem>>, vector<1x1x32xf32>,
    return
  }
  func.func @transform_0(%arg0: i32) -> (i32, i32, i32, i32) {
    %c0_i32 = arith.constant 0 : i32
    %c0_i32_0 = arith.constant 0 : i32
    %c0_i32_1 = arith.constant 0 : i32
    %c0_i32_2 = arith.constant 0 : i32
    return %arg0, %c0_i32, %c0_i32_0, %c0_i32_1 : i32, i32, i32, i32
  }
  func.func @transform_1(%arg0: i32) -> (i32, i32) {
    %c0_i32 = arith.constant 0 : i32
    %c0_i32_0 = arith.constant 0 : i32
    %c0_i32_1 = arith.constant 0 : i32
    return %c0_i32, %c0_i32_0 : i32, i32
  }
  func.func @transform_2(%arg0: i32) -> (i32, i32) {
    %c0_i32 = arith.constant 0 : i32
    %c0_i32_0 = arith.constant 0 : i32
    %c0_i32_1 = arith.constant 0 : i32
    return %c0_i32, %c0_i32_0 : i32, i32
  }
  func.func @transform_3(%arg0: i32) -> (i32, i32) {
    %c0_i32 = arith.constant 0 : i32
    %c0_i32_0 = arith.constant 0 : i32
    %c0_i32_1 = arith.constant 0 : i32
    return %c0_i32, %c0_i32_0 : i32, i32
  }
  func.func @transform_4(%arg0: i32) -> (i32, i32) {
    %c0_i32 = arith.constant 0 : i32
    %c0_i32_0 = arith.constant 0 : i32
    %c0_i32_1 = arith.constant 0 : i32
    return %c0_i32, %c0_i32_0 : i32, i32
  }
  func.func @transform_5(%arg0: i32) -> (i32, i32, i32) {
    %c0_i32 = arith.constant 0 : i32
    %c0_i32_0 = arith.constant 0 : i32
    %c0_i32_1 = arith.constant 0 : i32
    return %arg0, %c0_i32, %c0_i32_0 : i32, i32, i32
  }
}

</mosaic_0001>

<llo_original>
// kernel: tpu_custom_call.1
$region0: #{tpu_custom_call.1}
  #allocation0 [shape = 'u32[]', space=smem, size = 0x4, offset = 0x4, fixed_abs, tag = 'smem constant byte address 0x4 - core index']
  #allocation1 [shape = 'u32[144,128]{1,0:T(1,128)}', space=vmem, size = 0x12000, scoped, tag = 'internal scratch']
  #allocation2 [shape = 'f32[18,18,4]{2,1,0:T(8,128)}', space=vmem, size = 0x36000, scoped, tag = 'scratch operand']
  #allocation3 [shape = 'f32[18,18,64]{2,1,0:T(8,128)}', space=vmem, size = 0x36000, scoped, tag = 'scratch operand']
  #allocation4 [shape = 'bf16[256,36]{1,0:T(8,128)(2,1)}', space=vmem, size = 0x10000, scoped, tag = 'scratch operand']
  #allocation5 [shape = 'bf16[256,576]{1,0:T(8,128)(2,1)}', space=vmem, size = 0x50000, scoped, tag = 'scratch operand']
  %s0 = inlined_call_operand.vmem [shape: f32[2,16,16,4], index: 0, kind: input, shape index: {}]
  %s1 = inlined_call_operand.vmem [shape: bf16[36,64], index: 1, kind: input, shape index: {}]
  %s2 = inlined_call_operand.vmem [shape: bf16[576,32], index: 2, kind: input, shape index: {}]
  %s3 = inlined_call_operand.vmem [shape: f32[3,64], index: 3, kind: input, shape index: {}]
  %s4 = inlined_call_operand.vmem [shape: f32[3,32], index: 4, kind: input, shape index: {}]
  %s5 = inlined_call_operand.hbm [shape: f32[2,1,32], index: 5, kind: output, shape index: {}]
  %s6 = sld [smem:[#allocation0]]
  $region53: #{tpu_custom_call.1} parent=0
    _
  %s8 = ssub.s32 1, %s6
  %s9 = scalar_select 0, %s8, %s6
  $region1: #{tpu_custom_call.1} parent=0
    #allocation6 [shape = 'u8[1024]{0}', space=vmem, size = 0x400, scoped, tag = 'output window, operand 0']
    #allocation7 [shape = 's32[2]{0}', space=sflag, size = 0x8, scoped, tag = 'scoped memory for tpu_custom_call.1']
    %10 = vsyncpa [#allocation7], 0
    %s11 = scalar_lea.sflag [#allocation7], 1
    %12 = vsyncpa %s11, 0
    loop: start=0, step=1, limit=4
    $region2: #{tpu_custom_call.1} parent=1 // loop_pre_header
      _
    $region3: #{tpu_custom_call.1} parent=1 // loop_header
      %s14 = sphi 0, %s18
      %p15 = scmp.ge.s32.totalorder %s14, 4
      %s24 = sphi 0, %s26
      %s27 = sphi 0, %s24
      %s28 = sphi 0, %s27
      %s44 = sphi 0, %s28
      %s48 = sphi 0, %s48
      %s50 = sphi 0, %s48
      %s51 = sphi 0, %s50
      %s65 = sphi 0, %s51
      %s69 = sphi 0, %s69
      %s71 = sphi 0, %s69
      %s72 = sphi 0, %s71
      %s86 = sphi 0, %s72
      %s90 = sphi 0, %s90
      %s92 = sphi 0, %s90
      %s93 = sphi 0, %s92
      %s107 = sphi 0, %s93
      %s111 = sphi 0, %s111
      %s113 = sphi 0, %s111
      %s114 = sphi 0, %s113
      %s128 = sphi 0, %s114
      %s134 = sphi 0, %s136
      %s137 = sphi 0, %s134
      %s138 = sphi 0, %s137
      %s154 = sphi 0, %s138
    $region4: #{tpu_custom_call.1} parent=1 // loop_header_branch
      %17 = sbr.rel (%p15) target = $region8
    $region5: #{tpu_custom_call.1} parent=1 // loop_body
      %s19 = ssub.s32 %s14, 1
      %s20 = ssub.s32 %s14, 2
      %s21 = sadd.s32 %s14, 1
      %s22 = ssub.s32 %s14, %s21
      %p23 = scmp.eq.s32.totalorder %s22, 0
      %s25 = sadd.s32 %s24, 1
      %s26 = scalar_select %p23, %s24, %s25
      %p29 = pneg %p23
      %p30 = scmp.eq.s32.totalorder %s14, 1
      %p31 = por %p29, %p30
      %p32 = scmp.ne.s32.totalorder %s24, %s27
      %p33 = scmp.eq.s32.totalorder %s14, 0
      %p34 = por %p32, %p33
      %p35 = scmp.ne.s32.totalorder %s24, %s27
      %p36 = scmp.eq.s32.totalorder %s19, 1
      %p37 = por %p35, %p36
      %p38 = scmp.ne.s32.totalorder %s27, %s28
      %p39 = scmp.eq.s32.totalorder %s19, 0
      %p40 = por %p38, %p39
      %p41 = scmp.ne.s32.totalorder %s27, %s28
      %p42 = scmp.eq.s32.totalorder %s20, 1
      %p43 = por %p41, %p42
      %p45 = scmp.ne.s32.totalorder %s28, %s44
      %p46 = scmp.eq.s32.totalorder %s20, 0
      %p47 = por %p45, %p46
      %s49 = sadd.s32 %s48, 1
      %p52 = scmp.eq.s32.totalorder %s14, 1
      %p53 = scmp.ne.s32.totalorder %s48, %s50
      %p54 = scmp.eq.s32.totalorder %s14, 0
      %p55 = por %p53, %p54
      %p56 = scmp.ne.s32.totalorder %s48, %s50
      %p57 = scmp.eq.s32.totalorder %s19, 1
      %p58 = por %p56, %p57
      %p59 = scmp.ne.s32.totalorder %s50, %s51
      %p60 = scmp.eq.s32.totalorder %s19, 0
      %p61 = por %p59, %p60
      %p62 = scmp.ne.s32.totalorder %s50, %s51
      %p63 = scmp.eq.s32.totalorder %s20, 1
      %p64 = por %p62, %p63
      %p66 = scmp.ne.s32.totalorder %s51, %s65
      %p67 = scmp.eq.s32.totalorder %s20, 0
      %p68 = por %p66, %p67
      %s70 = sadd.s32 %s69, 1
      %p73 = scmp.eq.s32.totalorder %s14, 1
      %p74 = scmp.ne.s32.totalorder %s69, %s71
      %p75 = scmp.eq.s32.totalorder %s14, 0
      %p76 = por %p74, %p75
      %p77 = scmp.ne.s32.totalorder %s69, %s71
      %p78 = scmp.eq.s32.totalorder %s19, 1
      %p79 = por %p77, %p78
      %p80 = scmp.ne.s32.totalorder %s71, %s72
      %p81 = scmp.eq.s32.totalorder %s19, 0
      %p82 = por %p80, %p81
      %p83 = scmp.ne.s32.totalorder %s71, %s72
      %p84 = scmp.eq.s32.totalorder %s20, 1
      %p85 = por %p83, %p84
      %p87 = scmp.ne.s32.totalorder %s72, %s86
      %p88 = scmp.eq.s32.totalorder %s20, 0
      %p89 = por %p87, %p88
      %s91 = sadd.s32 %s90, 1
      %p94 = scmp.eq.s32.totalorder %s14, 1
      %p95 = scmp.ne.s32.totalorder %s90, %s92
      %p96 = scmp.eq.s32.totalorder %s14, 0
      %p97 = por %p95, %p96
      %p98 = scmp.ne.s32.totalorder %s90, %s92
      %p99 = scmp.eq.s32.totalorder %s19, 1
      %p100 = por %p98, %p99
      %p101 = scmp.ne.s32.totalorder %s92, %s93
      %p102 = scmp.eq.s32.totalorder %s19, 0
      %p103 = por %p101, %p102
      %p104 = scmp.ne.s32.totalorder %s92, %s93
      %p105 = scmp.eq.s32.totalorder %s20, 1
      %p106 = por %p104, %p105
      %p108 = scmp.ne.s32.totalorder %s93, %s107
      %p109 = scmp.eq.s32.totalorder %s20, 0
      %p110 = por %p108, %p109
      %s112 = sadd.s32 %s111, 1
      %p115 = scmp.eq.s32.totalorder %s14, 1
      %p116 = scmp.ne.s32.totalorder %s111, %s113
      %p117 = scmp.eq.s32.totalorder %s14, 0
      %p118 = por %p116, %p117
      %p119 = scmp.ne.s32.totalorder %s111, %s113
      %p120 = scmp.eq.s32.totalorder %s19, 1
      %p121 = por %p119, %p120
      %p122 = scmp.ne.s32.totalorder %s113, %s114
      %p123 = scmp.eq.s32.totalorder %s19, 0
      %p124 = por %p122, %p123
      %p125 = scmp.ne.s32.totalorder %s113, %s114
      %p126 = scmp.eq.s32.totalorder %s20, 1
      %p127 = por %p125, %p126
      %p129 = scmp.ne.s32.totalorder %s114, %s128
      %p130 = scmp.eq.s32.totalorder %s20, 0
      %p131 = por %p129, %p130
      %s132 = ssub.s32 %s14, %s21
      %p133 = scmp.eq.s32.totalorder %s132, 0
      %s135 = sadd.s32 %s134, 1
      %s136 = scalar_select %p133, %s134, %s135
      %p139 = pneg %p133
      %p140 = scmp.eq.s32.totalorder %s14, 1
      %p141 = por %p139, %p140
      %p142 = scmp.ne.s32.totalorder %s134, %s137
      %p143 = scmp.eq.s32.totalorder %s14, 0
      %p144 = por %p142, %p143
      %p145 = scmp.ne.s32.totalorder %s134, %s137
      %p146 = scmp.eq.s32.totalorder %s19, 1
      %p147 = por %p145, %p146
      %p148 = scmp.ne.s32.totalorder %s137, %s138
      %p149 = scmp.eq.s32.totalorder %s19, 0
      %p150 = por %p148, %p149
      %p151 = scmp.ne.s32.totalorder %s137, %s138
      %p152 = scmp.eq.s32.totalorder %s20, 1
      %p153 = por %p151, %p152
      %p155 = scmp.ne.s32.totalorder %s138, %s154
      %p156 = scmp.eq.s32.totalorder %s20, 0
      %p157 = por %p155, %p156
      %p158 = scmp.le.s32.totalorder 1, %s14
      %p159 = scmp.lt.s32.totalorder %s14, 3
      %p160 = pnand %p158, %p159
      %p161 = pneg %p160
      // Predicated region
      $region9: #{tpu_custom_call.1} parent=5 // pred_check
        _
      $region10: #{tpu_custom_call.1} parent=5 // pred_check_branch
        %163 = sbr.rel (%p160) target = $region12
      $region11: #{tpu_custom_call.1} parent=5 // pred_region
        %s164 = ssub.s32 %s14, 1
        // Predicated region
        $region13: #{tpu_custom_call.1} parent=11 // pred_check
          %p165 = pneg %p61
        $region14: #{tpu_custom_call.1} parent=11 // pred_check_branch
          %167 = sbr.rel (%p165) target = $region16
        $region15: #{tpu_custom_call.1} parent=11 // pred_region
          _
        $region16: #{tpu_custom_call.1} parent=11 // pred_fallthru
          _
        // Predicated region
        $region17: #{tpu_custom_call.1} parent=11 // pred_check
          %p168 = pneg %p82
        $region18: #{tpu_custom_call.1} parent=11 // pred_check_branch
          %170 = sbr.rel (%p168) target = $region20
        $region19: #{tpu_custom_call.1} parent=11 // pred_region
          _
        $region20: #{tpu_custom_call.1} parent=11 // pred_fallthru
          _
        // Predicated region
        $region21: #{tpu_custom_call.1} parent=11 // pred_check
          %p171 = pneg %p103
        $region22: #{tpu_custom_call.1} parent=11 // pred_check_branch
          %173 = sbr.rel (%p171) target = $region24
        $region23: #{tpu_custom_call.1} parent=11 // pred_region
          _
        $region24: #{tpu_custom_call.1} parent=11 // pred_fallthru
          _
        // Predicated region
        $region25: #{tpu_custom_call.1} parent=11 // pred_check
          %p174 = pneg %p124
        $region26: #{tpu_custom_call.1} parent=11 // pred_check_branch
          %176 = sbr.rel (%p174) target = $region28
        $region27: #{tpu_custom_call.1} parent=11 // pred_region
          _
        $region28: #{tpu_custom_call.1} parent=11 // pred_fallthru
          _
      $region12: #{tpu_custom_call.1} parent=5 // pred_fallthru
        _
      %p177 = scmp.lt.s32.totalorder %s14, 2
      // Predicated region
      $region29: #{tpu_custom_call.1} parent=5 // pred_check
        %p178 = pneg %p177
      $region30: #{tpu_custom_call.1} parent=5 // pred_check_branch
        %180 = sbr.rel (%p178) target = $region32
      $region31: #{tpu_custom_call.1} parent=5 // pred_region
        // Predicated region
        $region33: #{tpu_custom_call.1} parent=31 // pred_check
          %p181 = pneg %p34
        $region34: #{tpu_custom_call.1} parent=31 // pred_check_branch
          %183 = sbr.rel (%p181) target = $region36
        $region35: #{tpu_custom_call.1} parent=31 // pred_region
          %p184 = scmp.lt.s32.totalorder %s14, 1
          %s185 = scalar_select %p184, %s14, 1
          %s186 = smul.addr %s185, 32
          %s187 = smul.addr %s186, 8
          %s188 = scalar_lea.vmem %s0, %s187
        $region36: #{tpu_custom_call.1} parent=31 // pred_fallthru
          _
      $region32: #{tpu_custom_call.1} parent=5 // pred_fallthru
        _
      %p189 = scmp.le.s32.totalorder 1, %s14
      %p190 = scmp.lt.s32.totalorder %s14, 3
      %p191 = pnand %p189, %p190
      %p192 = pneg %p191
      // Predicated region
      $region37: #{tpu_custom_call.1} parent=5 // pred_check
        _
      $region38: #{tpu_custom_call.1} parent=5 // pred_check_branch
        %194 = sbr.rel (%p191) target = $region40
      $region39: #{tpu_custom_call.1} parent=5 // pred_region
        %s195 = ssub.s32 %s14, 1
        %p196 = scmp.lt.s32.totalorder %s19, 1
        %s197 = scalar_select %p196, %s19, 1
        %s198 = smul.addr %s197, 32
        %s199 = smul.addr %s198, 8
        %s200 = scalar_lea.vmem %s0, %s199
        %p201 = pneg %p40
        %p202 = pneg %p37
        %p203 = pneg %p61
        %p204 = pneg %p58
        %p205 = pneg %p82
        %p206 = pneg %p79
        %p207 = pneg %p103
        %p208 = pneg %p100
        %p209 = pneg %p124
        %p210 = pneg %p121
        %p211 = pneg %p150
        %p212 = pneg %p147
        %s213 = sand.u32 %s137, 1
        %s214 = scalar_lea.sflag [#allocation7], %s213
        %s215 = sand.u32 %s137, 1
        %s216 = scalar_lea.vmem [#allocation6], %s215
        %p217 = scmp.lt.s32.totalorder %s19, 1
        %s218 = scalar_select %p217, %s19, 1
        %s219 = smul.addr %s218, 32
        %s220 = smul.addr %s219, 8
        %s221 = scalar_lea.vmem %s0, %s220
        %v223 = vld [vmem:[%s1] sm:$0xf]
        %v224 = vld [vmem:[%s1 + $0x4] sm:$0xf]
        %v225 = vld [vmem:[%s1 + $0x8] sm:$0xf]
        %v226 = vld [vmem:[%s1 + $0xc] sm:$0xf]
        %v227 = vld [vmem:[%s1 + $0x10] sm:$0x3]
        %v228 = vld [vmem:[%s2] sm:$0xf]
        %v229 = vld [vmem:[%s2 + $0x4] sm:$0xf]
        %v230 = vld [vmem:[%s2 + $0x8] sm:$0xf]
        %v231 = vld [vmem:[%s2 + $0xc] sm:$0xf]
        %v232 = vld [vmem:[%s2 + $0x10] sm:$0xf]
        %v233 = vld [vmem:[%s2 + $0x14] sm:$0xf]
        %v234 = vld [vmem:[%s2 + $0x18] sm:$0xf]
        %v235 = vld [vmem:[%s2 + $0x1c] sm:$0xf]
        %v236 = vld [vmem:[%s2 + $0x20] sm:$0xf]
        %v237 = vld [vmem:[%s2 + $0x24] sm:$0xf]
        %v238 = vld [vmem:[%s2 + $0x28] sm:$0xf]
        %v239 = vld [vmem:[%s2 + $0x2c] sm:$0xf]
        %v240 = vld [vmem:[%s2 + $0x30] sm:$0xf]
        %v241 = vld [vmem:[%s2 + $0x34] sm:$0xf]
        %v242 = vld [vmem:[%s2 + $0x38] sm:$0xf]
        %v243 = vld [vmem:[%s2 + $0x3c] sm:$0xf]
        %v244 = vld [vmem:[%s2 + $0x40] sm:$0xf]
        %v245 = vld [vmem:[%s2 + $0x44] sm:$0xf]
        %v246 = vld [vmem:[%s2 + $0x48] sm:$0xf]
        %v247 = vld [vmem:[%s2 + $0x4c] sm:$0xf]
        %v248 = vld [vmem:[%s2 + $0x50] sm:$0xf]
        %v249 = vld [vmem:[%s2 + $0x54] sm:$0xf]
        %v250 = vld [vmem:[%s2 + $0x58] sm:$0xf]
        %v251 = vld [vmem:[%s2 + $0x5c] sm:$0xf]
        %v252 = vld [vmem:[%s2 + $0x60] sm:$0xf]
        %v253 = vld [vmem:[%s2 + $0x64] sm:$0xf]
        %v254 = vld [vmem:[%s2 + $0x68] sm:$0xf]
        %v255 = vld [vmem:[%s2 + $0x6c] sm:$0xf]
        %v256 = vld [vmem:[%s2 + $0x70] sm:$0xf]
        %v257 = vld [vmem:[%s2 + $0x74] sm:$0xf]
        %v258 = vld [vmem:[%s2 + $0x78] sm:$0xf]
        %v259 = vld [vmem:[%s2 + $0x7c] sm:$0xf]
        %v260 = vld [vmem:[%s2 + $0x80] sm:$0xf]
        %v261 = vld [vmem:[%s2 + $0x84] sm:$0xf]
        %v262 = vld [vmem:[%s2 + $0x88] sm:$0xf]
        %v263 = vld [vmem:[%s2 + $0x8c] sm:$0xf]
        %v264 = vld [vmem:[%s2 + $0x90] sm:$0xf]
        %v265 = vld [vmem:[%s2 + $0x94] sm:$0xf]
        %v266 = vld [vmem:[%s2 + $0x98] sm:$0xf]
        %v267 = vld [vmem:[%s2 + $0x9c] sm:$0xf]
        %v268 = vld [vmem:[%s2 + $0xa0] sm:$0xf]
        %v269 = vld [vmem:[%s2 + $0xa4] sm:$0xf]
        %v270 = vld [vmem:[%s2 + $0xa8] sm:$0xf]
        %v271 = vld [vmem:[%s2 + $0xac] sm:$0xf]
        %v272 = vld [vmem:[%s2 + $0xb0] sm:$0xf]
        %v273 = vld [vmem:[%s2 + $0xb4] sm:$0xf]
        %v274 = vld [vmem:[%s2 + $0xb8] sm:$0xf]
        %v275 = vld [vmem:[%s2 + $0xbc] sm:$0xf]
        %v276 = vld [vmem:[%s2 + $0xc0] sm:$0xf]
        %v277 = vld [vmem:[%s2 + $0xc4] sm:$0xf]
        %v278 = vld [vmem:[%s2 + $0xc8] sm:$0xf]
        %v279 = vld [vmem:[%s2 + $0xcc] sm:$0xf]
        %v280 = vld [vmem:[%s2 + $0xd0] sm:$0xf]
        %v281 = vld [vmem:[%s2 + $0xd4] sm:$0xf]
        %v282 = vld [vmem:[%s2 + $0xd8] sm:$0xf]
        %v283 = vld [vmem:[%s2 + $0xdc] sm:$0xf]
        %v284 = vld [vmem:[%s2 + $0xe0] sm:$0xf]
        %v285 = vld [vmem:[%s2 + $0xe4] sm:$0xf]
        %v286 = vld [vmem:[%s2 + $0xe8] sm:$0xf]
        %v287 = vld [vmem:[%s2 + $0xec] sm:$0xf]
        %v288 = vld [vmem:[%s2 + $0xf0] sm:$0xf]
        %v289 = vld [vmem:[%s2 + $0xf4] sm:$0xf]
        %v290 = vld [vmem:[%s2 + $0xf8] sm:$0xf]
        %v291 = vld [vmem:[%s2 + $0xfc] sm:$0xf]
        %v292 = vld [vmem:[%s2 + $0x100] sm:$0xf]
        %v293 = vld [vmem:[%s2 + $0x104] sm:$0xf]
        %v294 = vld [vmem:[%s2 + $0x108] sm:$0xf]
        %v295 = vld [vmem:[%s2 + $0x10c] sm:$0xf]
        %v296 = vld [vmem:[%s2 + $0x110] sm:$0xf]
        %v297 = vld [vmem:[%s2 + $0x114] sm:$0xf]
        %v298 = vld [vmem:[%s2 + $0x118] sm:$0xf]
        %v299 = vld [vmem:[%s2 + $0x11c] sm:$0xf]
        %v300 = vld [vmem:[%s3] sm:$0x7]
        %v301 = vld [vmem:[%s4] sm:$0x7]
        %vm302 = vcmask 31744
        %303 = vst.msk [vmem:[#allocation2] sm:$0xff] %vm302, 0.0
        %304 = vst.msk [vmem:[#allocation2 + $0x8] sm:$0xff] %vm302, 0.0
        %vm305 = vcmask 25600
        %306 = vst.msk [vmem:[#allocation2 + $0x10] sm:$0x3] %vm305, 0.0
        %307 = vst.msk [vmem:[#allocation2 + $0x18] sm:$0xff] %vm302, 0.0
        %308 = vst.msk [vmem:[#allocation2 + $0x20] sm:$0xff] %vm302, 0.0
        %309 = vst.msk [vmem:[#allocation2 + $0x28] sm:$0x3] %vm305, 0.0
        %310 = vst.msk [vmem:[#allocation2 + $0x30] sm:$0xff] %vm302, 0.0
        %311 = vst.msk [vmem:[#allocation2 + $0x38] sm:$0xff] %vm302, 0.0
        %312 = vst.msk [vmem:[#allocation2 + $0x40] sm:$0x3] %vm305, 0.0
        %313 = vst.msk [vmem:[#allocation2 + $0x48] sm:$0xff] %vm302, 0.0
        %314 = vst.msk [vmem:[#allocation2 + $0x50] sm:$0xff] %vm302, 0.0
        %315 = vst.msk [vmem:[#allocation2 + $0x58] sm:$0x3] %vm305, 0.0
        %316 = vst.msk [vmem:[#allocation2 + $0x60] sm:$0xff] %vm302, 0.0
        %317 = vst.msk [vmem:[#allocation2 + $0x68] sm:$0xff] %vm302, 0.0
        %318 = vst.msk [vmem:[#allocation2 + $0x70] sm:$0x3] %vm305, 0.0
        %319 = vst.msk [vmem:[#allocation2 + $0x78] sm:$0xff] %vm302, 0.0
        %320 = vst.msk [vmem:[#allocation2 + $0x80] sm:$0xff] %vm302, 0.0
        %321 = vst.msk [vmem:[#allocation2 + $0x88] sm:$0x3] %vm305, 0.0
        %322 = vst.msk [vmem:[#allocation2 + $0x90] sm:$0xff] %vm302, 0.0
        %323 = vst.msk [vmem:[#allocation2 + $0x98] sm:$0xff] %vm302, 0.0
        %324 = vst.msk [vmem:[#allocation2 + $0xa0] sm:$0x3] %vm305, 0.0
        %325 = vst.msk [vmem:[#allocation2 + $0xa8] sm:$0xff] %vm302, 0.0
        %326 = vst.msk [vmem:[#allocation2 + $0xb0] sm:$0xff] %vm302, 0.0
        %327 = vst.msk [vmem:[#allocation2 + $0xb8] sm:$0x3] %vm305, 0.0
        %328 = vst.msk [vmem:[#allocation2 + $0xc0] sm:$0xff] %vm302, 0.0
        %329 = vst.msk [vmem:[#allocation2 + $0xc8] sm:$0xff] %vm302, 0.0
        %330 = vst.msk [vmem:[#allocation2 + $0xd0] sm:$0x3] %vm305, 0.0
        %331 = vst.msk [vmem:[#allocation2 + $0xd8] sm:$0xff] %vm302, 0.0
        %332 = vst.msk [vmem:[#allocation2 + $0xe0] sm:$0xff] %vm302, 0.0
        %333 = vst.msk [vmem:[#allocation2 + $0xe8] sm:$0x3] %vm305, 0.0
        %334 = vst.msk [vmem:[#allocation2 + $0xf0] sm:$0xff] %vm302, 0.0
        %335 = vst.msk [vmem:[#allocation2 + $0xf8] sm:$0xff] %vm302, 0.0
        %336 = vst.msk [vmem:[#allocation2 + $0x100] sm:$0x3] %vm305, 0.0
        %337 = vst.msk [vmem:[#allocation2 + $0x108] sm:$0xff] %vm302, 0.0
        %338 = vst.msk [vmem:[#allocation2 + $0x110] sm:$0xff] %vm302, 0.0
        %339 = vst.msk [vmem:[#allocation2 + $0x118] sm:$0x3] %vm305, 0.0
        %340 = vst.msk [vmem:[#allocation2 + $0x120] sm:$0xff] %vm302, 0.0
        %341 = vst.msk [vmem:[#allocation2 + $0x128] sm:$0xff] %vm302, 0.0
        %342 = vst.msk [vmem:[#allocation2 + $0x130] sm:$0x3] %vm305, 0.0
        %343 = vst.msk [vmem:[#allocation2 + $0x138] sm:$0xff] %vm302, 0.0
        %344 = vst.msk [vmem:[#allocation2 + $0x140] sm:$0xff] %vm302, 0.0
        %345 = vst.msk [vmem:[#allocation2 + $0x148] sm:$0x3] %vm305, 0.0
        %346 = vst.msk [vmem:[#allocation2 + $0x150] sm:$0xff] %vm302, 0.0
        %347 = vst.msk [vmem:[#allocation2 + $0x158] sm:$0xff] %vm302, 0.0
        %348 = vst.msk [vmem:[#allocation2 + $0x160] sm:$0x3] %vm305, 0.0
        %349 = vst.msk [vmem:[#allocation2 + $0x168] sm:$0xff] %vm302, 0.0
        %350 = vst.msk [vmem:[#allocation2 + $0x170] sm:$0xff] %vm302, 0.0
        %351 = vst.msk [vmem:[#allocation2 + $0x178] sm:$0x3] %vm305, 0.0
        %352 = vst.msk [vmem:[#allocation2 + $0x180] sm:$0xff] %vm302, 0.0
        %353 = vst.msk [vmem:[#allocation2 + $0x188] sm:$0xff] %vm302, 0.0
        %354 = vst.msk [vmem:[#allocation2 + $0x190] sm:$0x3] %vm305, 0.0
        %355 = vst.msk [vmem:[#allocation2 + $0x198] sm:$0xff] %vm302, 0.0
        %356 = vst.msk [vmem:[#allocation2 + $0x1a0] sm:$0xff] %vm302, 0.0
        %357 = vst.msk [vmem:[#allocation2 + $0x1a8] sm:$0x3] %vm305, 0.0
        %vm358 = vcmask 523264
        %359 = vst.msk [vmem:[#allocation3] sm:$0xff] %vm358, 0.0
        %360 = vst.msk [vmem:[#allocation3 + $0x8] sm:$0xff] %vm358, 0.0
        %vm361 = vcmask 517120
        %362 = vst.msk [vmem:[#allocation3 + $0x10] sm:$0x3] %vm361, 0.0
        %363 = vst.msk [vmem:[#allocation3 + $0x18] sm:$0xff] %vm358, 0.0
        %364 = vst.msk [vmem:[#allocation3 + $0x20] sm:$0xff] %vm358, 0.0
        %365 = vst.msk [vmem:[#allocation3 + $0x28] sm:$0x3] %vm361, 0.0
        %366 = vst.msk [vmem:[#allocation3 + $0x30] sm:$0xff] %vm358, 0.0
        %367 = vst.msk [vmem:[#allocation3 + $0x38] sm:$0xff] %vm358, 0.0
        %368 = vst.msk [vmem:[#allocation3 + $0x40] sm:$0x3] %vm361, 0.0
        %369 = vst.msk [vmem:[#allocation3 + $0x48] sm:$0xff] %vm358, 0.0
        %370 = vst.msk [vmem:[#allocation3 + $0x50] sm:$0xff] %vm358, 0.0
        %371 = vst.msk [vmem:[#allocation3 + $0x58] sm:$0x3] %vm361, 0.0
        %372 = vst.msk [vmem:[#allocation3 + $0x60] sm:$0xff] %vm358, 0.0
        %373 = vst.msk [vmem:[#allocation3 + $0x68] sm:$0xff] %vm358, 0.0
        %374 = vst.msk [vmem:[#allocation3 + $0x70] sm:$0x3] %vm361, 0.0
        %375 = vst.msk [vmem:[#allocation3 + $0x78] sm:$0xff] %vm358, 0.0
        %376 = vst.msk [vmem:[#allocation3 + $0x80] sm:$0xff] %vm358, 0.0
        %377 = vst.msk [vmem:[#allocation3 + $0x88] sm:$0x3] %vm361, 0.0
        %378 = vst.msk [vmem:[#allocation3 + $0x90] sm:$0xff] %vm358, 0.0
        %379 = vst.msk [vmem:[#allocation3 + $0x98] sm:$0xff] %vm358, 0.0
        %380 = vst.msk [vmem:[#allocation3 + $0xa0] sm:$0x3] %vm361, 0.0
        %381 = vst.msk [vmem:[#allocation3 + $0xa8] sm:$0xff] %vm358, 0.0
        %382 = vst.msk [vmem:[#allocation3 + $0xb0] sm:$0xff] %vm358, 0.0
        %383 = vst.msk [vmem:[#allocation3 + $0xb8] sm:$0x3] %vm361, 0.0
        %384 = vst.msk [vmem:[#allocation3 + $0xc0] sm:$0xff] %vm358, 0.0
        %385 = vst.msk [vmem:[#allocation3 + $0xc8] sm:$0xff] %vm358, 0.0
        %386 = vst.msk [vmem:[#allocation3 + $0xd0] sm:$0x3] %vm361, 0.0
        %387 = vst.msk [vmem:[#allocation3 + $0xd8] sm:$0xff] %vm358, 0.0
        %388 = vst.msk [vmem:[#allocation3 + $0xe0] sm:$0xff] %vm358, 0.0
        %389 = vst.msk [vmem:[#allocation3 + $0xe8] sm:$0x3] %vm361, 0.0
        %390 = vst.msk [vmem:[#allocation3 + $0xf0] sm:$0xff] %vm358, 0.0
        %391 = vst.msk [vmem:[#allocation3 + $0xf8] sm:$0xff] %vm358, 0.0
        %392 = vst.msk [vmem:[#allocation3 + $0x100] sm:$0x3] %vm361, 0.0
        %393 = vst.msk [vmem:[#allocation3 + $0x108] sm:$0xff] %vm358, 0.0
        %394 = vst.msk [vmem:[#allocation3 + $0x110] sm:$0xff] %vm358, 0.0
        %395 = vst.msk [vmem:[#allocation3 + $0x118] sm:$0x3] %vm361, 0.0
        %396 = vst.msk [vmem:[#allocation3 + $0x120] sm:$0xff] %vm358, 0.0
        %397 = vst.msk [vmem:[#allocation3 + $0x128] sm:$0xff] %vm358, 0.0
        %398 = vst.msk [vmem:[#allocation3 + $0x130] sm:$0x3] %vm361, 0.0
        %399 = vst.msk [vmem:[#allocation3 + $0x138] sm:$0xff] %vm358, 0.0
        %400 = vst.msk [vmem:[#allocation3 + $0x140] sm:$0xff] %vm358, 0.0
        %401 = vst.msk [vmem:[#allocation3 + $0x148] sm:$0x3] %vm361, 0.0
        %402 = vst.msk [vmem:[#allocation3 + $0x150] sm:$0xff] %vm358, 0.0
        %403 = vst.msk [vmem:[#allocation3 + $0x158] sm:$0xff] %vm358, 0.0
        %404 = vst.msk [vmem:[#allocation3 + $0x160] sm:$0x3] %vm361, 0.0
        %405 = vst.msk [vmem:[#allocation3 + $0x168] sm:$0xff] %vm358, 0.0
        %406 = vst.msk [vmem:[#allocation3 + $0x170] sm:$0xff] %vm358, 0.0
        %407 = vst.msk [vmem:[#allocation3 + $0x178] sm:$0x3] %vm361, 0.0
        %408 = vst.msk [vmem:[#allocation3 + $0x180] sm:$0xff] %vm358, 0.0
        %409 = vst.msk [vmem:[#allocation3 + $0x188] sm:$0xff] %vm358, 0.0
        %410 = vst.msk [vmem:[#allocation3 + $0x190] sm:$0x3] %vm361, 0.0
        %411 = vst.msk [vmem:[#allocation3 + $0x198] sm:$0xff] %vm358, 0.0
        %412 = vst.msk [vmem:[#allocation3 + $0x1a0] sm:$0xff] %vm358, 0.0
        %413 = vst.msk [vmem:[#allocation3 + $0x1a8] sm:$0x3] %vm361, 0.0
        %v414 = vld [vmem:[%s221] sm:$0xff]
        %v415 = vld [vmem:[%s221 + $0x8] sm:$0xff]
        %v416 = vld [vmem:[%s221 + $0x10] sm:$0xff]
        %v417 = vld [vmem:[%s221 + $0x18] sm:$0xff]
        %v418 = vld [vmem:[%s221 + $0x20] sm:$0xff]
        %v419 = vld [vmem:[%s221 + $0x28] sm:$0xff]
        %v420 = vld [vmem:[%s221 + $0x30] sm:$0xff]
        %v421 = vld [vmem:[%s221 + $0x38] sm:$0xff]
        %v422 = vld [vmem:[%s221 + $0x40] sm:$0xff]
        %v423 = vld [vmem:[%s221 + $0x48] sm:$0xff]
        %v424 = vld [vmem:[%s221 + $0x50] sm:$0xff]
        %v425 = vld [vmem:[%s221 + $0x58] sm:$0xff]
        %v426 = vld [vmem:[%s221 + $0x60] sm:$0xff]
        %v427 = vld [vmem:[%s221 + $0x68] sm:$0xff]
        %v428 = vld [vmem:[%s221 + $0x70] sm:$0xff]
        %v429 = vld [vmem:[%s221 + $0x78] sm:$0xff]
        %v430 = vld [vmem:[%s221 + $0x80] sm:$0xff]
        %v431 = vld [vmem:[%s221 + $0x88] sm:$0xff]
        %v432 = vld [vmem:[%s221 + $0x90] sm:$0xff]
        %v433 = vld [vmem:[%s221 + $0x98] sm:$0xff]
        %v434 = vld [vmem:[%s221 + $0xa0] sm:$0xff]
        %v435 = vld [vmem:[%s221 + $0xa8] sm:$0xff]
        %v436 = vld [vmem:[%s221 + $0xb0] sm:$0xff]
        %v437 = vld [vmem:[%s221 + $0xb8] sm:$0xff]
        %v438 = vld [vmem:[%s221 + $0xc0] sm:$0xff]
        %v439 = vld [vmem:[%s221 + $0xc8] sm:$0xff]
        %v440 = vld [vmem:[%s221 + $0xd0] sm:$0xff]
        %v441 = vld [vmem:[%s221 + $0xd8] sm:$0xff]
        %v442 = vld [vmem:[%s221 + $0xe0] sm:$0xff]
        %v443 = vld [vmem:[%s221 + $0xe8] sm:$0xff]
        %v444 = vld [vmem:[%s221 + $0xf0] sm:$0xff]
        %v445 = vld [vmem:[%s221 + $0xf8] sm:$0xff]
        %s446 = scalar_lea.vmem [#allocation2], 24
        %447 = vst.msk [vmem:[%s446 + $0x1] sm:$0xff] %vm302, %v414
        %448 = vst.msk [vmem:[%s446 + $0x9] sm:$0xff] %vm302, %v415
        %449 = vst.msk [vmem:[%s446 + $0x19] sm:$0xff] %vm302, %v416
        %450 = vst.msk [vmem:[%s446 + $0x21] sm:$0xff] %vm302, %v417
        %451 = vst.msk [vmem:[%s446 + $0x31] sm:$0xff] %vm302, %v418
        %452 = vst.msk [vmem:[%s446 + $0x39] sm:$0xff] %vm302, %v419
        %453 = vst.msk [vmem:[%s446 + $0x49] sm:$0xff] %vm302, %v420
        %454 = vst.msk [vmem:[%s446 + $0x51] sm:$0xff] %vm302, %v421
        %455 = vst.msk [vmem:[%s446 + $0x61] sm:$0xff] %vm302, %v422
        %456 = vst.msk [vmem:[%s446 + $0x69] sm:$0xff] %vm302, %v423
        %457 = vst.msk [vmem:[%s446 + $0x79] sm:$0xff] %vm302, %v424
        %458 = vst.msk [vmem:[%s446 + $0x81] sm:$0xff] %vm302, %v425
        %459 = vst.msk [vmem:[%s446 + $0x91] sm:$0xff] %vm302, %v426
        %460 = vst.msk [vmem:[%s446 + $0x99] sm:$0xff] %vm302, %v427
        %461 = vst.msk [vmem:[%s446 + $0xa9] sm:$0xff] %vm302, %v428
        %462 = vst.msk [vmem:[%s446 + $0xb1] sm:$0xff] %vm302, %v429
        %463 = vst.msk [vmem:[%s446 + $0xc1] sm:$0xff] %vm302, %v430
        %464 = vst.msk [vmem:[%s446 + $0xc9] sm:$0xff] %vm302, %v431
        %465 = vst.msk [vmem:[%s446 + $0xd9] sm:$0xff] %vm302, %v432
        %466 = vst.msk [vmem:[%s446 + $0xe1] sm:$0xff] %vm302, %v433
        %467 = vst.msk [vmem:[%s446 + $0xf1] sm:$0xff] %vm302, %v434
        %468 = vst.msk [vmem:[%s446 + $0xf9] sm:$0xff] %vm302, %v435
        %469 = vst.msk [vmem:[%s446 + $0x109] sm:$0xff] %vm302, %v436
        %470 = vst.msk [vmem:[%s446 + $0x111] sm:$0xff] %vm302, %v437
        %471 = vst.msk [vmem:[%s446 + $0x121] sm:$0xff] %vm302, %v438
        %472 = vst.msk [vmem:[%s446 + $0x129] sm:$0xff] %vm302, %v439
        %473 = vst.msk [vmem:[%s446 + $0x139] sm:$0xff] %vm302, %v440
        %474 = vst.msk [vmem:[%s446 + $0x141] sm:$0xff] %vm302, %v441
        %475 = vst.msk [vmem:[%s446 + $0x151] sm:$0xff] %vm302, %v442
        %476 = vst.msk [vmem:[%s446 + $0x159] sm:$0xff] %vm302, %v443
        %477 = vst.msk [vmem:[%s446 + $0x169] sm:$0xff] %vm302, %v444
        %478 = vst.msk [vmem:[%s446 + $0x171] sm:$0xff] %vm302, %v445
        %v479 = vld [vmem:[#allocation2] sm:$0xff]
        %v480 = vld [vmem:[#allocation2 + $0x8] sm:$0xff]
        %v481 = vld [vmem:[#allocation2 + $0x10] sm:$0x3]
        %v482 = vld [vmem:[#allocation2 + $0x18] sm:$0xff]
        %v483 = vld [vmem:[#allocation2 + $0x20] sm:$0xff]
        %v484 = vld [vmem:[#allocation2 + $0x28] sm:$0x3]
        %v485 = vld [vmem:[#allocation2 + $0x30] sm:$0xff]
        %v486 = vld [vmem:[#allocation2 + $0x38] sm:$0xff]
        %v487 = vld [vmem:[#allocation2 + $0x40] sm:$0x3]
        %v488 = vld [vmem:[#allocation2 + $0x48] sm:$0xff]
        %v489 = vld [vmem:[#allocation2 + $0x50] sm:$0xff]
        %v490 = vld [vmem:[#allocation2 + $0x58] sm:$0x3]
        %v491 = vld [vmem:[#allocation2 + $0x60] sm:$0xff]
        %v492 = vld [vmem:[#allocation2 + $0x68] sm:$0xff]
        %v493 = vld [vmem:[#allocation2 + $0x70] sm:$0x3]
        %v494 = vld [vmem:[#allocation2 + $0x78] sm:$0xff]
        %v495 = vld [vmem:[#allocation2 + $0x80] sm:$0xff]
        %v496 = vld [vmem:[#allocation2 + $0x88] sm:$0x3]
        %v497 = vld [vmem:[#allocation2 + $0x90] sm:$0xff]
        %v498 = vld [vmem:[#allocation2 + $0x98] sm:$0xff]
        %v499 = vld [vmem:[#allocation2 + $0xa0] sm:$0x3]
        %v500 = vld [vmem:[#allocation2 + $0xa8] sm:$0xff]
        %v501 = vld [vmem:[#allocation2 + $0xb0] sm:$0xff]
        %v502 = vld [vmem:[#allocation2 + $0xb8] sm:$0x3]
        %v503 = vld [vmem:[#allocation2 + $0xc0] sm:$0xff]
        %v504 = vld [vmem:[#allocation2 + $0xc8] sm:$0xff]
        %v505 = vld [vmem:[#allocation2 + $0xd0] sm:$0x3]
        %v506 = vld [vmem:[#allocation2 + $0xd8] sm:$0xff]
        %v507 = vld [vmem:[#allocation2 + $0xe0] sm:$0xff]
        %v508 = vld [vmem:[#allocation2 + $0xe8] sm:$0x3]
        %v509 = vld [vmem:[#allocation2 + $0xf0] sm:$0xff]
        %v510 = vld [vmem:[#allocation2 + $0xf8] sm:$0xff]
        %v511 = vld [vmem:[#allocation2 + $0x100] sm:$0x3]
        %v512 = vld [vmem:[#allocation2 + $0x108] sm:$0xff]
        %v513 = vld [vmem:[#allocation2 + $0x110] sm:$0xff]
        %v514 = vld [vmem:[#allocation2 + $0x118] sm:$0x3]
        %v515 = vld [vmem:[#allocation2 + $0x120] sm:$0xff]
        %v516 = vld [vmem:[#allocation2 + $0x128] sm:$0xff]
        %v517 = vld [vmem:[#allocation2 + $0x130] sm:$0x3]
        %v518 = vld [vmem:[#allocation2 + $0x138] sm:$0xff]
        %v519 = vld [vmem:[#allocation2 + $0x140] sm:$0xff]
        %v520 = vld [vmem:[#allocation2 + $0x148] sm:$0x3]
        %v521 = vld [vmem:[#allocation2 + $0x150] sm:$0xff]
        %v522 = vld [vmem:[#allocation2 + $0x158] sm:$0xff]
        %v523 = vld [vmem:[#allocation2 + $0x160] sm:$0x3]
        %v524 = vld [vmem:[#allocation2 + $0x168] sm:$0xff]
        %v525 = vld [vmem:[#allocation2 + $0x170] sm:$0xff]
        %v526 = vld [vmem:[#allocation2 + $0x178] sm:$0x3]
        %v527 = vld [vmem:[#allocation2 + $0x180] sm:$0xff]
        %v528 = vld [vmem:[#allocation2 + $0x188] sm:$0xff]
        %v529 = vld [vmem:[#allocation2 + $0x190] sm:$0x3]
        %v530 = vld [vmem:[#allocation2 + $0x198] sm:$0xff]
        %v531 = vld [vmem:[#allocation2 + $0x1a0] sm:$0xff]
        %v532 = vld [vmem:[#allocation2 + $0x1a8] sm:$0x3]
        %v533 = vpack.c.bf16 %v480, %v479
        %v534 = vpack.c.bf16 %v483, %v482
        %v535 = vpack.c.bf16 %v486, %v485
        %v536 = vpack.c.bf16 %v489, %v488
        %v537 = vpack.c.bf16 %v492, %v491
        %v538 = vpack.c.bf16 %v495, %v494
        %v539 = vpack.c.bf16 %v498, %v497
        %v540 = vpack.c.bf16 %v501, %v500
        %v541 = vpack.c.bf16 %v504, %v503
        %v542 = vpack.c.bf16 %v507, %v506
        %v543 = vpack.c.bf16 %v510, %v509
        %v544 = vpack.c.bf16 %v513, %v512
        %v545 = vpack.c.bf16 %v516, %v515
        %v546 = vpack.c.bf16 %v519, %v518
        %v547 = vpack.c.bf16 %v522, %v521
        %v548 = vpack.c.bf16 %v525, %v524
        %v565 = vunpack.c.l.b16 %v533
        %v566 = vunpack.c.h.b16 %v533
        %v567 = vunpack.c.l.b16 %v534
        %v568 = vunpack.c.h.b16 %v534
        %v569 = vunpack.c.l.b16 %v535
        %v570 = vunpack.c.h.b16 %v535
        %v571 = vunpack.c.l.b16 %v536
        %v572 = vunpack.c.h.b16 %v536
        %v573 = vunpack.c.l.b16 %v537
        %v574 = vunpack.c.h.b16 %v537
        %v575 = vunpack.c.l.b16 %v538
        %v576 = vunpack.c.h.b16 %v538
        %v577 = vunpack.c.l.b16 %v539
        %v578 = vunpack.c.h.b16 %v539
        %v579 = vunpack.c.l.b16 %v540
        %v580 = vunpack.c.h.b16 %v540
        %v581 = vunpack.c.l.b16 %v541
        %v582 = vunpack.c.h.b16 %v541
        %v583 = vunpack.c.l.b16 %v542
        %v584 = vunpack.c.h.b16 %v542
        %v585 = vunpack.c.l.b16 %v543
        %v586 = vunpack.c.h.b16 %v543
        %v587 = vunpack.c.l.b16 %v544
        %v588 = vunpack.c.h.b16 %v544
        %v589 = vunpack.c.l.b16 %v545
        %v590 = vunpack.c.h.b16 %v545
        %v591 = vunpack.c.l.b16 %v546
        %v592 = vunpack.c.h.b16 %v546
        %v593 = vunpack.c.l.b16 %v547
        %v594 = vunpack.c.h.b16 %v547
        %v595 = vunpack.c.l.b16 %v548
        %v596 = vunpack.c.h.b16 %v548
        %v597 = vpack.c.b16 %v565, %v565
        %v598 = vpack.c.b16 %v566, %v566
        %v599 = vpack.c.b16 %v567, %v567
        %v600 = vpack.c.b16 %v568, %v568
        %v601 = vpack.c.b16 %v569, %v569
        %v602 = vpack.c.b16 %v570, %v570
        %v603 = vpack.c.b16 %v571, %v571
        %v604 = vpack.c.b16 %v572, %v572
        %v605 = vpack.c.b16 %v573, %v573
        %v606 = vpack.c.b16 %v574, %v574
        %v607 = vpack.c.b16 %v575, %v575
        %v608 = vpack.c.b16 %v576, %v576
        %v609 = vpack.c.b16 %v577, %v577
        %v610 = vpack.c.b16 %v578, %v578
        %v611 = vpack.c.b16 %v579, %v579
        %v612 = vpack.c.b16 %v580, %v580
        %v613 = vpack.c.b16 %v581, %v581
        %v614 = vpack.c.b16 %v582, %v582
        %v615 = vpack.c.b16 %v583, %v583
        %v616 = vpack.c.b16 %v584, %v584
        %v617 = vpack.c.b16 %v585, %v585
        %v618 = vpack.c.b16 %v586, %v586
        %v619 = vpack.c.b16 %v587, %v587
        %v620 = vpack.c.b16 %v588, %v588
        %v621 = vpack.c.b16 %v589, %v589
        %v622 = vpack.c.b16 %v590, %v590
        %v623 = vpack.c.b16 %v591, %v591
        %v624 = vpack.c.b16 %v592, %v592
        %v625 = vpack.c.b16 %v593, %v593
        %v626 = vpack.c.b16 %v594, %v594
        %v627 = vpack.c.b16 %v595, %v595
        %v628 = vpack.c.b16 %v596, %v596
        %vm661 = vcmask 27648
        %662 = vst.msk [vmem:[#allocation4] sm:$0xf] %vm661, %v597
        %663 = vst.msk [vmem:[#allocation4 + $0x4] sm:$0xf] %vm661, %v598
        %664 = vst.msk [vmem:[#allocation4 + $0x8] sm:$0xf] %vm661, %v599
        %665 = vst.msk [vmem:[#allocation4 + $0xc] sm:$0xf] %vm661, %v600
        %666 = vst.msk [vmem:[#allocation4 + $0x10] sm:$0xf] %vm661, %v601
        %667 = vst.msk [vmem:[#allocation4 + $0x14] sm:$0xf] %vm661, %v602
        %668 = vst.msk [vmem:[#allocation4 + $0x18] sm:$0xf] %vm661, %v603
        %669 = vst.msk [vmem:[#allocation4 + $0x1c] sm:$0xf] %vm661, %v604
        %670 = vst.msk [vmem:[#allocation4 + $0x20] sm:$0xf] %vm661, %v605
        %671 = vst.msk [vmem:[#allocation4 + $0x24] sm:$0xf] %vm661, %v606
        %672 = vst.msk [vmem:[#allocation4 + $0x28] sm:$0xf] %vm661, %v607
        %673 = vst.msk [vmem:[#allocation4 + $0x2c] sm:$0xf] %vm661, %v608
        %674 = vst.msk [vmem:[#allocation4 + $0x30] sm:$0xf] %vm661, %v609
        %675 = vst.msk [vmem:[#allocation4 + $0x34] sm:$0xf] %vm661, %v610
        %676 = vst.msk [vmem:[#allocation4 + $0x38] sm:$0xf] %vm661, %v611
        %677 = vst.msk [vmem:[#allocation4 + $0x3c] sm:$0xf] %vm661, %v612
        %678 = vst.msk [vmem:[#allocation4 + $0x40] sm:$0xf] %vm661, %v613
        %679 = vst.msk [vmem:[#allocation4 + $0x44] sm:$0xf] %vm661, %v614
        %680 = vst.msk [vmem:[#allocation4 + $0x48] sm:$0xf] %vm661, %v615
        %681 = vst.msk [vmem:[#allocation4 + $0x4c] sm:$0xf] %vm661, %v616
        %682 = vst.msk [vmem:[#allocation4 + $0x50] sm:$0xf] %vm661, %v617
        %683 = vst.msk [vmem:[#allocation4 + $0x54] sm:$0xf] %vm661, %v618
        %684 = vst.msk [vmem:[#allocation4 + $0x58] sm:$0xf] %vm661, %v619
        %685 = vst.msk [vmem:[#allocation4 + $0x5c] sm:$0xf] %vm661, %v620
        %686 = vst.msk [vmem:[#allocation4 + $0x60] sm:$0xf] %vm661, %v621
        %687 = vst.msk [vmem:[#allocation4 + $0x64] sm:$0xf] %vm661, %v622
        %688 = vst.msk [vmem:[#allocation4 + $0x68] sm:$0xf] %vm661, %v623
        %689 = vst.msk [vmem:[#allocation4 + $0x6c] sm:$0xf] %vm661, %v624
        %690 = vst.msk [vmem:[#allocation4 + $0x70] sm:$0xf] %vm661, %v625
        %691 = vst.msk [vmem:[#allocation4 + $0x74] sm:$0xf] %vm661, %v626
        %692 = vst.msk [vmem:[#allocation4 + $0x78] sm:$0xf] %vm661, %v627
        %693 = vst.msk [vmem:[#allocation4 + $0x7c] sm:$0xf] %vm661, %v628
        %vm742 = vcmask 1046528
        %v743 = vrot.slane %v479, 1
        %v744 = vrot.slane %v480, 1
        %v745 = vsel %vm742, %v743, %v744
        %v746 = vrot.slane %v481, 1
        %v747 = vsel %vm742, %v744, %v746
        %v748 = vrot.slane %v482, 1
        %v749 = vrot.slane %v483, 1
        %v750 = vsel %vm742, %v748, %v749
        %v751 = vrot.slane %v484, 1
        %v752 = vsel %vm742, %v749, %v751
        %v753 = vrot.slane %v485, 1
        %v754 = vrot.slane %v486, 1
        %v755 = vsel %vm742, %v753, %v754
        %v756 = vrot.slane %v487, 1
        %v757 = vsel %vm742, %v754, %v756
        %v758 = vrot.slane %v488, 1
        %v759 = vrot.slane %v489, 1
        %v760 = vsel %vm742, %v758, %v759
        %v761 = vrot.slane %v490, 1
        %v762 = vsel %vm742, %v759, %v761
        %v763 = vrot.slane %v491, 1
        %v764 = vrot.slane %v492, 1
        %v765 = vsel %vm742, %v763, %v764
        %v766 = vrot.slane %v493, 1
        %v767 = vsel %vm742, %v764, %v766
        %v768 = vrot.slane %v494, 1
        %v769 = vrot.slane %v495, 1
        %v770 = vsel %vm742, %v768, %v769
        %v771 = vrot.slane %v496, 1
        %v772 = vsel %vm742, %v769, %v771
        %v773 = vrot.slane %v497, 1
        %v774 = vrot.slane %v498, 1
        %v775 = vsel %vm742, %v773, %v774
        %v776 = vrot.slane %v499, 1
        %v777 = vsel %vm742, %v774, %v776
        %v778 = vrot.slane %v500, 1
        %v779 = vrot.slane %v501, 1
        %v780 = vsel %vm742, %v778, %v779
        %v781 = vrot.slane %v502, 1
        %v782 = vsel %vm742, %v779, %v781
        %v783 = vrot.slane %v503, 1
        %v784 = vrot.slane %v504, 1
        %v785 = vsel %vm742, %v783, %v784
        %v786 = vrot.slane %v505, 1
        %v787 = vsel %vm742, %v784, %v786
        %v788 = vrot.slane %v506, 1
        %v789 = vrot.slane %v507, 1
        %v790 = vsel %vm742, %v788, %v789
        %v791 = vrot.slane %v508, 1
        %v792 = vsel %vm742, %v789, %v791
        %v793 = vrot.slane %v509, 1
        %v794 = vrot.slane %v510, 1
        %v795 = vsel %vm742, %v793, %v794
        %v796 = vrot.slane %v511, 1
        %v797 = vsel %vm742, %v794, %v796
        %v798 = vrot.slane %v512, 1
        %v799 = vrot.slane %v513, 1
        %v800 = vsel %vm742, %v798, %v799
        %v801 = vrot.slane %v514, 1
        %v802 = vsel %vm742, %v799, %v801
        %v803 = vrot.slane %v515, 1
        %v804 = vrot.slane %v516, 1
        %v805 = vsel %vm742, %v803, %v804
        %v806 = vrot.slane %v517, 1
        %v807 = vsel %vm742, %v804, %v806
        %v808 = vrot.slane %v518, 1
        %v809 = vrot.slane %v519, 1
        %v810 = vsel %vm742, %v808, %v809
        %v811 = vrot.slane %v520, 1
        %v812 = vsel %vm742, %v809, %v811
        %v813 = vrot.slane %v521, 1
        %v814 = vrot.slane %v522, 1
        %v815 = vsel %vm742, %v813, %v814
        %v816 = vrot.slane %v523, 1
        %v817 = vsel %vm742, %v814, %v816
        %v818 = vrot.slane %v524, 1
        %v819 = vrot.slane %v525, 1
        %v820 = vsel %vm742, %v818, %v819
        %v821 = vrot.slane %v526, 1
        %v822 = vsel %vm742, %v819, %v821
        %v855 = vpack.c.bf16 %v747, %v745
        %v856 = vpack.c.bf16 %v752, %v750
        %v857 = vpack.c.bf16 %v757, %v755
        %v858 = vpack.c.bf16 %v762, %v760
        %v859 = vpack.c.bf16 %v767, %v765
        %v860 = vpack.c.bf16 %v772, %v770
        %v861 = vpack.c.bf16 %v777, %v775
        %v862 = vpack.c.bf16 %v782, %v780
        %v863 = vpack.c.bf16 %v787, %v785
        %v864 = vpack.c.bf16 %v792, %v790
        %v865 = vpack.c.bf16 %v797, %v795
        %v866 = vpack.c.bf16 %v802, %v800
        %v867 = vpack.c.bf16 %v807, %v805
        %v868 = vpack.c.bf16 %v812, %v810
        %v869 = vpack.c.bf16 %v817, %v815
        %v870 = vpack.c.bf16 %v822, %v820
        %v887 = vunpack.c.l.b16 %v855
        %v888 = vunpack.c.h.b16 %v855
        %v889 = vunpack.c.l.b16 %v856
        %v890 = vunpack.c.h.b16 %v856
        %v891 = vunpack.c.l.b16 %v857
        %v892 = vunpack.c.h.b16 %v857
        %v893 = vunpack.c.l.b16 %v858
        %v894 = vunpack.c.h.b16 %v858
        %v895 = vunpack.c.l.b16 %v859
        %v896 = vunpack.c.h.b16 %v859
        %v897 = vunpack.c.l.b16 %v860
        %v898 = vunpack.c.h.b16 %v860
        %v899 = vunpack.c.l.b16 %v861
        %v900 = vunpack.c.h.b16 %v861
        %v901 = vunpack.c.l.b16 %v862
        %v902 = vunpack.c.h.b16 %v862
        %v903 = vunpack.c.l.b16 %v863
        %v904 = vunpack.c.h.b16 %v863
        %v905 = vunpack.c.l.b16 %v864
        %v906 = vunpack.c.h.b16 %v864
        %v907 = vunpack.c.l.b16 %v865
        %v908 = vunpack.c.h.b16 %v865
        %v909 = vunpack.c.l.b16 %v866
        %v910 = vunpack.c.h.b16 %v866
        %v911 = vunpack.c.l.b16 %v867
        %v912 = vunpack.c.h.b16 %v867
        %v913 = vunpack.c.l.b16 %v868
        %v914 = vunpack.c.h.b16 %v868
        %v915 = vunpack.c.l.b16 %v869
        %v916 = vunpack.c.h.b16 %v869
        %v917 = vunpack.c.l.b16 %v870
        %v918 = vunpack.c.h.b16 %v870
        %v919 = vpack.c.b16 %v887, %v887
        %v920 = vpack.c.b16 %v888, %v888
        %v921 = vpack.c.b16 %v889, %v889
        %v922 = vpack.c.b16 %v890, %v890
        %v923 = vpack.c.b16 %v891, %v891
        %v924 = vpack.c.b16 %v892, %v892
        %v925 = vpack.c.b16 %v893, %v893
        %v926 = vpack.c.b16 %v894, %v894
        %v927 = vpack.c.b16 %v895, %v895
        %v928 = vpack.c.b16 %v896, %v896
        %v929 = vpack.c.b16 %v897, %v897
        %v930 = vpack.c.b16 %v898, %v898
        %v931 = vpack.c.b16 %v899, %v899
        %v932 = vpack.c.b16 %v900, %v900
        %v933 = vpack.c.b16 %v901, %v901
        %v934 = vpack.c.b16 %v902, %v902
        %v935 = vpack.c.b16 %v903, %v903
        %v936 = vpack.c.b16 %v904, %v904
        %v937 = vpack.c.b16 %v905, %v905
        %v938 = vpack.c.b16 %v906, %v906
        %v939 = vpack.c.b16 %v907, %v907
        %v940 = vpack.c.b16 %v908, %v908
        %v941 = vpack.c.b16 %v909, %v909
        %v942 = vpack.c.b16 %v910, %v910
        %v943 = vpack.c.b16 %v911, %v911
        %v944 = vpack.c.b16 %v912, %v912
        %v945 = vpack.c.b16 %v913, %v913
        %v946 = vpack.c.b16 %v914, %v914
        %v947 = vpack.c.b16 %v915, %v915
        %v948 = vpack.c.b16 %v916, %v916
        %v949 = vpack.c.b16 %v917, %v917
        %v950 = vpack.c.b16 %v918, %v918
        %951 = vrot.lane.b32.xlu0 %v919, 4
        %v952 = vpop.permute.xlu0 %951
        %953 = vrot.lane.b32.xlu0 %v920, 4
        %v954 = vpop.permute.xlu0 %953
        %955 = vrot.lane.b32.xlu0 %v921, 4
        %v956 = vpop.permute.xlu0 %955
        %957 = vrot.lane.b32.xlu0 %v922, 4
        %v958 = vpop.permute.xlu0 %957
        %959 = vrot.lane.b32.xlu0 %v923, 4
        %v960 = vpop.permute.xlu0 %959
        %961 = vrot.lane.b32.xlu0 %v924, 4
        %v962 = vpop.permute.xlu0 %961
        %963 = vrot.lane.b32.xlu0 %v925, 4
        %v964 = vpop.permute.xlu0 %963
        %965 = vrot.lane.b32.xlu0 %v926, 4
        %v966 = vpop.permute.xlu0 %965
        %967 = vrot.lane.b32.xlu0 %v927, 4
        %v968 = vpop.permute.xlu0 %967
        %969 = vrot.lane.b32.xlu0 %v928, 4
        %v970 = vpop.permute.xlu0 %969
        %971 = vrot.lane.b32.xlu0 %v929, 4
        %v972 = vpop.permute.xlu0 %971
        %973 = vrot.lane.b32.xlu0 %v930, 4
        %v974 = vpop.permute.xlu0 %973
        %975 = vrot.lane.b32.xlu0 %v931, 4
        %v976 = vpop.permute.xlu0 %975
        %977 = vrot.lane.b32.xlu0 %v932, 4
        %v978 = vpop.permute.xlu0 %977
        %979 = vrot.lane.b32.xlu0 %v933, 4
        %v980 = vpop.permute.xlu0 %979
        %981 = vrot.lane.b32.xlu0 %v934, 4
        %v982 = vpop.permute.xlu0 %981
        %983 = vrot.lane.b32.xlu0 %v935, 4
        %v984 = vpop.permute.xlu0 %983
        %985 = vrot.lane.b32.xlu0 %v936, 4
        %v986 = vpop.permute.xlu0 %985
        %987 = vrot.lane.b32.xlu0 %v937, 4
        %v988 = vpop.permute.xlu0 %987
        %989 = vrot.lane.b32.xlu0 %v938, 4
        %v990 = vpop.permute.xlu0 %989
        %991 = vrot.lane.b32.xlu0 %v939, 4
        %v992 = vpop.permute.xlu0 %991
        %993 = vrot.lane.b32.xlu0 %v940, 4
        %v994 = vpop.permute.xlu0 %993
        %995 = vrot.lane.b32.xlu0 %v941, 4
        %v996 = vpop.permute.xlu0 %995
        %997 = vrot.lane.b32.xlu0 %v942, 4
        %v998 = vpop.permute.xlu0 %997
        %999 = vrot.lane.b32.xlu0 %v943, 4
        %v1000 = vpop.permute.xlu0 %999
        %1001 = vrot.lane.b32.xlu0 %v944, 4
        %v1002 = vpop.permute.xlu0 %1001
        %1003 = vrot.lane.b32.xlu0 %v945, 4
        %v1004 = vpop.permute.xlu0 %1003
        %1005 = vrot.lane.b32.xlu0 %v946, 4
        %v1006 = vpop.permute.xlu0 %1005
        %1007 = vrot.lane.b32.xlu0 %v947, 4
        %v1008 = vpop.permute.xlu0 %1007
        %1009 = vrot.lane.b32.xlu0 %v948, 4
        %v1010 = vpop.permute.xlu0 %1009
        %1011 = vrot.lane.b32.xlu0 %v949, 4
        %v1012 = vpop.permute.xlu0 %1011
        %1013 = vrot.lane.b32.xlu0 %v950, 4
        %v1014 = vpop.permute.xlu0 %1013
        %vm1047 = vcmask 60448
        %1048 = vst.msk [vmem:[#allocation4] sm:$0xf] %vm1047, %v952
        %1049 = vst.msk [vmem:[#allocation4 + $0x4] sm:$0xf] %vm1047, %v954
        %1050 = vst.msk [vmem:[#allocation4 + $0x8] sm:$0xf] %vm1047, %v956
        %1051 = vst.msk [vmem:[#allocation4 + $0xc] sm:$0xf] %vm1047, %v958
        %1052 = vst.msk [vmem:[#allocation4 + $0x10] sm:$0xf] %vm1047, %v960
        %1053 = vst.msk [vmem:[#allocation4 + $0x14] sm:$0xf] %vm1047, %v962
        %1054 = vst.msk [vmem:[#allocation4 + $0x18] sm:$0xf] %vm1047, %v964
        %1055 = vst.msk [vmem:[#allocation4 + $0x1c] sm:$0xf] %vm1047, %v966
        %1056 = vst.msk [vmem:[#allocation4 + $0x20] sm:$0xf] %vm1047, %v968
        %1057 = vst.msk [vmem:[#allocation4 + $0x24] sm:$0xf] %vm1047, %v970
        %1058 = vst.msk [vmem:[#allocation4 + $0x28] sm:$0xf] %vm1047, %v972
        %1059 = vst.msk [vmem:[#allocation4 + $0x2c] sm:$0xf] %vm1047, %v974
        %1060 = vst.msk [vmem:[#allocation4 + $0x30] sm:$0xf] %vm1047, %v976
        %1061 = vst.msk [vmem:[#allocation4 + $0x34] sm:$0xf] %vm1047, %v978
        %1062 = vst.msk [vmem:[#allocation4 + $0x38] sm:$0xf] %vm1047, %v980
        %1063 = vst.msk [vmem:[#allocation4 + $0x3c] sm:$0xf] %vm1047, %v982
        %1064 = vst.msk [vmem:[#allocation4 + $0x40] sm:$0xf] %vm1047, %v984
        %1065 = vst.msk [vmem:[#allocation4 + $0x44] sm:$0xf] %vm1047, %v986
        %1066 = vst.msk [vmem:[#allocation4 + $0x48] sm:$0xf] %vm1047, %v988
        %1067 = vst.msk [vmem:[#allocation4 + $0x4c] sm:$0xf] %vm1047, %v990
        %1068 = vst.msk [vmem:[#allocation4 + $0x50] sm:$0xf] %vm1047, %v992
        %1069 = vst.msk [vmem:[#allocation4 + $0x54] sm:$0xf] %vm1047, %v994
        %1070 = vst.msk [vmem:[#allocation4 + $0x58] sm:$0xf] %vm1047, %v996
        %1071 = vst.msk [vmem:[#allocation4 + $0x5c] sm:$0xf] %vm1047, %v998
        %1072 = vst.msk [vmem:[#allocation4 + $0x60] sm:$0xf] %vm1047, %v1000
        %1073 = vst.msk [vmem:[#allocation4 + $0x64] sm:$0xf] %vm1047, %v1002
        %1074 = vst.msk [vmem:[#allocation4 + $0x68] sm:$0xf] %vm1047, %v1004
        %1075 = vst.msk [vmem:[#allocation4 + $0x6c] sm:$0xf] %vm1047, %v1006
        %1076 = vst.msk [vmem:[#allocation4 + $0x70] sm:$0xf] %vm1047, %v1008
        %1077 = vst.msk [vmem:[#allocation4 + $0x74] sm:$0xf] %vm1047, %v1010
        %1078 = vst.msk [vmem:[#allocation4 + $0x78] sm:$0xf] %vm1047, %v1012
        %1079 = vst.msk [vmem:[#allocation4 + $0x7c] sm:$0xf] %vm1047, %v1014
        %vm1080 = vcmask 1045504
        %v1081 = vrot.slane %v479, 2
        %v1082 = vrot.slane %v480, 2
        %v1083 = vsel %vm1080, %v1081, %v1082
        %v1084 = vrot.slane %v481, 2
        %v1085 = vsel %vm1080, %v1082, %v1084
        %v1086 = vrot.slane %v482, 2
        %v1087 = vrot.slane %v483, 2
        %v1088 = vsel %vm1080, %v1086, %v1087
        %v1089 = vrot.slane %v484, 2
        %v1090 = vsel %vm1080, %v1087, %v1089
        %v1091 = vrot.slane %v485, 2
        %v1092 = vrot.slane %v486, 2
        %v1093 = vsel %vm1080, %v1091, %v1092
        %v1094 = vrot.slane %v487, 2
        %v1095 = vsel %vm1080, %v1092, %v1094
        %v1096 = vrot.slane %v488, 2
        %v1097 = vrot.slane %v489, 2
        %v1098 = vsel %vm1080, %v1096, %v1097
        %v1099 = vrot.slane %v490, 2
        %v1100 = vsel %vm1080, %v1097, %v1099
        %v1101 = vrot.slane %v491, 2
        %v1102 = vrot.slane %v492, 2
        %v1103 = vsel %vm1080, %v1101, %v1102
        %v1104 = vrot.slane %v493, 2
        %v1105 = vsel %vm1080, %v1102, %v1104
        %v1106 = vrot.slane %v494, 2
        %v1107 = vrot.slane %v495, 2
        %v1108 = vsel %vm1080, %v1106, %v1107
        %v1109 = vrot.slane %v496, 2
        %v1110 = vsel %vm1080, %v1107, %v1109
        %v1111 = vrot.slane %v497, 2
        %v1112 = vrot.slane %v498, 2
        %v1113 = vsel %vm1080, %v1111, %v1112
        %v1114 = vrot.slane %v499, 2
        %v1115 = vsel %vm1080, %v1112, %v1114
        %v1116 = vrot.slane %v500, 2
        %v1117 = vrot.slane %v501, 2
        %v1118 = vsel %vm1080, %v1116, %v1117
        %v1119 = vrot.slane %v502, 2
        %v1120 = vsel %vm1080, %v1117, %v1119
        %v1121 = vrot.slane %v503, 2
        %v1122 = vrot.slane %v504, 2
        %v1123 = vsel %vm1080, %v1121, %v1122
        %v1124 = vrot.slane %v505, 2
        %v1125 = vsel %vm1080, %v1122, %v1124
        %v1126 = vrot.slane %v506, 2
        %v1127 = vrot.slane %v507, 2
        %v1128 = vsel %vm1080, %v1126, %v1127
        %v1129 = vrot.slane %v508, 2
        %v1130 = vsel %vm1080, %v1127, %v1129
        %v1131 = vrot.slane %v509, 2
        %v1132 = vrot.slane %v510, 2
        %v1133 = vsel %vm1080, %v1131, %v1132
        %v1134 = vrot.slane %v511, 2
        %v1135 = vsel %vm1080, %v1132, %v1134
        %v1136 = vrot.slane %v512, 2
        %v1137 = vrot.slane %v513, 2
        %v1138 = vsel %vm1080, %v1136, %v1137
        %v1139 = vrot.slane %v514, 2
        %v1140 = vsel %vm1080, %v1137, %v1139
        %v1141 = vrot.slane %v515, 2
        %v1142 = vrot.slane %v516, 2
        %v1143 = vsel %vm1080, %v1141, %v1142
        %v1144 = vrot.slane %v517, 2
        %v1145 = vsel %vm1080, %v1142, %v1144
        %v1146 = vrot.slane %v518, 2
        %v1147 = vrot.slane %v519, 2
        %v1148 = vsel %vm1080, %v1146, %v1147
        %v1149 = vrot.slane %v520, 2
        %v1150 = vsel %vm1080, %v1147, %v1149
        %v1151 = vrot.slane %v521, 2
        %v1152 = vrot.slane %v522, 2
        %v1153 = vsel %vm1080, %v1151, %v1152
        %v1154 = vrot.slane %v523, 2
        %v1155 = vsel %vm1080, %v1152, %v1154
        %v1156 = vrot.slane %v524, 2
        %v1157 = vrot.slane %v525, 2
        %v1158 = vsel %vm1080, %v1156, %v1157
        %v1159 = vrot.slane %v526, 2
        %v1160 = vsel %vm1080, %v1157, %v1159
        %v1193 = vpack.c.bf16 %v1085, %v1083
        %v1194 = vpack.c.bf16 %v1090, %v1088
        %v1195 = vpack.c.bf16 %v1095, %v1093
        %v1196 = vpack.c.bf16 %v1100, %v1098
        %v1197 = vpack.c.bf16 %v1105, %v1103
        %v1198 = vpack.c.bf16 %v1110, %v1108
        %v1199 = vpack.c.bf16 %v1115, %v1113
        %v1200 = vpack.c.bf16 %v1120, %v1118
        %v1201 = vpack.c.bf16 %v1125, %v1123
        %v1202 = vpack.c.bf16 %v1130, %v1128
        %v1203 = vpack.c.bf16 %v1135, %v1133
        %v1204 = vpack.c.bf16 %v1140, %v1138
        %v1205 = vpack.c.bf16 %v1145, %v1143
        %v1206 = vpack.c.bf16 %v1150, %v1148
        %v1207 = vpack.c.bf16 %v1155, %v1153
        %v1208 = vpack.c.bf16 %v1160, %v1158
        %v1225 = vunpack.c.l.b16 %v1193
        %v1226 = vunpack.c.h.b16 %v1193
        %v1227 = vunpack.c.l.b16 %v1194
        %v1228 = vunpack.c.h.b16 %v1194
        %v1229 = vunpack.c.l.b16 %v1195
        %v1230 = vunpack.c.h.b16 %v1195
        %v1231 = vunpack.c.l.b16 %v1196
        %v1232 = vunpack.c.h.b16 %v1196
        %v1233 = vunpack.c.l.b16 %v1197
        %v1234 = vunpack.c.h.b16 %v1197
        %v1235 = vunpack.c.l.b16 %v1198
        %v1236 = vunpack.c.h.b16 %v1198
        %v1237 = vunpack.c.l.b16 %v1199
        %v1238 = vunpack.c.h.b16 %v1199
        %v1239 = vunpack.c.l.b16 %v1200
        %v1240 = vunpack.c.h.b16 %v1200
        %v1241 = vunpack.c.l.b16 %v1201
        %v1242 = vunpack.c.h.b16 %v1201
        %v1243 = vunpack.c.l.b16 %v1202
        %v1244 = vunpack.c.h.b16 %v1202
        %v1245 = vunpack.c.l.b16 %v1203
        %v1246 = vunpack.c.h.b16 %v1203
        %v1247 = vunpack.c.l.b16 %v1204
        %v1248 = vunpack.c.h.b16 %v1204
        %v1249 = vunpack.c.l.b16 %v1205
        %v1250 = vunpack.c.h.b16 %v1205
        %v1251 = vunpack.c.l.b16 %v1206
        %v1252 = vunpack.c.h.b16 %v1206
        %v1253 = vunpack.c.l.b16 %v1207
        %v1254 = vunpack.c.h.b16 %v1207
        %v1255 = vunpack.c.l.b16 %v1208
        %v1256 = vunpack.c.h.b16 %v1208
        %v1257 = vpack.c.b16 %v1225, %v1225
        %v1258 = vpack.c.b16 %v1226, %v1226
        %v1259 = vpack.c.b16 %v1227, %v1227
        %v1260 = vpack.c.b16 %v1228, %v1228
        %v1261 = vpack.c.b16 %v1229, %v1229
        %v1262 = vpack.c.b16 %v1230, %v1230
        %v1263 = vpack.c.b16 %v1231, %v1231
        %v1264 = vpack.c.b16 %v1232, %v1232
        %v1265 = vpack.c.b16 %v1233, %v1233
        %v1266 = vpack.c.b16 %v1234, %v1234
        %v1267 = vpack.c.b16 %v1235, %v1235
        %v1268 = vpack.c.b16 %v1236, %v1236
        %v1269 = vpack.c.b16 %v1237, %v1237
        %v1270 = vpack.c.b16 %v1238, %v1238
        %v1271 = vpack.c.b16 %v1239, %v1239
        %v1272 = vpack.c.b16 %v1240, %v1240
        %v1273 = vpack.c.b16 %v1241, %v1241
        %v1274 = vpack.c.b16 %v1242, %v1242
        %v1275 = vpack.c.b16 %v1243, %v1243
        %v1276 = vpack.c.b16 %v1244, %v1244
        %v1277 = vpack.c.b16 %v1245, %v1245
        %v1278 = vpack.c.b16 %v1246, %v1246
        %v1279 = vpack.c.b16 %v1247, %v1247
        %v1280 = vpack.c.b16 %v1248, %v1248
        %v1281 = vpack.c.b16 %v1249, %v1249
        %v1282 = vpack.c.b16 %v1250, %v1250
        %v1283 = vpack.c.b16 %v1251, %v1251
        %v1284 = vpack.c.b16 %v1252, %v1252
        %v1285 = vpack.c.b16 %v1253, %v1253
        %v1286 = vpack.c.b16 %v1254, %v1254
        %v1287 = vpack.c.b16 %v1255, %v1255
        %v1288 = vpack.c.b16 %v1256, %v1256
        %1289 = vrot.lane.b32.xlu0 %v1257, 8
        %v1290 = vpop.permute.xlu0 %1289
        %1291 = vrot.lane.b32.xlu0 %v1258, 8
        %v1292 = vpop.permute.xlu0 %1291
        %1293 = vrot.lane.b32.xlu0 %v1259, 8
        %v1294 = vpop.permute.xlu0 %1293
        %1295 = vrot.lane.b32.xlu0 %v1260, 8
        %v1296 = vpop.permute.xlu0 %1295
        %1297 = vrot.lane.b32.xlu0 %v1261, 8
        %v1298 = vpop.permute.xlu0 %1297
        %1299 = vrot.lane.b32.xlu0 %v1262, 8
        %v1300 = vpop.permute.xlu0 %1299
        %1301 = vrot.lane.b32.xlu0 %v1263, 8
        %v1302 = vpop.permute.xlu0 %1301
        %1303 = vrot.lane.b32.xlu0 %v1264, 8
        %v1304 = vpop.permute.xlu0 %1303
        %1305 = vrot.lane.b32.xlu0 %v1265, 8
        %v1306 = vpop.permute.xlu0 %1305
        %1307 = vrot.lane.b32.xlu0 %v1266, 8
        %v1308 = vpop.permute.xlu0 %1307
        %1309 = vrot.lane.b32.xlu0 %v1267, 8
        %v1310 = vpop.permute.xlu0 %1309
        %1311 = vrot.lane.b32.xlu0 %v1268, 8
        %v1312 = vpop.permute.xlu0 %1311
        %1313 = vrot.lane.b32.xlu0 %v1269, 8
        %v1314 = vpop.permute.xlu0 %1313
        %1315 = vrot.lane.b32.xlu0 %v1270, 8
        %v1316 = vpop.permute.xlu0 %1315
        %1317 = vrot.lane.b32.xlu0 %v1271, 8
        %v1318 = vpop.permute.xlu0 %1317
        %1319 = vrot.lane.b32.xlu0 %v1272, 8
        %v1320 = vpop.permute.xlu0 %1319
        %1321 = vrot.lane.b32.xlu0 %v1273, 8
        %v1322 = vpop.permute.xlu0 %1321
        %1323 = vrot.lane.b32.xlu0 %v1274, 8
        %v1324 = vpop.permute.xlu0 %1323
        %1325 = vrot.lane.b32.xlu0 %v1275, 8
        %v1326 = vpop.permute.xlu0 %1325
        %1327 = vrot.lane.b32.xlu0 %v1276, 8
        %v1328 = vpop.permute.xlu0 %1327
        %1329 = vrot.lane.b32.xlu0 %v1277, 8
        %v1330 = vpop.permute.xlu0 %1329
        %1331 = vrot.lane.b32.xlu0 %v1278, 8
        %v1332 = vpop.permute.xlu0 %1331
        %1333 = vrot.lane.b32.xlu0 %v1279, 8
        %v1334 = vpop.permute.xlu0 %1333
        %1335 = vrot.lane.b32.xlu0 %v1280, 8
        %v1336 = vpop.permute.xlu0 %1335
        %1337 = vrot.lane.b32.xlu0 %v1281, 8
        %v1338 = vpop.permute.xlu0 %1337
        %1339 = vrot.lane.b32.xlu0 %v1282, 8
        %v1340 = vpop.permute.xlu0 %1339
        %1341 = vrot.lane.b32.xlu0 %v1283, 8
        %v1342 = vpop.permute.xlu0 %1341
        %1343 = vrot.lane.b32.xlu0 %v1284, 8
        %v1344 = vpop.permute.xlu0 %1343
        %1345 = vrot.lane.b32.xlu0 %v1285, 8
        %v1346 = vpop.permute.xlu0 %1345
        %1347 = vrot.lane.b32.xlu0 %v1286, 8
        %v1348 = vpop.permute.xlu0 %1347
        %1349 = vrot.lane.b32.xlu0 %v1287, 8
        %v1350 = vpop.permute.xlu0 %1349
        %1351 = vrot.lane.b32.xlu0 %v1288, 8
        %v1352 = vpop.permute.xlu0 %1351
        %vm1385 = vcmask 93248
        %1386 = vst.msk [vmem:[#allocation4] sm:$0xf] %vm1385, %v1290
        %1387 = vst.msk [vmem:[#allocation4 + $0x4] sm:$0xf] %vm1385, %v1292
        %1388 = vst.msk [vmem:[#allocation4 + $0x8] sm:$0xf] %vm1385, %v1294
        %1389 = vst.msk [vmem:[#allocation4 + $0xc] sm:$0xf] %vm1385, %v1296
        %1390 = vst.msk [vmem:[#allocation4 + $0x10] sm:$0xf] %vm1385, %v1298
        %1391 = vst.msk [vmem:[#allocation4 + $0x14] sm:$0xf] %vm1385, %v1300
        %1392 = vst.msk [vmem:[#allocation4 + $0x18] sm:$0xf] %vm1385, %v1302
        %1393 = vst.msk [vmem:[#allocation4 + $0x1c] sm:$0xf] %vm1385, %v1304
        %1394 = vst.msk [vmem:[#allocation4 + $0x20] sm:$0xf] %vm1385, %v1306
        %1395 = vst.msk [vmem:[#allocation4 + $0x24] sm:$0xf] %vm1385, %v1308
        %1396 = vst.msk [vmem:[#allocation4 + $0x28] sm:$0xf] %vm1385, %v1310
        %1397 = vst.msk [vmem:[#allocation4 + $0x2c] sm:$0xf] %vm1385, %v1312
        %1398 = vst.msk [vmem:[#allocation4 + $0x30] sm:$0xf] %vm1385, %v1314
        %1399 = vst.msk [vmem:[#allocation4 + $0x34] sm:$0xf] %vm1385, %v1316
        %1400 = vst.msk [vmem:[#allocation4 + $0x38] sm:$0xf] %vm1385, %v1318
        %1401 = vst.msk [vmem:[#allocation4 + $0x3c] sm:$0xf] %vm1385, %v1320
        %1402 = vst.msk [vmem:[#allocation4 + $0x40] sm:$0xf] %vm1385, %v1322
        %1403 = vst.msk [vmem:[#allocation4 + $0x44] sm:$0xf] %vm1385, %v1324
        %1404 = vst.msk [vmem:[#allocation4 + $0x48] sm:$0xf] %vm1385, %v1326
        %1405 = vst.msk [vmem:[#allocation4 + $0x4c] sm:$0xf] %vm1385, %v1328
        %1406 = vst.msk [vmem:[#allocation4 + $0x50] sm:$0xf] %vm1385, %v1330
        %1407 = vst.msk [vmem:[#allocation4 + $0x54] sm:$0xf] %vm1385, %v1332
        %1408 = vst.msk [vmem:[#allocation4 + $0x58] sm:$0xf] %vm1385, %v1334
        %1409 = vst.msk [vmem:[#allocation4 + $0x5c] sm:$0xf] %vm1385, %v1336
        %1410 = vst.msk [vmem:[#allocation4 + $0x60] sm:$0xf] %vm1385, %v1338
        %1411 = vst.msk [vmem:[#allocation4 + $0x64] sm:$0xf] %vm1385, %v1340
        %1412 = vst.msk [vmem:[#allocation4 + $0x68] sm:$0xf] %vm1385, %v1342
        %1413 = vst.msk [vmem:[#allocation4 + $0x6c] sm:$0xf] %vm1385, %v1344
        %1414 = vst.msk [vmem:[#allocation4 + $0x70] sm:$0xf] %vm1385, %v1346
        %1415 = vst.msk [vmem:[#allocation4 + $0x74] sm:$0xf] %vm1385, %v1348
        %1416 = vst.msk [vmem:[#allocation4 + $0x78] sm:$0xf] %vm1385, %v1350
        %1417 = vst.msk [vmem:[#allocation4 + $0x7c] sm:$0xf] %vm1385, %v1352
        %v1418 = vpack.c.bf16 %v528, %v527
        %v1420 = vunpack.c.l.b16 %v1418
        %v1421 = vunpack.c.h.b16 %v1418
        %v1422 = vpack.c.b16 %v1420, %v1420
        %v1423 = vpack.c.b16 %v1421, %v1421
        %1424 = vrot.lane.b32.xlu0 %v599, 12
        %v1425 = vpop.permute.xlu0 %1424
        %1426 = vrot.lane.b32.xlu0 %v600, 12
        %v1427 = vpop.permute.xlu0 %1426
        %1428 = vrot.lane.b32.xlu0 %v601, 12
        %v1429 = vpop.permute.xlu0 %1428
        %1430 = vrot.lane.b32.xlu0 %v602, 12
        %v1431 = vpop.permute.xlu0 %1430
        %1432 = vrot.lane.b32.xlu0 %v603, 12
        %v1433 = vpop.permute.xlu0 %1432
        %1434 = vrot.lane.b32.xlu0 %v604, 12
        %v1435 = vpop.permute.xlu0 %1434
        %1436 = vrot.lane.b32.xlu0 %v605, 12
        %v1437 = vpop.permute.xlu0 %1436
        %1438 = vrot.lane.b32.xlu0 %v606, 12
        %v1439 = vpop.permute.xlu0 %1438
        %1440 = vrot.lane.b32.xlu0 %v607, 12
        %v1441 = vpop.permute.xlu0 %1440
        %1442 = vrot.lane.b32.xlu0 %v608, 12
        %v1443 = vpop.permute.xlu0 %1442
        %1444 = vrot.lane.b32.xlu0 %v609, 12
        %v1445 = vpop.permute.xlu0 %1444
        %1446 = vrot.lane.b32.xlu0 %v610, 12
        %v1447 = vpop.permute.xlu0 %1446
        %1448 = vrot.lane.b32.xlu0 %v611, 12
        %v1449 = vpop.permute.xlu0 %1448
        %1450 = vrot.lane.b32.xlu0 %v612, 12
        %v1451 = vpop.permute.xlu0 %1450
        %1452 = vrot.lane.b32.xlu0 %v613, 12
        %v1453 = vpop.permute.xlu0 %1452
        %1454 = vrot.lane.b32.xlu0 %v614, 12
        %v1455 = vpop.permute.xlu0 %1454
        %1456 = vrot.lane.b32.xlu0 %v615, 12
        %v1457 = vpop.permute.xlu0 %1456
        %1458 = vrot.lane.b32.xlu0 %v616, 12
        %v1459 = vpop.permute.xlu0 %1458
        %1460 = vrot.lane.b32.xlu0 %v617, 12
        %v1461 = vpop.permute.xlu0 %1460
        %1462 = vrot.lane.b32.xlu0 %v618, 12
        %v1463 = vpop.permute.xlu0 %1462
        %1464 = vrot.lane.b32.xlu0 %v619, 12
        %v1465 = vpop.permute.xlu0 %1464
        %1466 = vrot.lane.b32.xlu0 %v620, 12
        %v1467 = vpop.permute.xlu0 %1466
        %1468 = vrot.lane.b32.xlu0 %v621, 12
        %v1469 = vpop.permute.xlu0 %1468
        %1470 = vrot.lane.b32.xlu0 %v622, 12
        %v1471 = vpop.permute.xlu0 %1470
        %1472 = vrot.lane.b32.xlu0 %v623, 12
        %v1473 = vpop.permute.xlu0 %1472
        %1474 = vrot.lane.b32.xlu0 %v624, 12
        %v1475 = vpop.permute.xlu0 %1474
        %1476 = vrot.lane.b32.xlu0 %v625, 12
        %v1477 = vpop.permute.xlu0 %1476
        %1478 = vrot.lane.b32.xlu0 %v626, 12
        %v1479 = vpop.permute.xlu0 %1478
        %1480 = vrot.lane.b32.xlu0 %v627, 12
        %v1481 = vpop.permute.xlu0 %1480
        %1482 = vrot.lane.b32.xlu0 %v628, 12
        %v1483 = vpop.permute.xlu0 %1482
        %1484 = vrot.lane.b32.xlu0 %v1422, 12
        %v1485 = vpop.permute.xlu0 %1484
        %1486 = vrot.lane.b32.xlu0 %v1423, 12
        %v1487 = vpop.permute.xlu0 %1486
        %vm1520 = vcmask 126048
        %1521 = vst.msk [vmem:[#allocation4] sm:$0xf] %vm1520, %v1425
        %1522 = vst.msk [vmem:[#allocation4 + $0x4] sm:$0xf] %vm1520, %v1427
        %1523 = vst.msk [vmem:[#allocation4 + $0x8] sm:$0xf] %vm1520, %v1429
        %1524 = vst.msk [vmem:[#allocation4 + $0xc] sm:$0xf] %vm1520, %v1431
        %1525 = vst.msk [vmem:[#allocation4 + $0x10] sm:$0xf] %vm1520, %v1433
        %1526 = vst.msk [vmem:[#allocation4 + $0x14] sm:$0xf] %vm1520, %v1435
        %1527 = vst.msk [vmem:[#allocation4 + $0x18] sm:$0xf] %vm1520, %v1437
        %1528 = vst.msk [vmem:[#allocation4 + $0x1c] sm:$0xf] %vm1520, %v1439
        %1529 = vst.msk [vmem:[#allocation4 + $0x20] sm:$0xf] %vm1520, %v1441
        %1530 = vst.msk [vmem:[#allocation4 + $0x24] sm:$0xf] %vm1520, %v1443
        %1531 = vst.msk [vmem:[#allocation4 + $0x28] sm:$0xf] %vm1520, %v1445
        %1532 = vst.msk [vmem:[#allocation4 + $0x2c] sm:$0xf] %vm1520, %v1447
        %1533 = vst.msk [vmem:[#allocation4 + $0x30] sm:$0xf] %vm1520, %v1449
        %1534 = vst.msk [vmem:[#allocation4 + $0x34] sm:$0xf] %vm1520, %v1451
        %1535 = vst.msk [vmem:[#allocation4 + $0x38] sm:$0xf] %vm1520, %v1453
        %1536 = vst.msk [vmem:[#allocation4 + $0x3c] sm:$0xf] %vm1520, %v1455
        %1537 = vst.msk [vmem:[#allocation4 + $0x40] sm:$0xf] %vm1520, %v1457
        %1538 = vst.msk [vmem:[#allocation4 + $0x44] sm:$0xf] %vm1520, %v1459
        %1539 = vst.msk [vmem:[#allocation4 + $0x48] sm:$0xf] %vm1520, %v1461
        %1540 = vst.msk [vmem:[#allocation4 + $0x4c] sm:$0xf] %vm1520, %v1463
        %1541 = vst.msk [vmem:[#allocation4 + $0x50] sm:$0xf] %vm1520, %v1465
        %1542 = vst.msk [vmem:[#allocation4 + $0x54] sm:$0xf] %vm1520, %v1467
        %1543 = vst.msk [vmem:[#allocation4 + $0x58] sm:$0xf] %vm1520, %v1469
        %1544 = vst.msk [vmem:[#allocation4 + $0x5c] sm:$0xf] %vm1520, %v1471
        %1545 = vst.msk [vmem:[#allocation4 + $0x60] sm:$0xf] %vm1520, %v1473
        %1546 = vst.msk [vmem:[#allocation4 + $0x64] sm:$0xf] %vm1520, %v1475
        %1547 = vst.msk [vmem:[#allocation4 + $0x68] sm:$0xf] %vm1520, %v1477
        %1548 = vst.msk [vmem:[#allocation4 + $0x6c] sm:$0xf] %vm1520, %v1479
        %1549 = vst.msk [vmem:[#allocation4 + $0x70] sm:$0xf] %vm1520, %v1481
        %1550 = vst.msk [vmem:[#allocation4 + $0x74] sm:$0xf] %vm1520, %v1483
        %1551 = vst.msk [vmem:[#allocation4 + $0x78] sm:$0xf] %vm1520, %v1485
        %1552 = vst.msk [vmem:[#allocation4 + $0x7c] sm:$0xf] %vm1520, %v1487
        %v1556 = vrot.slane %v527, 1
        %v1557 = vrot.slane %v528, 1
        %v1558 = vsel %vm742, %v1556, %v1557
        %v1559 = vrot.slane %v529, 1
        %v1560 = vsel %vm742, %v1557, %v1559
        %v1563 = vpack.c.bf16 %v1560, %v1558
        %v1565 = vunpack.c.l.b16 %v1563
        %v1566 = vunpack.c.h.b16 %v1563
        %v1567 = vpack.c.b16 %v1565, %v1565
        %v1568 = vpack.c.b16 %v1566, %v1566
        %1569 = vrot.lane.b32.xlu0 %v921, 16
        %v1570 = vpop.permute.xlu0 %1569
        %1571 = vrot.lane.b32.xlu0 %v922, 16
        %v1572 = vpop.permute.xlu0 %1571
        %1573 = vrot.lane.b32.xlu0 %v923, 16
        %v1574 = vpop.permute.xlu0 %1573
        %1575 = vrot.lane.b32.xlu0 %v924, 16
        %v1576 = vpop.permute.xlu0 %1575
        %1577 = vrot.lane.b32.xlu0 %v925, 16
        %v1578 = vpop.permute.xlu0 %1577
        %1579 = vrot.lane.b32.xlu0 %v926, 16
        %v1580 = vpop.permute.xlu0 %1579
        %1581 = vrot.lane.b32.xlu0 %v927, 16
        %v1582 = vpop.permute.xlu0 %1581
        %1583 = vrot.lane.b32.xlu0 %v928, 16
        %v1584 = vpop.permute.xlu0 %1583
        %1585 = vrot.lane.b32.xlu0 %v929, 16
        %v1586 = vpop.permute.xlu0 %1585
        %1587 = vrot.lane.b32.xlu0 %v930, 16
        %v1588 = vpop.permute.xlu0 %1587
        %1589 = vrot.lane.b32.xlu0 %v931, 16
        %v1590 = vpop.permute.xlu0 %1589
        %1591 = vrot.lane.b32.xlu0 %v932, 16
        %v1592 = vpop.permute.xlu0 %1591
        %1593 = vrot.lane.b32.xlu0 %v933, 16
        %v1594 = vpop.permute.xlu0 %1593
        %1595 = vrot.lane.b32.xlu0 %v934, 16
        %v1596 = vpop.permute.xlu0 %1595
        %1597 = vrot.lane.b32.xlu0 %v935, 16
        %v1598 = vpop.permute.xlu0 %1597
        %1599 = vrot.lane.b32.xlu0 %v936, 16
        %v1600 = vpop.permute.xlu0 %1599
        %1601 = vrot.lane.b32.xlu0 %v937, 16
        %v1602 = vpop.permute.xlu0 %1601
        %1603 = vrot.lane.b32.xlu0 %v938, 16
        %v1604 = vpop.permute.xlu0 %1603
        %1605 = vrot.lane.b32.xlu0 %v939, 16
        %v1606 = vpop.permute.xlu0 %1605
        %1607 = vrot.lane.b32.xlu0 %v940, 16
        %v1608 = vpop.permute.xlu0 %1607
        %1609 = vrot.lane.b32.xlu0 %v941, 16
        %v1610 = vpop.permute.xlu0 %1609
        %1611 = vrot.lane.b32.xlu0 %v942, 16
        %v1612 = vpop.permute.xlu0 %1611
        %1613 = vrot.lane.b32.xlu0 %v943, 16
        %v1614 = vpop.permute.xlu0 %1613
        %1615 = vrot.lane.b32.xlu0 %v944, 16
        %v1616 = vpop.permute.xlu0 %1615
        %1617 = vrot.lane.b32.xlu0 %v945, 16
        %v1618 = vpop.permute.xlu0 %1617
        %1619 = vrot.lane.b32.xlu0 %v946, 16
        %v1620 = vpop.permute.xlu0 %1619
        %1621 = vrot.lane.b32.xlu0 %v947, 16
        %v1622 = vpop.permute.xlu0 %1621
        %1623 = vrot.lane.b32.xlu0 %v948, 16
        %v1624 = vpop.permute.xlu0 %1623
        %1625 = vrot.lane.b32.xlu0 %v949, 16
        %v1626 = vpop.permute.xlu0 %1625
        %1627 = vrot.lane.b32.xlu0 %v950, 16
        %v1628 = vpop.permute.xlu0 %1627
        %1629 = vrot.lane.b32.xlu0 %v1567, 16
        %v1630 = vpop.permute.xlu0 %1629
        %1631 = vrot.lane.b32.xlu0 %v1568, 16
        %v1632 = vpop.permute.xlu0 %1631
        %vm1665 = vcmask 158848
        %1666 = vst.msk [vmem:[#allocation4] sm:$0xf] %vm1665, %v1570
        %1667 = vst.msk [vmem:[#allocation4 + $0x4] sm:$0xf] %vm1665, %v1572
        %1668 = vst.msk [vmem:[#allocation4 + $0x8] sm:$0xf] %vm1665, %v1574
        %1669 = vst.msk [vmem:[#allocation4 + $0xc] sm:$0xf] %vm1665, %v1576
        %1670 = vst.msk [vmem:[#allocation4 + $0x10] sm:$0xf] %vm1665, %v1578
        %1671 = vst.msk [vmem:[#allocation4 + $0x14] sm:$0xf] %vm1665, %v1580
        %1672 = vst.msk [vmem:[#allocation4 + $0x18] sm:$0xf] %vm1665, %v1582
        %1673 = vst.msk [vmem:[#allocation4 + $0x1c] sm:$0xf] %vm1665, %v1584
        %1674 = vst.msk [vmem:[#allocation4 + $0x20] sm:$0xf] %vm1665, %v1586
        %1675 = vst.msk [vmem:[#allocation4 + $0x24] sm:$0xf] %vm1665, %v1588
        %1676 = vst.msk [vmem:[#allocation4 + $0x28] sm:$0xf] %vm1665, %v1590
        %1677 = vst.msk [vmem:[#allocation4 + $0x2c] sm:$0xf] %vm1665, %v1592
        %1678 = vst.msk [vmem:[#allocation4 + $0x30] sm:$0xf] %vm1665, %v1594
        %1679 = vst.msk [vmem:[#allocation4 + $0x34] sm:$0xf] %vm1665, %v1596
        %1680 = vst.msk [vmem:[#allocation4 + $0x38] sm:$0xf] %vm1665, %v1598
        %1681 = vst.msk [vmem:[#allocation4 + $0x3c] sm:$0xf] %vm1665, %v1600
        %1682 = vst.msk [vmem:[#allocation4 + $0x40] sm:$0xf] %vm1665, %v1602
        %1683 = vst.msk [vmem:[#allocation4 + $0x44] sm:$0xf] %vm1665, %v1604
        %1684 = vst.msk [vmem:[#allocation4 + $0x48] sm:$0xf] %vm1665, %v1606
        %1685 = vst.msk [vmem:[#allocation4 + $0x4c] sm:$0xf] %vm1665, %v1608
        %1686 = vst.msk [vmem:[#allocation4 + $0x50] sm:$0xf] %vm1665, %v1610
        %1687 = vst.msk [vmem:[#allocation4 + $0x54] sm:$0xf] %vm1665, %v1612
        %1688 = vst.msk [vmem:[#allocation4 + $0x58] sm:$0xf] %vm1665, %v1614
        %1689 = vst.msk [vmem:[#allocation4 + $0x5c] sm:$0xf] %vm1665, %v1616
        %1690 = vst.msk [vmem:[#allocation4 + $0x60] sm:$0xf] %vm1665, %v1618
        %1691 = vst.msk [vmem:[#allocation4 + $0x64] sm:$0xf] %vm1665, %v1620
        %1692 = vst.msk [vmem:[#allocation4 + $0x68] sm:$0xf] %vm1665, %v1622
        %1693 = vst.msk [vmem:[#allocation4 + $0x6c] sm:$0xf] %vm1665, %v1624
        %1694 = vst.msk [vmem:[#allocation4 + $0x70] sm:$0xf] %vm1665, %v1626
        %1695 = vst.msk [vmem:[#allocation4 + $0x74] sm:$0xf] %vm1665, %v1628
        %1696 = vst.msk [vmem:[#allocation4 + $0x78] sm:$0xf] %vm1665, %v1630
        %1697 = vst.msk [vmem:[#allocation4 + $0x7c] sm:$0xf] %vm1665, %v1632
        %v1698 = vrot.slane %v527, 2
        %v1699 = vrot.slane %v528, 2
        %v1700 = vsel %vm1080, %v1698, %v1699
        %v1701 = vrot.slane %v529, 2
        %v1702 = vsel %vm1080, %v1699, %v1701
        %v1705 = vpack.c.bf16 %v1702, %v1700
        %v1707 = vunpack.c.l.b16 %v1705
        %v1708 = vunpack.c.h.b16 %v1705
        %v1709 = vpack.c.b16 %v1707, %v1707
        %v1710 = vpack.c.b16 %v1708, %v1708
        %1711 = vrot.lane.b32.xlu0 %v1259, 20
        %v1712 = vpop.permute.xlu0 %1711
        %1713 = vrot.lane.b32.xlu0 %v1260, 20
        %v1714 = vpop.permute.xlu0 %1713
        %1715 = vrot.lane.b32.xlu0 %v1261, 20
        %v1716 = vpop.permute.xlu0 %1715
        %1717 = vrot.lane.b32.xlu0 %v1262, 20
        %v1718 = vpop.permute.xlu0 %1717
        %1719 = vrot.lane.b32.xlu0 %v1263, 20
        %v1720 = vpop.permute.xlu0 %1719
        %1721 = vrot.lane.b32.xlu0 %v1264, 20
        %v1722 = vpop.permute.xlu0 %1721
        %1723 = vrot.lane.b32.xlu0 %v1265, 20
        %v1724 = vpop.permute.xlu0 %1723
        %1725 = vrot.lane.b32.xlu0 %v1266, 20
        %v1726 = vpop.permute.xlu0 %1725
        %1727 = vrot.lane.b32.xlu0 %v1267, 20
        %v1728 = vpop.permute.xlu0 %1727
        %1729 = vrot.lane.b32.xlu0 %v1268, 20
        %v1730 = vpop.permute.xlu0 %1729
        %1731 = vrot.lane.b32.xlu0 %v1269, 20
        %v1732 = vpop.permute.xlu0 %1731
        %1733 = vrot.lane.b32.xlu0 %v1270, 20
        %v1734 = vpop.permute.xlu0 %1733
        %1735 = vrot.lane.b32.xlu0 %v1271, 20
        %v1736 = vpop.permute.xlu0 %1735
        %1737 = vrot.lane.b32.xlu0 %v1272, 20
        %v1738 = vpop.permute.xlu0 %1737
        %1739 = vrot.lane.b32.xlu0 %v1273, 20
        %v1740 = vpop.permute.xlu0 %1739
        %1741 = vrot.lane.b32.xlu0 %v1274, 20
        %v1742 = vpop.permute.xlu0 %1741
        %1743 = vrot.lane.b32.xlu0 %v1275, 20
        %v1744 = vpop.permute.xlu0 %1743
        %1745 = vrot.lane.b32.xlu0 %v1276, 20
        %v1746 = vpop.permute.xlu0 %1745
        %1747 = vrot.lane.b32.xlu0 %v1277, 20
        %v1748 = vpop.permute.xlu0 %1747
        %1749 = vrot.lane.b32.xlu0 %v1278, 20
        %v1750 = vpop.permute.xlu0 %1749
        %1751 = vrot.lane.b32.xlu0 %v1279, 20
        %v1752 = vpop.permute.xlu0 %1751
        %1753 = vrot.lane.b32.xlu0 %v1280, 20
        %v1754 = vpop.permute.xlu0 %1753
        %1755 = vrot.lane.b32.xlu0 %v1281, 20
        %v1756 = vpop.permute.xlu0 %1755
        %1757 = vrot.lane.b32.xlu0 %v1282, 20
        %v1758 = vpop.permute.xlu0 %1757
        %1759 = vrot.lane.b32.xlu0 %v1283, 20
        %v1760 = vpop.permute.xlu0 %1759
        %1761 = vrot.lane.b32.xlu0 %v1284, 20
        %v1762 = vpop.permute.xlu0 %1761
        %1763 = vrot.lane.b32.xlu0 %v1285, 20
        %v1764 = vpop.permute.xlu0 %1763
        %1765 = vrot.lane.b32.xlu0 %v1286, 20
        %v1766 = vpop.permute.xlu0 %1765
        %1767 = vrot.lane.b32.xlu0 %v1287, 20
        %v1768 = vpop.permute.xlu0 %1767
        %1769 = vrot.lane.b32.xlu0 %v1288, 20
        %v1770 = vpop.permute.xlu0 %1769
        %1771 = vrot.lane.b32.xlu0 %v1709, 20
        %v1772 = vpop.permute.xlu0 %1771
        %1773 = vrot.lane.b32.xlu0 %v1710, 20
        %v1774 = vpop.permute.xlu0 %1773
        %vm1807 = vcmask 191648
        %1808 = vst.msk [vmem:[#allocation4] sm:$0xf] %vm1807, %v1712
        %1809 = vst.msk [vmem:[#allocation4 + $0x4] sm:$0xf] %vm1807, %v1714
        %1810 = vst.msk [vmem:[#allocation4 + $0x8] sm:$0xf] %vm1807, %v1716
        %1811 = vst.msk [vmem:[#allocation4 + $0xc] sm:$0xf] %vm1807, %v1718
        %1812 = vst.msk [vmem:[#allocation4 + $0x10] sm:$0xf] %vm1807, %v1720
        %1813 = vst.msk [vmem:[#allocation4 + $0x14] sm:$0xf] %vm1807, %v1722
        %1814 = vst.msk [vmem:[#allocation4 + $0x18] sm:$0xf] %vm1807, %v1724
        %1815 = vst.msk [vmem:[#allocation4 + $0x1c] sm:$0xf] %vm1807, %v1726
        %1816 = vst.msk [vmem:[#allocation4 + $0x20] sm:$0xf] %vm1807, %v1728
        %1817 = vst.msk [vmem:[#allocation4 + $0x24] sm:$0xf] %vm1807, %v1730
        %1818 = vst.msk [vmem:[#allocation4 + $0x28] sm:$0xf] %vm1807, %v1732
        %1819 = vst.msk [vmem:[#allocation4 + $0x2c] sm:$0xf] %vm1807, %v1734
        %1820 = vst.msk [vmem:[#allocation4 + $0x30] sm:$0xf] %vm1807, %v1736
        %1821 = vst.msk [vmem:[#allocation4 + $0x34] sm:$0xf] %vm1807, %v1738
        %1822 = vst.msk [vmem:[#allocation4 + $0x38] sm:$0xf] %vm1807, %v1740
        %1823 = vst.msk [vmem:[#allocation4 + $0x3c] sm:$0xf] %vm1807, %v1742
        %1824 = vst.msk [vmem:[#allocation4 + $0x40] sm:$0xf] %vm1807, %v1744
        %1825 = vst.msk [vmem:[#allocation4 + $0x44] sm:$0xf] %vm1807, %v1746
        %1826 = vst.msk [vmem:[#allocation4 + $0x48] sm:$0xf] %vm1807, %v1748
        %1827 = vst.msk [vmem:[#allocation4 + $0x4c] sm:$0xf] %vm1807, %v1750
        %1828 = vst.msk [vmem:[#allocation4 + $0x50] sm:$0xf] %vm1807, %v1752
        %1829 = vst.msk [vmem:[#allocation4 + $0x54] sm:$0xf] %vm1807, %v1754
        %1830 = vst.msk [vmem:[#allocation4 + $0x58] sm:$0xf] %vm1807, %v1756
        %1831 = vst.msk [vmem:[#allocation4 + $0x5c] sm:$0xf] %vm1807, %v1758
        %1832 = vst.msk [vmem:[#allocation4 + $0x60] sm:$0xf] %vm1807, %v1760
        %1833 = vst.msk [vmem:[#allocation4 + $0x64] sm:$0xf] %vm1807, %v1762
        %1834 = vst.msk [vmem:[#allocation4 + $0x68] sm:$0xf] %vm1807, %v1764
        %1835 = vst.msk [vmem:[#allocation4 + $0x6c] sm:$0xf] %vm1807, %v1766
        %1836 = vst.msk [vmem:[#allocation4 + $0x70] sm:$0xf] %vm1807, %v1768
        %1837 = vst.msk [vmem:[#allocation4 + $0x74] sm:$0xf] %vm1807, %v1770
        %1838 = vst.msk [vmem:[#allocation4 + $0x78] sm:$0xf] %vm1807, %v1772
        %1839 = vst.msk [vmem:[#allocation4 + $0x7c] sm:$0xf] %vm1807, %v1774
        %v1840 = vpack.c.bf16 %v531, %v530
        %v1842 = vunpack.c.l.b16 %v1840
        %v1843 = vunpack.c.h.b16 %v1840
        %v1844 = vpack.c.b16 %v1842, %v1842
        %v1845 = vpack.c.b16 %v1843, %v1843
        %1846 = vrot.lane.b32.xlu0 %v601, 24
        %v1847 = vpop.permute.xlu0 %1846
        %1848 = vrot.lane.b32.xlu0 %v602, 24
        %v1849 = vpop.permute.xlu0 %1848
        %1850 = vrot.lane.b32.xlu0 %v603, 24
        %v1851 = vpop.permute.xlu0 %1850
        %1852 = vrot.lane.b32.xlu0 %v604, 24
        %v1853 = vpop.permute.xlu0 %1852
        %1854 = vrot.lane.b32.xlu0 %v605, 24
        %v1855 = vpop.permute.xlu0 %1854
        %1856 = vrot.lane.b32.xlu0 %v606, 24
        %v1857 = vpop.permute.xlu0 %1856
        %1858 = vrot.lane.b32.xlu0 %v607, 24
        %v1859 = vpop.permute.xlu0 %1858
        %1860 = vrot.lane.b32.xlu0 %v608, 24
        %v1861 = vpop.permute.xlu0 %1860
        %1862 = vrot.lane.b32.xlu0 %v609, 24
        %v1863 = vpop.permute.xlu0 %1862
        %1864 = vrot.lane.b32.xlu0 %v610, 24
        %v1865 = vpop.permute.xlu0 %1864
        %1866 = vrot.lane.b32.xlu0 %v611, 24
        %v1867 = vpop.permute.xlu0 %1866
        %1868 = vrot.lane.b32.xlu0 %v612, 24
        %v1869 = vpop.permute.xlu0 %1868
        %1870 = vrot.lane.b32.xlu0 %v613, 24
        %v1871 = vpop.permute.xlu0 %1870
        %1872 = vrot.lane.b32.xlu0 %v614, 24
        %v1873 = vpop.permute.xlu0 %1872
        %1874 = vrot.lane.b32.xlu0 %v615, 24
        %v1875 = vpop.permute.xlu0 %1874
        %1876 = vrot.lane.b32.xlu0 %v616, 24
        %v1877 = vpop.permute.xlu0 %1876
        %1878 = vrot.lane.b32.xlu0 %v617, 24
        %v1879 = vpop.permute.xlu0 %1878
        %1880 = vrot.lane.b32.xlu0 %v618, 24
        %v1881 = vpop.permute.xlu0 %1880
        %1882 = vrot.lane.b32.xlu0 %v619, 24
        %v1883 = vpop.permute.xlu0 %1882
        %1884 = vrot.lane.b32.xlu0 %v620, 24
        %v1885 = vpop.permute.xlu0 %1884
        %1886 = vrot.lane.b32.xlu0 %v621, 24
        %v1887 = vpop.permute.xlu0 %1886
        %1888 = vrot.lane.b32.xlu0 %v622, 24
        %v1889 = vpop.permute.xlu0 %1888
        %1890 = vrot.lane.b32.xlu0 %v623, 24
        %v1891 = vpop.permute.xlu0 %1890
        %1892 = vrot.lane.b32.xlu0 %v624, 24
        %v1893 = vpop.permute.xlu0 %1892
        %1894 = vrot.lane.b32.xlu0 %v625, 24
        %v1895 = vpop.permute.xlu0 %1894
        %1896 = vrot.lane.b32.xlu0 %v626, 24
        %v1897 = vpop.permute.xlu0 %1896
        %1898 = vrot.lane.b32.xlu0 %v627, 24
        %v1899 = vpop.permute.xlu0 %1898
        %1900 = vrot.lane.b32.xlu0 %v628, 24
        %v1901 = vpop.permute.xlu0 %1900
        %1902 = vrot.lane.b32.xlu0 %v1422, 24
        %v1903 = vpop.permute.xlu0 %1902
        %1904 = vrot.lane.b32.xlu0 %v1423, 24
        %v1905 = vpop.permute.xlu0 %1904
        %1906 = vrot.lane.b32.xlu0 %v1844, 24
        %v1907 = vpop.permute.xlu0 %1906
        %1908 = vrot.lane.b32.xlu0 %v1845, 24
        %v1909 = vpop.permute.xlu0 %1908
        %vm1942 = vcmask 224448
        %1943 = vst.msk [vmem:[#allocation4] sm:$0xf] %vm1942, %v1847
        %1944 = vst.msk [vmem:[#allocation4 + $0x4] sm:$0xf] %vm1942, %v1849
        %1945 = vst.msk [vmem:[#allocation4 + $0x8] sm:$0xf] %vm1942, %v1851
        %1946 = vst.msk [vmem:[#allocation4 + $0xc] sm:$0xf] %vm1942, %v1853
        %1947 = vst.msk [vmem:[#allocation4 + $0x10] sm:$0xf] %vm1942, %v1855
        %1948 = vst.msk [vmem:[#allocation4 + $0x14] sm:$0xf] %vm1942, %v1857
        %1949 = vst.msk [vmem:[#allocation4 + $0x18] sm:$0xf] %vm1942, %v1859
        %1950 = vst.msk [vmem:[#allocation4 + $0x1c] sm:$0xf] %vm1942, %v1861
        %1951 = vst.msk [vmem:[#allocation4 + $0x20] sm:$0xf] %vm1942, %v1863
        %1952 = vst.msk [vmem:[#allocation4 + $0x24] sm:$0xf] %vm1942, %v1865
        %1953 = vst.msk [vmem:[#allocation4 + $0x28] sm:$0xf] %vm1942, %v1867
        %1954 = vst.msk [vmem:[#allocation4 + $0x2c] sm:$0xf] %vm1942, %v1869
        %1955 = vst.msk [vmem:[#allocation4 + $0x30] sm:$0xf] %vm1942, %v1871
        %1956 = vst.msk [vmem:[#allocation4 + $0x34] sm:$0xf] %vm1942, %v1873
        %1957 = vst.msk [vmem:[#allocation4 + $0x38] sm:$0xf] %vm1942, %v1875
        %1958 = vst.msk [vmem:[#allocation4 + $0x3c] sm:$0xf] %vm1942, %v1877
        %1959 = vst.msk [vmem:[#allocation4 + $0x40] sm:$0xf] %vm1942, %v1879
        %1960 = vst.msk [vmem:[#allocation4 + $0x44] sm:$0xf] %vm1942, %v1881
        %1961 = vst.msk [vmem:[#allocation4 + $0x48] sm:$0xf] %vm1942, %v1883
        %1962 = vst.msk [vmem:[#allocation4 + $0x4c] sm:$0xf] %vm1942, %v1885
        %1963 = vst.msk [vmem:[#allocation4 + $0x50] sm:$0xf] %vm1942, %v1887
        %1964 = vst.msk [vmem:[#allocation4 + $0x54] sm:$0xf] %vm1942, %v1889
        %1965 = vst.msk [vmem:[#allocation4 + $0x58] sm:$0xf] %vm1942, %v1891
        %1966 = vst.msk [vmem:[#allocation4 + $0x5c] sm:$0xf] %vm1942, %v1893
        %1967 = vst.msk [vmem:[#allocation4 + $0x60] sm:$0xf] %vm1942, %v1895
        %1968 = vst.msk [vmem:[#allocation4 + $0x64] sm:$0xf] %vm1942, %v1897
        %1969 = vst.msk [vmem:[#allocation4 + $0x68] sm:$0xf] %vm1942, %v1899
        %1970 = vst.msk [vmem:[#allocation4 + $0x6c] sm:$0xf] %vm1942, %v1901
        %1971 = vst.msk [vmem:[#allocation4 + $0x70] sm:$0xf] %vm1942, %v1903
        %1972 = vst.msk [vmem:[#allocation4 + $0x74] sm:$0xf] %vm1942, %v1905
        %1973 = vst.msk [vmem:[#allocation4 + $0x78] sm:$0xf] %vm1942, %v1907
        %1974 = vst.msk [vmem:[#allocation4 + $0x7c] sm:$0xf] %vm1942, %v1909
        %v1978 = vrot.slane %v530, 1
        %v1979 = vrot.slane %v531, 1
        %v1980 = vsel %vm742, %v1978, %v1979
        %v1981 = vrot.slane %v532, 1
        %v1982 = vsel %vm742, %v1979, %v1981
        %v1985 = vpack.c.bf16 %v1982, %v1980
        %v1987 = vunpack.c.l.b16 %v1985
        %v1988 = vunpack.c.h.b16 %v1985
        %v1989 = vpack.c.b16 %v1987, %v1987
        %v1990 = vpack.c.b16 %v1988, %v1988
        %1991 = vrot.lane.b32.xlu0 %v923, 28
        %v1992 = vpop.permute.xlu0 %1991
        %1993 = vrot.lane.b32.xlu0 %v924, 28
        %v1994 = vpop.permute.xlu0 %1993
        %1995 = vrot.lane.b32.xlu0 %v925, 28
        %v1996 = vpop.permute.xlu0 %1995
        %1997 = vrot.lane.b32.xlu0 %v926, 28
        %v1998 = vpop.permute.xlu0 %1997
        %1999 = vrot.lane.b32.xlu0 %v927, 28
        %v2000 = vpop.permute.xlu0 %1999
        %2001 = vrot.lane.b32.xlu0 %v928, 28
        %v2002 = vpop.permute.xlu0 %2001
        %2003 = vrot.lane.b32.xlu0 %v929, 28
        %v2004 = vpop.permute.xlu0 %2003
        %2005 = vrot.lane.b32.xlu0 %v930, 28
        %v2006 = vpop.permute.xlu0 %2005
        %2007 = vrot.lane.b32.xlu0 %v931, 28
        %v2008 = vpop.permute.xlu0 %2007
        %2009 = vrot.lane.b32.xlu0 %v932, 28
        %v2010 = vpop.permute.xlu0 %2009
        %2011 = vrot.lane.b32.xlu0 %v933, 28
        %v2012 = vpop.permute.xlu0 %2011
        %2013 = vrot.lane.b32.xlu0 %v934, 28
        %v2014 = vpop.permute.xlu0 %2013
        %2015 = vrot.lane.b32.xlu0 %v935, 28
        %v2016 = vpop.permute.xlu0 %2015
        %2017 = vrot.lane.b32.xlu0 %v936, 28
        %v2018 = vpop.permute.xlu0 %2017
        %2019 = vrot.lane.b32.xlu0 %v937, 28
        %v2020 = vpop.permute.xlu0 %2019
        %2021 = vrot.lane.b32.xlu0 %v938, 28
        %v2022 = vpop.permute.xlu0 %2021
        %2023 = vrot.lane.b32.xlu0 %v939, 28
        %v2024 = vpop.permute.xlu0 %2023
        %2025 = vrot.lane.b32.xlu0 %v940, 28
        %v2026 = vpop.permute.xlu0 %2025
        %2027 = vrot.lane.b32.xlu0 %v941, 28
        %v2028 = vpop.permute.xlu0 %2027
        %2029 = vrot.lane.b32.xlu0 %v942, 28
        %v2030 = vpop.permute.xlu0 %2029
        %2031 = vrot.lane.b32.xlu0 %v943, 28
        %v2032 = vpop.permute.xlu0 %2031
        %2033 = vrot.lane.b32.xlu0 %v944, 28
        %v2034 = vpop.permute.xlu0 %2033
        %2035 = vrot.lane.b32.xlu0 %v945, 28
        %v2036 = vpop.permute.xlu0 %2035
        %2037 = vrot.lane.b32.xlu0 %v946, 28
        %v2038 = vpop.permute.xlu0 %2037
        %2039 = vrot.lane.b32.xlu0 %v947, 28
        %v2040 = vpop.permute.xlu0 %2039
        %2041 = vrot.lane.b32.xlu0 %v948, 28
        %v2042 = vpop.permute.xlu0 %2041
        %2043 = vrot.lane.b32.xlu0 %v949, 28
        %v2044 = vpop.permute.xlu0 %2043
        %2045 = vrot.lane.b32.xlu0 %v950, 28
        %v2046 = vpop.permute.xlu0 %2045
        %2047 = vrot.lane.b32.xlu0 %v1567, 28
        %v2048 = vpop.permute.xlu0 %2047
        %2049 = vrot.lane.b32.xlu0 %v1568, 28
        %v2050 = vpop.permute.xlu0 %2049
        %2051 = vrot.lane.b32.xlu0 %v1989, 28
        %v2052 = vpop.permute.xlu0 %2051
        %2053 = vrot.lane.b32.xlu0 %v1990, 28
        %v2054 = vpop.permute.xlu0 %2053
        %vm2087 = vcmask 257248
        %2088 = vst.msk [vmem:[#allocation4] sm:$0xf] %vm2087, %v1992
        %2089 = vst.msk [vmem:[#allocation4 + $0x4] sm:$0xf] %vm2087, %v1994
        %2090 = vst.msk [vmem:[#allocation4 + $0x8] sm:$0xf] %vm2087, %v1996
        %2091 = vst.msk [vmem:[#allocation4 + $0xc] sm:$0xf] %vm2087, %v1998
        %2092 = vst.msk [vmem:[#allocation4 + $0x10] sm:$0xf] %vm2087, %v2000
        %2093 = vst.msk [vmem:[#allocation4 + $0x14] sm:$0xf] %vm2087, %v2002
        %2094 = vst.msk [vmem:[#allocation4 + $0x18] sm:$0xf] %vm2087, %v2004
        %2095 = vst.msk [vmem:[#allocation4 + $0x1c] sm:$0xf] %vm2087, %v2006
        %2096 = vst.msk [vmem:[#allocation4 + $0x20] sm:$0xf] %vm2087, %v2008
        %2097 = vst.msk [vmem:[#allocation4 + $0x24] sm:$0xf] %vm2087, %v2010
        %2098 = vst.msk [vmem:[#allocation4 + $0x28] sm:$0xf] %vm2087, %v2012
        %2099 = vst.msk [vmem:[#allocation4 + $0x2c] sm:$0xf] %vm2087, %v2014
        %2100 = vst.msk [vmem:[#allocation4 + $0x30] sm:$0xf] %vm2087, %v2016
        %2101 = vst.msk [vmem:[#allocation4 + $0x34] sm:$0xf] %vm2087, %v2018
        %2102 = vst.msk [vmem:[#allocation4 + $0x38] sm:$0xf] %vm2087, %v2020
        %2103 = vst.msk [vmem:[#allocation4 + $0x3c] sm:$0xf] %vm2087, %v2022
        %2104 = vst.msk [vmem:[#allocation4 + $0x40] sm:$0xf] %vm2087, %v2024
        %2105 = vst.msk [vmem:[#allocation4 + $0x44] sm:$0xf] %vm2087, %v2026
        %2106 = vst.msk [vmem:[#allocation4 + $0x48] sm:$0xf] %vm2087, %v2028
        %2107 = vst.msk [vmem:[#allocation4 + $0x4c] sm:$0xf] %vm2087, %v2030
        %2108 = vst.msk [vmem:[#allocation4 + $0x50] sm:$0xf] %vm2087, %v2032
        %2109 = vst.msk [vmem:[#allocation4 + $0x54] sm:$0xf] %vm2087, %v2034
        %2110 = vst.msk [vmem:[#allocation4 + $0x58] sm:$0xf] %vm2087, %v2036
        %2111 = vst.msk [vmem:[#allocation4 + $0x5c] sm:$0xf] %vm2087, %v2038
        %2112 = vst.msk [vmem:[#allocation4 + $0x60] sm:$0xf] %vm2087, %v2040
        %2113 = vst.msk [vmem:[#allocation4 + $0x64] sm:$0xf] %vm2087, %v2042
        %2114 = vst.msk [vmem:[#allocation4 + $0x68] sm:$0xf] %vm2087, %v2044
        %2115 = vst.msk [vmem:[#allocation4 + $0x6c] sm:$0xf] %vm2087, %v2046
        %2116 = vst.msk [vmem:[#allocation4 + $0x70] sm:$0xf] %vm2087, %v2048
        %2117 = vst.msk [vmem:[#allocation4 + $0x74] sm:$0xf] %vm2087, %v2050
        %2118 = vst.msk [vmem:[#allocation4 + $0x78] sm:$0xf] %vm2087, %v2052
        %2119 = vst.msk [vmem:[#allocation4 + $0x7c] sm:$0xf] %vm2087, %v2054
        %v2120 = vrot.slane %v530, 2
        %v2121 = vrot.slane %v531, 2
        %v2122 = vsel %vm1080, %v2120, %v2121
        %v2123 = vrot.slane %v532, 2
        %v2124 = vsel %vm1080, %v2121, %v2123
        %v2127 = vpack.c.bf16 %v2124, %v2122
        %v2129 = vunpack.c.l.b16 %v2127
        %v2130 = vunpack.c.h.b16 %v2127
        %v2131 = vpack.c.b16 %v2129, %v2129
        %v2132 = vpack.c.b16 %v2130, %v2130
        %2133 = vrot.lane.b32.xlu0 %v1261, 32
        %v2134 = vpop.permute.xlu0 %2133
        %2135 = vrot.lane.b32.xlu0 %v1262, 32
        %v2136 = vpop.permute.xlu0 %2135
        %2137 = vrot.lane.b32.xlu0 %v1263, 32
        %v2138 = vpop.permute.xlu0 %2137
        %2139 = vrot.lane.b32.xlu0 %v1264, 32
        %v2140 = vpop.permute.xlu0 %2139
        %2141 = vrot.lane.b32.xlu0 %v1265, 32
        %v2142 = vpop.permute.xlu0 %2141
        %2143 = vrot.lane.b32.xlu0 %v1266, 32
        %v2144 = vpop.permute.xlu0 %2143
        %2145 = vrot.lane.b32.xlu0 %v1267, 32
        %v2146 = vpop.permute.xlu0 %2145
        %2147 = vrot.lane.b32.xlu0 %v1268, 32
        %v2148 = vpop.permute.xlu0 %2147
        %2149 = vrot.lane.b32.xlu0 %v1269, 32
        %v2150 = vpop.permute.xlu0 %2149
        %2151 = vrot.lane.b32.xlu0 %v1270, 32
        %v2152 = vpop.permute.xlu0 %2151
        %2153 = vrot.lane.b32.xlu0 %v1271, 32
        %v2154 = vpop.permute.xlu0 %2153
        %2155 = vrot.lane.b32.xlu0 %v1272, 32
        %v2156 = vpop.permute.xlu0 %2155
        %2157 = vrot.lane.b32.xlu0 %v1273, 32
        %v2158 = vpop.permute.xlu0 %2157
        %2159 = vrot.lane.b32.xlu0 %v1274, 32
        %v2160 = vpop.permute.xlu0 %2159
        %2161 = vrot.lane.b32.xlu0 %v1275, 32
        %v2162 = vpop.permute.xlu0 %2161
        %2163 = vrot.lane.b32.xlu0 %v1276, 32
        %v2164 = vpop.permute.xlu0 %2163
        %2165 = vrot.lane.b32.xlu0 %v1277, 32
        %v2166 = vpop.permute.xlu0 %2165
        %2167 = vrot.lane.b32.xlu0 %v1278, 32
        %v2168 = vpop.permute.xlu0 %2167
        %2169 = vrot.lane.b32.xlu0 %v1279, 32
        %v2170 = vpop.permute.xlu0 %2169
        %2171 = vrot.lane.b32.xlu0 %v1280, 32
        %v2172 = vpop.permute.xlu0 %2171
        %2173 = vrot.lane.b32.xlu0 %v1281, 32
        %v2174 = vpop.permute.xlu0 %2173
        %2175 = vrot.lane.b32.xlu0 %v1282, 32
        %v2176 = vpop.permute.xlu0 %2175
        %2177 = vrot.lane.b32.xlu0 %v1283, 32
        %v2178 = vpop.permute.xlu0 %2177
        %2179 = vrot.lane.b32.xlu0 %v1284, 32
        %v2180 = vpop.permute.xlu0 %2179
        %2181 = vrot.lane.b32.xlu0 %v1285, 32
        %v2182 = vpop.permute.xlu0 %2181
        %2183 = vrot.lane.b32.xlu0 %v1286, 32
        %v2184 = vpop.permute.xlu0 %2183
        %2185 = vrot.lane.b32.xlu0 %v1287, 32
        %v2186 = vpop.permute.xlu0 %2185
        %2187 = vrot.lane.b32.xlu0 %v1288, 32
        %v2188 = vpop.permute.xlu0 %2187
        %2189 = vrot.lane.b32.xlu0 %v1709, 32
        %v2190 = vpop.permute.xlu0 %2189
        %2191 = vrot.lane.b32.xlu0 %v1710, 32
        %v2192 = vpop.permute.xlu0 %2191
        %2193 = vrot.lane.b32.xlu0 %v2131, 32
        %v2194 = vpop.permute.xlu0 %2193
        %2195 = vrot.lane.b32.xlu0 %v2132, 32
        %v2196 = vpop.permute.xlu0 %2195
        %vm2229 = vcmask 290048
        %2230 = vst.msk [vmem:[#allocation4] sm:$0xf] %vm2229, %v2134
        %2231 = vst.msk [vmem:[#allocation4 + $0x4] sm:$0xf] %vm2229, %v2136
        %2232 = vst.msk [vmem:[#allocation4 + $0x8] sm:$0xf] %vm2229, %v2138
        %2233 = vst.msk [vmem:[#allocation4 + $0xc] sm:$0xf] %vm2229, %v2140
        %2234 = vst.msk [vmem:[#allocation4 + $0x10] sm:$0xf] %vm2229, %v2142
        %2235 = vst.msk [vmem:[#allocation4 + $0x14] sm:$0xf] %vm2229, %v2144
        %2236 = vst.msk [vmem:[#allocation4 + $0x18] sm:$0xf] %vm2229, %v2146
        %2237 = vst.msk [vmem:[#allocation4 + $0x1c] sm:$0xf] %vm2229, %v2148
        %2238 = vst.msk [vmem:[#allocation4 + $0x20] sm:$0xf] %vm2229, %v2150
        %2239 = vst.msk [vmem:[#allocation4 + $0x24] sm:$0xf] %vm2229, %v2152
        %2240 = vst.msk [vmem:[#allocation4 + $0x28] sm:$0xf] %vm2229, %v2154
        %2241 = vst.msk [vmem:[#allocation4 + $0x2c] sm:$0xf] %vm2229, %v2156
        %2242 = vst.msk [vmem:[#allocation4 + $0x30] sm:$0xf] %vm2229, %v2158
        %2243 = vst.msk [vmem:[#allocation4 + $0x34] sm:$0xf] %vm2229, %v2160
        %2244 = vst.msk [vmem:[#allocation4 + $0x38] sm:$0xf] %vm2229, %v2162
        %2245 = vst.msk [vmem:[#allocation4 + $0x3c] sm:$0xf] %vm2229, %v2164
        %2246 = vst.msk [vmem:[#allocation4 + $0x40] sm:$0xf] %vm2229, %v2166
        %2247 = vst.msk [vmem:[#allocation4 + $0x44] sm:$0xf] %vm2229, %v2168
        %2248 = vst.msk [vmem:[#allocation4 + $0x48] sm:$0xf] %vm2229, %v2170
        %2249 = vst.msk [vmem:[#allocation4 + $0x4c] sm:$0xf] %vm2229, %v2172
        %2250 = vst.msk [vmem:[#allocation4 + $0x50] sm:$0xf] %vm2229, %v2174
        %2251 = vst.msk [vmem:[#allocation4 + $0x54] sm:$0xf] %vm2229, %v2176
        %2252 = vst.msk [vmem:[#allocation4 + $0x58] sm:$0xf] %vm2229, %v2178
        %2253 = vst.msk [vmem:[#allocation4 + $0x5c] sm:$0xf] %vm2229, %v2180
        %2254 = vst.msk [vmem:[#allocation4 + $0x60] sm:$0xf] %vm2229, %v2182
        %2255 = vst.msk [vmem:[#allocation4 + $0x64] sm:$0xf] %vm2229, %v2184
        %2256 = vst.msk [vmem:[#allocation4 + $0x68] sm:$0xf] %vm2229, %v2186
        %2257 = vst.msk [vmem:[#allocation4 + $0x6c] sm:$0xf] %vm2229, %v2188
        %2258 = vst.msk [vmem:[#allocation4 + $0x70] sm:$0xf] %vm2229, %v2190
        %2259 = vst.msk [vmem:[#allocation4 + $0x74] sm:$0xf] %vm2229, %v2192
        %2260 = vst.msk [vmem:[#allocation4 + $0x78] sm:$0xf] %vm2229, %v2194
        %2261 = vst.msk [vmem:[#allocation4 + $0x7c] sm:$0xf] %vm2229, %v2196
        %v2262 = vld [vmem:[#allocation4] sm:$0xf]
        %v2263 = vld [vmem:[#allocation4 + $0x4] sm:$0xf]
        %v2264 = vld [vmem:[#allocation4 + $0x8] sm:$0xf]
        %v2265 = vld [vmem:[#allocation4 + $0xc] sm:$0xf]
        %v2266 = vld [vmem:[#allocation4 + $0x10] sm:$0xf]
        %v2267 = vld [vmem:[#allocation4 + $0x14] sm:$0xf]
        %v2268 = vld [vmem:[#allocation4 + $0x18] sm:$0xf]
        %v2269 = vld [vmem:[#allocation4 + $0x1c] sm:$0xf]
        %v2270 = vld [vmem:[#allocation4 + $0x20] sm:$0xf]
        %v2271 = vld [vmem:[#allocation4 + $0x24] sm:$0xf]
        %v2272 = vld [vmem:[#allocation4 + $0x28] sm:$0xf]
        %v2273 = vld [vmem:[#allocation4 + $0x2c] sm:$0xf]
        %v2274 = vld [vmem:[#allocation4 + $0x30] sm:$0xf]
        %v2275 = vld [vmem:[#allocation4 + $0x34] sm:$0xf]
        %v2276 = vld [vmem:[#allocation4 + $0x38] sm:$0xf]
        %v2277 = vld [vmem:[#allocation4 + $0x3c] sm:$0xf]
        %v2278 = vld [vmem:[#allocation4 + $0x40] sm:$0xf]
        %v2279 = vld [vmem:[#allocation4 + $0x44] sm:$0xf]
        %v2280 = vld [vmem:[#allocation4 + $0x48] sm:$0xf]
        %v2281 = vld [vmem:[#allocation4 + $0x4c] sm:$0xf]
        %v2282 = vld [vmem:[#allocation4 + $0x50] sm:$0xf]
        %v2283 = vld [vmem:[#allocation4 + $0x54] sm:$0xf]
        %v2284 = vld [vmem:[#allocation4 + $0x58] sm:$0xf]
        %v2285 = vld [vmem:[#allocation4 + $0x5c] sm:$0xf]
        %v2286 = vld [vmem:[#allocation4 + $0x60] sm:$0xf]
        %v2287 = vld [vmem:[#allocation4 + $0x64] sm:$0xf]
        %v2288 = vld [vmem:[#allocation4 + $0x68] sm:$0xf]
        %v2289 = vld [vmem:[#allocation4 + $0x6c] sm:$0xf]
        %v2290 = vld [vmem:[#allocation4 + $0x70] sm:$0xf]
        %v2291 = vld [vmem:[#allocation4 + $0x74] sm:$0xf]
        %v2292 = vld [vmem:[#allocation4 + $0x78] sm:$0xf]
        %v2293 = vld [vmem:[#allocation4 + $0x7c] sm:$0xf]
        %v2294 = vlaneseq
        %v2295 = vshrl.u32 %v2294, 7
        %v2296 = vsub.s32 0, %v2295
        %v2297 = vrot.slane %v300, %v2296
        %v2330 = vunpack.c.l.b16 %v2262
        %v2331 = vunpack.c.l.b16 %v2263
        %v2332 = vunpack.c.l.b16 %v2264
        %v2333 = vunpack.c.l.b16 %v2265
        %v2334 = vunpack.c.l.b16 %v2266
        %v2335 = vunpack.c.l.b16 %v2267
        %v2336 = vunpack.c.l.b16 %v2268
        %v2337 = vunpack.c.l.b16 %v2269
        %v2338 = vunpack.c.l.b16 %v2270
        %v2339 = vunpack.c.l.b16 %v2271
        %v2340 = vunpack.c.l.b16 %v2272
        %v2341 = vunpack.c.l.b16 %v2273
        %v2342 = vunpack.c.l.b16 %v2274
        %v2343 = vunpack.c.l.b16 %v2275
        %v2344 = vunpack.c.l.b16 %v2276
        %v2345 = vunpack.c.l.b16 %v2277
        %v2346 = vunpack.c.l.b16 %v2278
        %v2347 = vunpack.c.l.b16 %v2279
        %v2348 = vunpack.c.l.b16 %v2280
        %v2349 = vunpack.c.l.b16 %v2281
        %v2350 = vunpack.c.l.b16 %v2282
        %v2351 = vunpack.c.l.b16 %v2283
        %v2352 = vunpack.c.l.b16 %v2284
        %v2353 = vunpack.c.l.b16 %v2285
        %v2354 = vunpack.c.l.b16 %v2286
        %v2355 = vunpack.c.l.b16 %v2287
        %v2356 = vunpack.c.l.b16 %v2288
        %v2357 = vunpack.c.l.b16 %v2289
        %v2358 = vunpack.c.l.b16 %v2290
        %v2359 = vunpack.c.l.b16 %v2291
        %v2360 = vunpack.c.l.b16 %v2292
        %v2361 = vunpack.c.l.b16 %v2293
        %v2362 = vpack.c.b16 %v2331, %v2330
        %v2363 = vpack.c.b16 %v2333, %v2332
        %v2364 = vpack.c.b16 %v2335, %v2334
        %v2365 = vpack.c.b16 %v2337, %v2336
        %v2366 = vpack.c.b16 %v2339, %v2338
        %v2367 = vpack.c.b16 %v2341, %v2340
        %v2368 = vpack.c.b16 %v2343, %v2342
        %v2369 = vpack.c.b16 %v2345, %v2344
        %v2370 = vpack.c.b16 %v2347, %v2346
        %v2371 = vpack.c.b16 %v2349, %v2348
        %v2372 = vpack.c.b16 %v2351, %v2350
        %v2373 = vpack.c.b16 %v2353, %v2352
        %v2374 = vpack.c.b16 %v2355, %v2354
        %v2375 = vpack.c.b16 %v2357, %v2356
        %v2376 = vpack.c.b16 %v2359, %v2358
        %v2377 = vpack.c.b16 %v2361, %v2360
        %v2383 = vunpack.c.l.b16 %v223
        %v2384 = vunpack.c.l.b16 %v224
        %v2385 = vunpack.c.l.b16 %v225
        %v2386 = vunpack.c.l.b16 %v226
        %v2387 = vunpack.c.l.b16 %v227
        %v2388 = vpack.c.b16 %v2384, %v2383
        %v2389 = vpack.c.b16 %v2386, %v2385
        %v2390 = vpack.c.b16 %v2387, %v2387
        %vm2393 = vcmask 293888
        %v2395 = vsel %vm2393, %v2362, 0
        %v2398 = vsel %vm2393, %v2363, 0
        %v2401 = vsel %vm2393, %v2364, 0
        %v2404 = vsel %vm2393, %v2365, 0
        %v2407 = vsel %vm2393, %v2366, 0
        %v2410 = vsel %vm2393, %v2367, 0
        %v2413 = vsel %vm2393, %v2368, 0
        %v2416 = vsel %vm2393, %v2369, 0
        %v2419 = vsel %vm2393, %v2370, 0
        %v2422 = vsel %vm2393, %v2371, 0
        %v2425 = vsel %vm2393, %v2372, 0
        %v2428 = vsel %vm2393, %v2373, 0
        %v2431 = vsel %vm2393, %v2374, 0
        %v2434 = vsel %vm2393, %v2375, 0
        %v2437 = vsel %vm2393, %v2376, 0
        %v2440 = vsel %vm2393, %v2377, 0
        %vm2442 = vcmask 1041408
        %v2444 = vsel %vm2442, %v2390, 0
        %2446 = vmatprep.subr.bf16.mxu0 0
        %2447 = vmatpush1.bf16.msra.mxu0 0
        %2448 = vmatprep.subr.bf16.mxu0 0
        %2449 = vmatpush1.bf16.msra.mxu0 0
        %2450 = vmatprep.subr.bf16.mxu0 0
        %2451 = vmatpush1.bf16.msra.mxu0 0
        %2452 = vmatprep.subr.bf16.mxu0 0
        %2453 = vmatpush1.bf16.msra.mxu0 0
        %2454 = vmatprep.subr.bf16.mxu0 0
        %2455 = vmatpush1.bf16.msra.mxu0 0
        %2456 = vmatprep.subr.bf16.mxu0 0
        %2457 = vmatpush1.bf16.msra.mxu0 %v2444
        %2458 = vmatprep.subr.bf16.mxu0 0
        %2459 = vmatpush1.bf16.msra.mxu0 %v2389
        %2460 = vmatprep.subr.bf16.mxu0 0
        %2461 = vmatpush1.bf16.msra.mxu0 %v2388
        %2462 = vmatprep.subr.bf16.mxu0 0
        %2463 = vmatpush2.bf16.msra.mxu0 0
        %2464 = vmatprep.subr.bf16.mxu0 0
        %2465 = vmatpush2.bf16.msra.mxu0 0
        %2466 = vmatprep.subr.bf16.mxu0 0
        %2467 = vmatpush2.bf16.msra.mxu0 0
        %2468 = vmatprep.subr.bf16.mxu0 0
        %2469 = vmatpush2.bf16.msra.mxu0 0
        %2470 = vmatprep.subr.bf16.mxu0 0
        %2471 = vmatpush2.bf16.msra.mxu0 0
        %2472 = vmatprep.subr.bf16.mxu0 0
        %2473 = vmatpush2.bf16.msra.mxu0 0
        %2474 = vmatprep.subr.bf16.mxu0 0
        %2475 = vmatpush2.bf16.msra.mxu0 0
        %2476 = vmatprep.subr.bf16.mxu0 0
        %2477 = vmatpush2.bf16.msra.mxu0 0
        %2478 = vmatprep.mubr.bf16.mxu0 0
        %2479 = vmatmul.mubr.bf16.gmra.mxu0 %v2395
        %v2480 = vpop.f32.mrf.mxu0
        %v2481 = vadd.f32 %v2297, %v2480
        %v2482 = vpop.f32.mrf.mxu0
        %v2483 = vpop.f32.mrf.mxu0
        %v2484 = vadd.f32 %v2297, %v2483
        %v2485 = vpop.f32.mrf.mxu0
        %2486 = vmatprep.mubr.bf16.mxu0 0
        %2487 = vmatmul.mubr.bf16.gmra.mxu0 %v2398
        %v2488 = vpop.f32.mrf.mxu0
        %v2489 = vadd.f32 %v2297, %v2488
        %v2490 = vpop.f32.mrf.mxu0
        %v2491 = vpop.f32.mrf.mxu0
        %v2492 = vadd.f32 %v2297, %v2491
        %v2493 = vpop.f32.mrf.mxu0
        %2494 = vmatprep.mubr.bf16.mxu0 0
        %2495 = vmatmul.mubr.bf16.gmra.mxu0 %v2401
        %v2496 = vpop.f32.mrf.mxu0
        %v2497 = vadd.f32 %v2297, %v2496
        %v2498 = vpop.f32.mrf.mxu0
        %v2499 = vpop.f32.mrf.mxu0
        %v2500 = vadd.f32 %v2297, %v2499
        %v2501 = vpop.f32.mrf.mxu0
        %2502 = vmatprep.mubr.bf16.mxu0 0
        %2503 = vmatmul.mubr.bf16.gmra.mxu0 %v2404
        %v2504 = vpop.f32.mrf.mxu0
        %v2505 = vadd.f32 %v2297, %v2504
        %v2506 = vpop.f32.mrf.mxu0
        %v2507 = vpop.f32.mrf.mxu0
        %v2508 = vadd.f32 %v2297, %v2507
        %v2509 = vpop.f32.mrf.mxu0
        %2510 = vmatprep.mubr.bf16.mxu0 0
        %2511 = vmatmul.mubr.bf16.gmra.mxu0 %v2407
        %v2512 = vpop.f32.mrf.mxu0
        %v2513 = vadd.f32 %v2297, %v2512
        %v2514 = vpop.f32.mrf.mxu0
        %v2515 = vpop.f32.mrf.mxu0
        %v2516 = vadd.f32 %v2297, %v2515
        %v2517 = vpop.f32.mrf.mxu0
        %2518 = vmatprep.mubr.bf16.mxu0 0
        %2519 = vmatmul.mubr.bf16.gmra.mxu0 %v2410
        %v2520 = vpop.f32.mrf.mxu0
        %v2521 = vadd.f32 %v2297, %v2520
        %v2522 = vpop.f32.mrf.mxu0
        %v2523 = vpop.f32.mrf.mxu0
        %v2524 = vadd.f32 %v2297, %v2523
        %v2525 = vpop.f32.mrf.mxu0
        %2526 = vmatprep.mubr.bf16.mxu0 0
        %2527 = vmatmul.mubr.bf16.gmra.mxu0 %v2413
        %v2528 = vpop.f32.mrf.mxu0
        %v2529 = vadd.f32 %v2297, %v2528
        %v2530 = vpop.f32.mrf.mxu0
        %v2531 = vpop.f32.mrf.mxu0
        %v2532 = vadd.f32 %v2297, %v2531
        %v2533 = vpop.f32.mrf.mxu0
        %2534 = vmatprep.mubr.bf16.mxu0 0
        %2535 = vmatmul.mubr.bf16.gmra.mxu0 %v2416
        %v2536 = vpop.f32.mrf.mxu0
        %v2537 = vadd.f32 %v2297, %v2536
        %v2538 = vpop.f32.mrf.mxu0
        %v2539 = vpop.f32.mrf.mxu0
        %v2540 = vadd.f32 %v2297, %v2539
        %v2541 = vpop.f32.mrf.mxu0
        %2542 = vmatprep.mubr.bf16.mxu0 0
        %2543 = vmatmul.mubr.bf16.gmra.mxu0 %v2419
        %v2544 = vpop.f32.mrf.mxu0
        %v2545 = vadd.f32 %v2297, %v2544
        %v2546 = vpop.f32.mrf.mxu0
        %v2547 = vpop.f32.mrf.mxu0
        %v2548 = vadd.f32 %v2297, %v2547
        %v2549 = vpop.f32.mrf.mxu0
        %2550 = vmatprep.mubr.bf16.mxu0 0
        %2551 = vmatmul.mubr.bf16.gmra.mxu0 %v2422
        %v2552 = vpop.f32.mrf.mxu0
        %v2553 = vadd.f32 %v2297, %v2552
        %v2554 = vpop.f32.mrf.mxu0
        %v2555 = vpop.f32.mrf.mxu0
        %v2556 = vadd.f32 %v2297, %v2555
        %v2557 = vpop.f32.mrf.mxu0
        %2558 = vmatprep.mubr.bf16.mxu0 0
        %2559 = vmatmul.mubr.bf16.gmra.mxu0 %v2425
        %v2560 = vpop.f32.mrf.mxu0
        %v2561 = vadd.f32 %v2297, %v2560
        %v2562 = vpop.f32.mrf.mxu0
        %v2563 = vpop.f32.mrf.mxu0
        %v2564 = vadd.f32 %v2297, %v2563
        %v2565 = vpop.f32.mrf.mxu0
        %2566 = vmatprep.mubr.bf16.mxu0 0
        %2567 = vmatmul.mubr.bf16.gmra.mxu0 %v2428
        %v2568 = vpop.f32.mrf.mxu0
        %v2569 = vadd.f32 %v2297, %v2568
        %v2570 = vpop.f32.mrf.mxu0
        %v2571 = vpop.f32.mrf.mxu0
        %v2572 = vadd.f32 %v2297, %v2571
        %v2573 = vpop.f32.mrf.mxu0
        %2574 = vmatprep.mubr.bf16.mxu0 0
        %2575 = vmatmul.mubr.bf16.gmra.mxu0 %v2431
        %v2576 = vpop.f32.mrf.mxu0
        %v2577 = vadd.f32 %v2297, %v2576
        %v2578 = vpop.f32.mrf.mxu0
        %v2579 = vpop.f32.mrf.mxu0
        %v2580 = vadd.f32 %v2297, %v2579
        %v2581 = vpop.f32.mrf.mxu0
        %2582 = vmatprep.mubr.bf16.mxu0 0
        %2583 = vmatmul.mubr.bf16.gmra.mxu0 %v2434
        %v2584 = vpop.f32.mrf.mxu0
        %v2585 = vadd.f32 %v2297, %v2584
        %v2586 = vpop.f32.mrf.mxu0
        %v2587 = vpop.f32.mrf.mxu0
        %v2588 = vadd.f32 %v2297, %v2587
        %v2589 = vpop.f32.mrf.mxu0
        %2590 = vmatprep.mubr.bf16.mxu0 0
        %2591 = vmatmul.mubr.bf16.gmra.mxu0 %v2437
        %v2592 = vpop.f32.mrf.mxu0
        %v2593 = vadd.f32 %v2297, %v2592
        %v2594 = vpop.f32.mrf.mxu0
        %v2595 = vpop.f32.mrf.mxu0
        %v2596 = vadd.f32 %v2297, %v2595
        %v2597 = vpop.f32.mrf.mxu0
        %2598 = vmatprep.mubr.bf16.mxu0 0
        %2599 = vmatmul.mubr.bf16.gmra.mxu0 %v2440
        %v2600 = vpop.f32.mrf.mxu0
        %v2601 = vadd.f32 %v2297, %v2600
        %v2602 = vpop.f32.mrf.mxu0
        %v2603 = vpop.f32.mrf.mxu0
        %v2604 = vadd.f32 %v2297, %v2603
        %v2605 = vpop.f32.mrf.mxu0
        %2606 = vdwg.mxu0
        %vm2607 = vcmp.gt.f32.partialorder %v2481, 0.0
        %vm2608 = vcmp.gt.f32.partialorder %v2484, 0.0
        %vm2609 = vcmp.gt.f32.partialorder %v2489, 0.0
        %vm2610 = vcmp.gt.f32.partialorder %v2492, 0.0
        %vm2611 = vcmp.gt.f32.partialorder %v2497, 0.0
        %vm2612 = vcmp.gt.f32.partialorder %v2500, 0.0
        %vm2613 = vcmp.gt.f32.partialorder %v2505, 0.0
        %vm2614 = vcmp.gt.f32.partialorder %v2508, 0.0
        %vm2615 = vcmp.gt.f32.partialorder %v2513, 0.0
        %vm2616 = vcmp.gt.f32.partialorder %v2516, 0.0
        %vm2617 = vcmp.gt.f32.partialorder %v2521, 0.0
        %vm2618 = vcmp.gt.f32.partialorder %v2524, 0.0
        %vm2619 = vcmp.gt.f32.partialorder %v2529, 0.0
        %vm2620 = vcmp.gt.f32.partialorder %v2532, 0.0
        %vm2621 = vcmp.gt.f32.partialorder %v2537, 0.0
        %vm2622 = vcmp.gt.f32.partialorder %v2540, 0.0
        %vm2623 = vcmp.gt.f32.partialorder %v2545, 0.0
        %vm2624 = vcmp.gt.f32.partialorder %v2548, 0.0
        %vm2625 = vcmp.gt.f32.partialorder %v2553, 0.0
        %vm2626 = vcmp.gt.f32.partialorder %v2556, 0.0
        %vm2627 = vcmp.gt.f32.partialorder %v2561, 0.0
        %vm2628 = vcmp.gt.f32.partialorder %v2564, 0.0
        %vm2629 = vcmp.gt.f32.partialorder %v2569, 0.0
        %vm2630 = vcmp.gt.f32.partialorder %v2572, 0.0
        %vm2631 = vcmp.gt.f32.partialorder %v2577, 0.0
        %vm2632 = vcmp.gt.f32.partialorder %v2580, 0.0
        %vm2633 = vcmp.gt.f32.partialorder %v2585, 0.0
        %vm2634 = vcmp.gt.f32.partialorder %v2588, 0.0
        %vm2635 = vcmp.gt.f32.partialorder %v2593, 0.0
        %vm2636 = vcmp.gt.f32.partialorder %v2596, 0.0
        %vm2637 = vcmp.gt.f32.partialorder %v2601, 0.0
        %vm2638 = vcmp.gt.f32.partialorder %v2604, 0.0
        %v2639 = vmul.f32 %v2481, 0.01
        %v2640 = vmul.f32 %v2484, 0.01
        %v2641 = vmul.f32 %v2489, 0.01
        %v2642 = vmul.f32 %v2492, 0.01
        %v2643 = vmul.f32 %v2497, 0.01
        %v2644 = vmul.f32 %v2500, 0.01
        %v2645 = vmul.f32 %v2505, 0.01
        %v2646 = vmul.f32 %v2508, 0.01
        %v2647 = vmul.f32 %v2513, 0.01
        %v2648 = vmul.f32 %v2516, 0.01
        %v2649 = vmul.f32 %v2521, 0.01
        %v2650 = vmul.f32 %v2524, 0.01
        %v2651 = vmul.f32 %v2529, 0.01
        %v2652 = vmul.f32 %v2532, 0.01
        %v2653 = vmul.f32 %v2537, 0.01
        %v2654 = vmul.f32 %v2540, 0.01
        %v2655 = vmul.f32 %v2545, 0.01
        %v2656 = vmul.f32 %v2548, 0.01
        %v2657 = vmul.f32 %v2553, 0.01
        %v2658 = vmul.f32 %v2556, 0.01
        %v2659 = vmul.f32 %v2561, 0.01
        %v2660 = vmul.f32 %v2564, 0.01
        %v2661 = vmul.f32 %v2569, 0.01
        %v2662 = vmul.f32 %v2572, 0.01
        %v2663 = vmul.f32 %v2577, 0.01
        %v2664 = vmul.f32 %v2580, 0.01
        %v2665 = vmul.f32 %v2585, 0.01
        %v2666 = vmul.f32 %v2588, 0.01
        %v2667 = vmul.f32 %v2593, 0.01
        %v2668 = vmul.f32 %v2596, 0.01
        %v2669 = vmul.f32 %v2601, 0.01
        %v2670 = vmul.f32 %v2604, 0.01
        %v2671 = vsel %vm2607, %v2481, %v2639
        %v2672 = vsel %vm2608, %v2484, %v2640
        %v2673 = vsel %vm2609, %v2489, %v2641
        %v2674 = vsel %vm2610, %v2492, %v2642
        %v2675 = vsel %vm2611, %v2497, %v2643
        %v2676 = vsel %vm2612, %v2500, %v2644
        %v2677 = vsel %vm2613, %v2505, %v2645
        %v2678 = vsel %vm2614, %v2508, %v2646
        %v2679 = vsel %vm2615, %v2513, %v2647
        %v2680 = vsel %vm2616, %v2516, %v2648
        %v2681 = vsel %vm2617, %v2521, %v2649
        %v2682 = vsel %vm2618, %v2524, %v2650
        %v2683 = vsel %vm2619, %v2529, %v2651
        %v2684 = vsel %vm2620, %v2532, %v2652
        %v2685 = vsel %vm2621, %v2537, %v2653
        %v2686 = vsel %vm2622, %v2540, %v2654
        %v2687 = vsel %vm2623, %v2545, %v2655
        %v2688 = vsel %vm2624, %v2548, %v2656
        %v2689 = vsel %vm2625, %v2553, %v2657
        %v2690 = vsel %vm2626, %v2556, %v2658
        %v2691 = vsel %vm2627, %v2561, %v2659
        %v2692 = vsel %vm2628, %v2564, %v2660
        %v2693 = vsel %vm2629, %v2569, %v2661
        %v2694 = vsel %vm2630, %v2572, %v2662
        %v2695 = vsel %vm2631, %v2577, %v2663
        %v2696 = vsel %vm2632, %v2580, %v2664
        %v2697 = vsel %vm2633, %v2585, %v2665
        %v2698 = vsel %vm2634, %v2588, %v2666
        %v2699 = vsel %vm2635, %v2593, %v2667
        %v2700 = vsel %vm2636, %v2596, %v2668
        %v2701 = vsel %vm2637, %v2601, %v2669
        %v2702 = vsel %vm2638, %v2604, %v2670
        %v2703 = vlaneseq
        %v2704 = vshrl.u32 %v2703, 7
        %v2705 = vsub.s32 1, %v2704
        %v2706 = vrot.slane %v300, %v2705
        %v2707 = vmul.f32 %v2671, %v2706
        %v2708 = vmul.f32 %v2672, %v2706
        %v2709 = vmul.f32 %v2673, %v2706
        %v2710 = vmul.f32 %v2674, %v2706
        %v2711 = vmul.f32 %v2675, %v2706
        %v2712 = vmul.f32 %v2676, %v2706
        %v2713 = vmul.f32 %v2677, %v2706
        %v2714 = vmul.f32 %v2678, %v2706
        %v2715 = vmul.f32 %v2679, %v2706
        %v2716 = vmul.f32 %v2680, %v2706
        %v2717 = vmul.f32 %v2681, %v2706
        %v2718 = vmul.f32 %v2682, %v2706
        %v2719 = vmul.f32 %v2683, %v2706
        %v2720 = vmul.f32 %v2684, %v2706
        %v2721 = vmul.f32 %v2685, %v2706
        %v2722 = vmul.f32 %v2686, %v2706
        %v2723 = vmul.f32 %v2687, %v2706
        %v2724 = vmul.f32 %v2688, %v2706
        %v2725 = vmul.f32 %v2689, %v2706
        %v2726 = vmul.f32 %v2690, %v2706
        %v2727 = vmul.f32 %v2691, %v2706
        %v2728 = vmul.f32 %v2692, %v2706
        %v2729 = vmul.f32 %v2693, %v2706
        %v2730 = vmul.f32 %v2694, %v2706
        %v2731 = vmul.f32 %v2695, %v2706
        %v2732 = vmul.f32 %v2696, %v2706
        %v2733 = vmul.f32 %v2697, %v2706
        %v2734 = vmul.f32 %v2698, %v2706
        %v2735 = vmul.f32 %v2699, %v2706
        %v2736 = vmul.f32 %v2700, %v2706
        %v2737 = vmul.f32 %v2701, %v2706
        %v2738 = vmul.f32 %v2702, %v2706
        %v2739 = vlaneseq
        %v2740 = vshrl.u32 %v2739, 7
        %v2741 = vsub.s32 2, %v2740
        %v2742 = vrot.slane %v300, %v2741
        %v2743 = vadd.f32 %v2707, %v2742
        %v2744 = vadd.f32 %v2708, %v2742
        %v2745 = vadd.f32 %v2709, %v2742
        %v2746 = vadd.f32 %v2710, %v2742
        %v2747 = vadd.f32 %v2711, %v2742
        %v2748 = vadd.f32 %v2712, %v2742
        %v2749 = vadd.f32 %v2713, %v2742
        %v2750 = vadd.f32 %v2714, %v2742
        %v2751 = vadd.f32 %v2715, %v2742
        %v2752 = vadd.f32 %v2716, %v2742
        %v2753 = vadd.f32 %v2717, %v2742
        %v2754 = vadd.f32 %v2718, %v2742
        %v2755 = vadd.f32 %v2719, %v2742
        %v2756 = vadd.f32 %v2720, %v2742
        %v2757 = vadd.f32 %v2721, %v2742
        %v2758 = vadd.f32 %v2722, %v2742
        %v2759 = vadd.f32 %v2723, %v2742
        %v2760 = vadd.f32 %v2724, %v2742
        %v2761 = vadd.f32 %v2725, %v2742
        %v2762 = vadd.f32 %v2726, %v2742
        %v2763 = vadd.f32 %v2727, %v2742
        %v2764 = vadd.f32 %v2728, %v2742
        %v2765 = vadd.f32 %v2729, %v2742
        %v2766 = vadd.f32 %v2730, %v2742
        %v2767 = vadd.f32 %v2731, %v2742
        %v2768 = vadd.f32 %v2732, %v2742
        %v2769 = vadd.f32 %v2733, %v2742
        %v2770 = vadd.f32 %v2734, %v2742
        %v2771 = vadd.f32 %v2735, %v2742
        %v2772 = vadd.f32 %v2736, %v2742
        %v2773 = vadd.f32 %v2737, %v2742
        %v2774 = vadd.f32 %v2738, %v2742
        %s2775 = scalar_lea.vmem [#allocation3], 24
        %2776 = vst.msk [vmem:[%s2775 + $0x1] sm:$0xff] %vm358, %v2743
        %2777 = vst.msk [vmem:[%s2775 + $0x9] sm:$0xff] %vm358, %v2744
        %2778 = vst.msk [vmem:[%s2775 + $0x19] sm:$0xff] %vm358, %v2745
        %2779 = vst.msk [vmem:[%s2775 + $0x21] sm:$0xff] %vm358, %v2746
        %2780 = vst.msk [vmem:[%s2775 + $0x31] sm:$0xff] %vm358, %v2747
        %2781 = vst.msk [vmem:[%s2775 + $0x39] sm:$0xff] %vm358, %v2748
        %2782 = vst.msk [vmem:[%s2775 + $0x49] sm:$0xff] %vm358, %v2749
        %2783 = vst.msk [vmem:[%s2775 + $0x51] sm:$0xff] %vm358, %v2750
        %2784 = vst.msk [vmem:[%s2775 + $0x61] sm:$0xff] %vm358, %v2751
        %2785 = vst.msk [vmem:[%s2775 + $0x69] sm:$0xff] %vm358, %v2752
        %2786 = vst.msk [vmem:[%s2775 + $0x79] sm:$0xff] %vm358, %v2753
        %2787 = vst.msk [vmem:[%s2775 + $0x81] sm:$0xff] %vm358, %v2754
        %2788 = vst.msk [vmem:[%s2775 + $0x91] sm:$0xff] %vm358, %v2755
        %2789 = vst.msk [vmem:[%s2775 + $0x99] sm:$0xff] %vm358, %v2756
        %2790 = vst.msk [vmem:[%s2775 + $0xa9] sm:$0xff] %vm358, %v2757
        %2791 = vst.msk [vmem:[%s2775 + $0xb1] sm:$0xff] %vm358, %v2758
        %2792 = vst.msk [vmem:[%s2775 + $0xc1] sm:$0xff] %vm358, %v2759
        %2793 = vst.msk [vmem:[%s2775 + $0xc9] sm:$0xff] %vm358, %v2760
        %2794 = vst.msk [vmem:[%s2775 + $0xd9] sm:$0xff] %vm358, %v2761
        %2795 = vst.msk [vmem:[%s2775 + $0xe1] sm:$0xff] %vm358, %v2762
        %2796 = vst.msk [vmem:[%s2775 + $0xf1] sm:$0xff] %vm358, %v2763
        %2797 = vst.msk [vmem:[%s2775 + $0xf9] sm:$0xff] %vm358, %v2764
        %2798 = vst.msk [vmem:[%s2775 + $0x109] sm:$0xff] %vm358, %v2765
        %2799 = vst.msk [vmem:[%s2775 + $0x111] sm:$0xff] %vm358, %v2766
        %2800 = vst.msk [vmem:[%s2775 + $0x121] sm:$0xff] %vm358, %v2767
        %2801 = vst.msk [vmem:[%s2775 + $0x129] sm:$0xff] %vm358, %v2768
        %2802 = vst.msk [vmem:[%s2775 + $0x139] sm:$0xff] %vm358, %v2769
        %2803 = vst.msk [vmem:[%s2775 + $0x141] sm:$0xff] %vm358, %v2770
        %2804 = vst.msk [vmem:[%s2775 + $0x151] sm:$0xff] %vm358, %v2771
        %2805 = vst.msk [vmem:[%s2775 + $0x159] sm:$0xff] %vm358, %v2772
        %2806 = vst.msk [vmem:[%s2775 + $0x169] sm:$0xff] %vm358, %v2773
        %2807 = vst.msk [vmem:[%s2775 + $0x171] sm:$0xff] %vm358, %v2774
        %v2808 = vld [vmem:[#allocation3] sm:$0xff]
        %v2809 = vld [vmem:[#allocation3 + $0x8] sm:$0xff]
        %v2810 = vld [vmem:[#allocation3 + $0x10] sm:$0x3]
        %v2811 = vld [vmem:[#allocation3 + $0x18] sm:$0xff]
        %v2812 = vld [vmem:[#allocation3 + $0x20] sm:$0xff]
        %v2813 = vld [vmem:[#allocation3 + $0x28] sm:$0x3]
        %v2814 = vld [vmem:[#allocation3 + $0x30] sm:$0xff]
        %v2815 = vld [vmem:[#allocation3 + $0x38] sm:$0xff]
        %v2816 = vld [vmem:[#allocation3 + $0x40] sm:$0x3]
        %v2817 = vld [vmem:[#allocation3 + $0x48] sm:$0xff]
        %v2818 = vld [vmem:[#allocation3 + $0x50] sm:$0xff]
        %v2819 = vld [vmem:[#allocation3 + $0x58] sm:$0x3]
        %v2820 = vld [vmem:[#allocation3 + $0x60] sm:$0xff]
        %v2821 = vld [vmem:[#allocation3 + $0x68] sm:$0xff]
        %v2822 = vld [vmem:[#allocation3 + $0x70] sm:$0x3]
        %v2823 = vld [vmem:[#allocation3 + $0x78] sm:$0xff]
        %v2824 = vld [vmem:[#allocation3 + $0x80] sm:$0xff]
        %v2825 = vld [vmem:[#allocation3 + $0x88] sm:$0x3]
        %v2826 = vld [vmem:[#allocation3 + $0x90] sm:$0xff]
        %v2827 = vld [vmem:[#allocation3 + $0x98] sm:$0xff]
        %v2828 = vld [vmem:[#allocation3 + $0xa0] sm:$0x3]
        %v2829 = vld [vmem:[#allocation3 + $0xa8] sm:$0xff]
        %v2830 = vld [vmem:[#allocation3 + $0xb0] sm:$0xff]
        %v2831 = vld [vmem:[#allocation3 + $0xb8] sm:$0x3]
        %v2832 = vld [vmem:[#allocation3 + $0xc0] sm:$0xff]
        %v2833 = vld [vmem:[#allocation3 + $0xc8] sm:$0xff]
        %v2834 = vld [vmem:[#allocation3 + $0xd0] sm:$0x3]
        %v2835 = vld [vmem:[#allocation3 + $0xd8] sm:$0xff]
        %v2836 = vld [vmem:[#allocation3 + $0xe0] sm:$0xff]
        %v2837 = vld [vmem:[#allocation3 + $0xe8] sm:$0x3]
        %v2838 = vld [vmem:[#allocation3 + $0xf0] sm:$0xff]
        %v2839 = vld [vmem:[#allocation3 + $0xf8] sm:$0xff]
        %v2840 = vld [vmem:[#allocation3 + $0x100] sm:$0x3]
        %v2841 = vld [vmem:[#allocation3 + $0x108] sm:$0xff]
        %v2842 = vld [vmem:[#allocation3 + $0x110] sm:$0xff]
        %v2843 = vld [vmem:[#allocation3 + $0x118] sm:$0x3]
        %v2844 = vld [vmem:[#allocation3 + $0x120] sm:$0xff]
        %v2845 = vld [vmem:[#allocation3 + $0x128] sm:$0xff]
        %v2846 = vld [vmem:[#allocation3 + $0x130] sm:$0x3]
        %v2847 = vld [vmem:[#allocation3 + $0x138] sm:$0xff]
        %v2848 = vld [vmem:[#allocation3 + $0x140] sm:$0xff]
        %v2849 = vld [vmem:[#allocation3 + $0x148] sm:$0x3]
        %v2850 = vld [vmem:[#allocation3 + $0x150] sm:$0xff]
        %v2851 = vld [vmem:[#allocation3 + $0x158] sm:$0xff]
        %v2852 = vld [vmem:[#allocation3 + $0x160] sm:$0x3]
        %v2853 = vld [vmem:[#allocation3 + $0x168] sm:$0xff]
        %v2854 = vld [vmem:[#allocation3 + $0x170] sm:$0xff]
        %v2855 = vld [vmem:[#allocation3 + $0x178] sm:$0x3]
        %v2856 = vld [vmem:[#allocation3 + $0x180] sm:$0xff]
        %v2857 = vld [vmem:[#allocation3 + $0x188] sm:$0xff]
        %v2858 = vld [vmem:[#allocation3 + $0x190] sm:$0x3]
        %v2859 = vld [vmem:[#allocation3 + $0x198] sm:$0xff]
        %v2860 = vld [vmem:[#allocation3 + $0x1a0] sm:$0xff]
        %v2861 = vld [vmem:[#allocation3 + $0x1a8] sm:$0x3]
        %v2862 = vpack.c.bf16 %v2809, %v2808
        %v2863 = vpack.c.bf16 %v2812, %v2811
        %v2864 = vpack.c.bf16 %v2815, %v2814
        %v2865 = vpack.c.bf16 %v2818, %v2817
        %v2866 = vpack.c.bf16 %v2821, %v2820
        %v2867 = vpack.c.bf16 %v2824, %v2823
        %v2868 = vpack.c.bf16 %v2827, %v2826
        %v2869 = vpack.c.bf16 %v2830, %v2829
        %v2870 = vpack.c.bf16 %v2833, %v2832
        %v2871 = vpack.c.bf16 %v2836, %v2835
        %v2872 = vpack.c.bf16 %v2839, %v2838
        %v2873 = vpack.c.bf16 %v2842, %v2841
        %v2874 = vpack.c.bf16 %v2845, %v2844
        %v2875 = vpack.c.bf16 %v2848, %v2847
        %v2876 = vpack.c.bf16 %v2851, %v2850
        %v2877 = vpack.c.bf16 %v2854, %v2853
        %v2894 = vunpack.c.l.b16 %v2862
        %v2895 = vunpack.c.h.b16 %v2862
        %v2896 = vunpack.c.l.b16 %v2863
        %v2897 = vunpack.c.h.b16 %v2863
        %v2898 = vunpack.c.l.b16 %v2864
        %v2899 = vunpack.c.h.b16 %v2864
        %v2900 = vunpack.c.l.b16 %v2865
        %v2901 = vunpack.c.h.b16 %v2865
        %v2902 = vunpack.c.l.b16 %v2866
        %v2903 = vunpack.c.h.b16 %v2866
        %v2904 = vunpack.c.l.b16 %v2867
        %v2905 = vunpack.c.h.b16 %v2867
        %v2906 = vunpack.c.l.b16 %v2868
        %v2907 = vunpack.c.h.b16 %v2868
        %v2908 = vunpack.c.l.b16 %v2869
        %v2909 = vunpack.c.h.b16 %v2869
        %v2910 = vunpack.c.l.b16 %v2870
        %v2911 = vunpack.c.h.b16 %v2870
        %v2912 = vunpack.c.l.b16 %v2871
        %v2913 = vunpack.c.h.b16 %v2871
        %v2914 = vunpack.c.l.b16 %v2872
        %v2915 = vunpack.c.h.b16 %v2872
        %v2916 = vunpack.c.l.b16 %v2873
        %v2917 = vunpack.c.h.b16 %v2873
        %v2918 = vunpack.c.l.b16 %v2874
        %v2919 = vunpack.c.h.b16 %v2874
        %v2920 = vunpack.c.l.b16 %v2875
        %v2921 = vunpack.c.h.b16 %v2875
        %v2922 = vunpack.c.l.b16 %v2876
        %v2923 = vunpack.c.h.b16 %v2876
        %v2924 = vunpack.c.l.b16 %v2877
        %v2925 = vunpack.c.h.b16 %v2877
        %v2926 = vpack.c.b16 %v2894, %v2894
        %v2927 = vpack.c.b16 %v2895, %v2895
        %v2928 = vpack.c.b16 %v2896, %v2896
        %v2929 = vpack.c.b16 %v2897, %v2897
        %v2930 = vpack.c.b16 %v2898, %v2898
        %v2931 = vpack.c.b16 %v2899, %v2899
        %v2932 = vpack.c.b16 %v2900, %v2900
        %v2933 = vpack.c.b16 %v2901, %v2901
        %v2934 = vpack.c.b16 %v2902, %v2902
        %v2935 = vpack.c.b16 %v2903, %v2903
        %v2936 = vpack.c.b16 %v2904, %v2904
        %v2937 = vpack.c.b16 %v2905, %v2905
        %v2938 = vpack.c.b16 %v2906, %v2906
        %v2939 = vpack.c.b16 %v2907, %v2907
        %v2940 = vpack.c.b16 %v2908, %v2908
        %v2941 = vpack.c.b16 %v2909, %v2909
        %v2942 = vpack.c.b16 %v2910, %v2910
        %v2943 = vpack.c.b16 %v2911, %v2911
        %v2944 = vpack.c.b16 %v2912, %v2912
        %v2945 = vpack.c.b16 %v2913, %v2913
        %v2946 = vpack.c.b16 %v2914, %v2914
        %v2947 = vpack.c.b16 %v2915, %v2915
        %v2948 = vpack.c.b16 %v2916, %v2916
        %v2949 = vpack.c.b16 %v2917, %v2917
        %v2950 = vpack.c.b16 %v2918, %v2918
        %v2951 = vpack.c.b16 %v2919, %v2919
        %v2952 = vpack.c.b16 %v2920, %v2920
        %v2953 = vpack.c.b16 %v2921, %v2921
        %v2954 = vpack.c.b16 %v2922, %v2922
        %v2955 = vpack.c.b16 %v2923, %v2923
        %v2956 = vpack.c.b16 %v2924, %v2924
        %v2957 = vpack.c.b16 %v2925, %v2925
        %vm2990 = vcmask 519168
        %2991 = vst.msk [vmem:[#allocation5] sm:$0xf] %vm2990, %v2926
        %2992 = vst.msk [vmem:[#allocation5 + $0x14] sm:$0xf] %vm2990, %v2927
        %2993 = vst.msk [vmem:[#allocation5 + $0x28] sm:$0xf] %vm2990, %v2928
        %2994 = vst.msk [vmem:[#allocation5 + $0x3c] sm:$0xf] %vm2990, %v2929
        %2995 = vst.msk [vmem:[#allocation5 + $0x50] sm:$0xf] %vm2990, %v2930
        %2996 = vst.msk [vmem:[#allocation5 + $0x64] sm:$0xf] %vm2990, %v2931
        %2997 = vst.msk [vmem:[#allocation5 + $0x78] sm:$0xf] %vm2990, %v2932
        %2998 = vst.msk [vmem:[#allocation5 + $0x8c] sm:$0xf] %vm2990, %v2933
        %2999 = vst.msk [vmem:[#allocation5 + $0xa0] sm:$0xf] %vm2990, %v2934
        %3000 = vst.msk [vmem:[#allocation5 + $0xb4] sm:$0xf] %vm2990, %v2935
        %3001 = vst.msk [vmem:[#allocation5 + $0xc8] sm:$0xf] %vm2990, %v2936
        %3002 = vst.msk [vmem:[#allocation5 + $0xdc] sm:$0xf] %vm2990, %v2937
        %3003 = vst.msk [vmem:[#allocation5 + $0xf0] sm:$0xf] %vm2990, %v2938
        %3004 = vst.msk [vmem:[#allocation5 + $0x104] sm:$0xf] %vm2990, %v2939
        %3005 = vst.msk [vmem:[#allocation5 + $0x118] sm:$0xf] %vm2990, %v2940
        %3006 = vst.msk [vmem:[#allocation5 + $0x12c] sm:$0xf] %vm2990, %v2941
        %3007 = vst.msk [vmem:[#allocation5 + $0x140] sm:$0xf] %vm2990, %v2942
        %3008 = vst.msk [vmem:[#allocation5 + $0x154] sm:$0xf] %vm2990, %v2943
        %3009 = vst.msk [vmem:[#allocation5 + $0x168] sm:$0xf] %vm2990, %v2944
        %3010 = vst.msk [vmem:[#allocation5 + $0x17c] sm:$0xf] %vm2990, %v2945
        %3011 = vst.msk [vmem:[#allocation5 + $0x190] sm:$0xf] %vm2990, %v2946
        %3012 = vst.msk [vmem:[#allocation5 + $0x1a4] sm:$0xf] %vm2990, %v2947
        %3013 = vst.msk [vmem:[#allocation5 + $0x1b8] sm:$0xf] %vm2990, %v2948
        %3014 = vst.msk [vmem:[#allocation5 + $0x1cc] sm:$0xf] %vm2990, %v2949
        %3015 = vst.msk [vmem:[#allocation5 + $0x1e0] sm:$0xf] %vm2990, %v2950
        %3016 = vst.msk [vmem:[#allocation5 + $0x1f4] sm:$0xf] %vm2990, %v2951
        %3017 = vst.msk [vmem:[#allocation5 + $0x208] sm:$0xf] %vm2990, %v2952
        %3018 = vst.msk [vmem:[#allocation5 + $0x21c] sm:$0xf] %vm2990, %v2953
        %3019 = vst.msk [vmem:[#allocation5 + $0x230] sm:$0xf] %vm2990, %v2954
        %3020 = vst.msk [vmem:[#allocation5 + $0x244] sm:$0xf] %vm2990, %v2955
        %3021 = vst.msk [vmem:[#allocation5 + $0x258] sm:$0xf] %vm2990, %v2956
        %3022 = vst.msk [vmem:[#allocation5 + $0x26c] sm:$0xf] %vm2990, %v2957
        %v3071 = vrot.slane %v2808, 1
        %v3072 = vrot.slane %v2809, 1
        %v3073 = vsel %vm742, %v3071, %v3072
        %v3074 = vrot.slane %v2810, 1
        %v3075 = vsel %vm742, %v3072, %v3074
        %v3076 = vrot.slane %v2811, 1
        %v3077 = vrot.slane %v2812, 1
        %v3078 = vsel %vm742, %v3076, %v3077
        %v3079 = vrot.slane %v2813, 1
        %v3080 = vsel %vm742, %v3077, %v3079
        %v3081 = vrot.slane %v2814, 1
        %v3082 = vrot.slane %v2815, 1
        %v3083 = vsel %vm742, %v3081, %v3082
        %v3084 = vrot.slane %v2816, 1
        %v3085 = vsel %vm742, %v3082, %v3084
        %v3086 = vrot.slane %v2817, 1
        %v3087 = vrot.slane %v2818, 1
        %v3088 = vsel %vm742, %v3086, %v3087
        %v3089 = vrot.slane %v2819, 1
        %v3090 = vsel %vm742, %v3087, %v3089
        %v3091 = vrot.slane %v2820, 1
        %v3092 = vrot.slane %v2821, 1
        %v3093 = vsel %vm742, %v3091, %v3092
        %v3094 = vrot.slane %v2822, 1
        %v3095 = vsel %vm742, %v3092, %v3094
        %v3096 = vrot.slane %v2823, 1
        %v3097 = vrot.slane %v2824, 1
        %v3098 = vsel %vm742, %v3096, %v3097
        %v3099 = vrot.slane %v2825, 1
        %v3100 = vsel %vm742, %v3097, %v3099
        %v3101 = vrot.slane %v2826, 1
        %v3102 = vrot.slane %v2827, 1
        %v3103 = vsel %vm742, %v3101, %v3102
        %v3104 = vrot.slane %v2828, 1
        %v3105 = vsel %vm742, %v3102, %v3104
        %v3106 = vrot.slane %v2829, 1
        %v3107 = vrot.slane %v2830, 1
        %v3108 = vsel %vm742, %v3106, %v3107
        %v3109 = vrot.slane %v2831, 1
        %v3110 = vsel %vm742, %v3107, %v3109
        %v3111 = vrot.slane %v2832, 1
        %v3112 = vrot.slane %v2833, 1
        %v3113 = vsel %vm742, %v3111, %v3112
        %v3114 = vrot.slane %v2834, 1
        %v3115 = vsel %vm742, %v3112, %v3114
        %v3116 = vrot.slane %v2835, 1
        %v3117 = vrot.slane %v2836, 1
        %v3118 = vsel %vm742, %v3116, %v3117
        %v3119 = vrot.slane %v2837, 1
        %v3120 = vsel %vm742, %v3117, %v3119
        %v3121 = vrot.slane %v2838, 1
        %v3122 = vrot.slane %v2839, 1
        %v3123 = vsel %vm742, %v3121, %v3122
        %v3124 = vrot.slane %v2840, 1
        %v3125 = vsel %vm742, %v3122, %v3124
        %v3126 = vrot.slane %v2841, 1
        %v3127 = vrot.slane %v2842, 1
        %v3128 = vsel %vm742, %v3126, %v3127
        %v3129 = vrot.slane %v2843, 1
        %v3130 = vsel %vm742, %v3127, %v3129
        %v3131 = vrot.slane %v2844, 1
        %v3132 = vrot.slane %v2845, 1
        %v3133 = vsel %vm742, %v3131, %v3132
        %v3134 = vrot.slane %v2846, 1
        %v3135 = vsel %vm742, %v3132, %v3134
        %v3136 = vrot.slane %v2847, 1
        %v3137 = vrot.slane %v2848, 1
        %v3138 = vsel %vm742, %v3136, %v3137
        %v3139 = vrot.slane %v2849, 1
        %v3140 = vsel %vm742, %v3137, %v3139
        %v3141 = vrot.slane %v2850, 1
        %v3142 = vrot.slane %v2851, 1
        %v3143 = vsel %vm742, %v3141, %v3142
        %v3144 = vrot.slane %v2852, 1
        %v3145 = vsel %vm742, %v3142, %v3144
        %v3146 = vrot.slane %v2853, 1
        %v3147 = vrot.slane %v2854, 1
        %v3148 = vsel %vm742, %v3146, %v3147
        %v3149 = vrot.slane %v2855, 1
        %v3150 = vsel %vm742, %v3147, %v3149
        %v3183 = vpack.c.bf16 %v3075, %v3073
        %v3184 = vpack.c.bf16 %v3080, %v3078
        %v3185 = vpack.c.bf16 %v3085, %v3083
        %v3186 = vpack.c.bf16 %v3090, %v3088
        %v3187 = vpack.c.bf16 %v3095, %v3093
        %v3188 = vpack.c.bf16 %v3100, %v3098
        %v3189 = vpack.c.bf16 %v3105, %v3103
        %v3190 = vpack.c.bf16 %v3110, %v3108
        %v3191 = vpack.c.bf16 %v3115, %v3113
        %v3192 = vpack.c.bf16 %v3120, %v3118
        %v3193 = vpack.c.bf16 %v3125, %v3123
        %v3194 = vpack.c.bf16 %v3130, %v3128
        %v3195 = vpack.c.bf16 %v3135, %v3133
        %v3196 = vpack.c.bf16 %v3140, %v3138
        %v3197 = vpack.c.bf16 %v3145, %v3143
        %v3198 = vpack.c.bf16 %v3150, %v3148
        %v3215 = vunpack.c.l.b16 %v3183
        %v3216 = vunpack.c.h.b16 %v3183
        %v3217 = vunpack.c.l.b16 %v3184
        %v3218 = vunpack.c.h.b16 %v3184
        %v3219 = vunpack.c.l.b16 %v3185
        %v3220 = vunpack.c.h.b16 %v3185
        %v3221 = vunpack.c.l.b16 %v3186
        %v3222 = vunpack.c.h.b16 %v3186
        %v3223 = vunpack.c.l.b16 %v3187
        %v3224 = vunpack.c.h.b16 %v3187
        %v3225 = vunpack.c.l.b16 %v3188
        %v3226 = vunpack.c.h.b16 %v3188
        %v3227 = vunpack.c.l.b16 %v3189
        %v3228 = vunpack.c.h.b16 %v3189
        %v3229 = vunpack.c.l.b16 %v3190
        %v3230 = vunpack.c.h.b16 %v3190
        %v3231 = vunpack.c.l.b16 %v3191
        %v3232 = vunpack.c.h.b16 %v3191
        %v3233 = vunpack.c.l.b16 %v3192
        %v3234 = vunpack.c.h.b16 %v3192
        %v3235 = vunpack.c.l.b16 %v3193
        %v3236 = vunpack.c.h.b16 %v3193
        %v3237 = vunpack.c.l.b16 %v3194
        %v3238 = vunpack.c.h.b16 %v3194
        %v3239 = vunpack.c.l.b16 %v3195
        %v3240 = vunpack.c.h.b16 %v3195
        %v3241 = vunpack.c.l.b16 %v3196
        %v3242 = vunpack.c.h.b16 %v3196
        %v3243 = vunpack.c.l.b16 %v3197
        %v3244 = vunpack.c.h.b16 %v3197
        %v3245 = vunpack.c.l.b16 %v3198
        %v3246 = vunpack.c.h.b16 %v3198
        %v3247 = vpack.c.b16 %v3215, %v3215
        %v3248 = vpack.c.b16 %v3216, %v3216
        %v3249 = vpack.c.b16 %v3217, %v3217
        %v3250 = vpack.c.b16 %v3218, %v3218
        %v3251 = vpack.c.b16 %v3219, %v3219
        %v3252 = vpack.c.b16 %v3220, %v3220
        %v3253 = vpack.c.b16 %v3221, %v3221
        %v3254 = vpack.c.b16 %v3222, %v3222
        %v3255 = vpack.c.b16 %v3223, %v3223
        %v3256 = vpack.c.b16 %v3224, %v3224
        %v3257 = vpack.c.b16 %v3225, %v3225
        %v3258 = vpack.c.b16 %v3226, %v3226
        %v3259 = vpack.c.b16 %v3227, %v3227
        %v3260 = vpack.c.b16 %v3228, %v3228
        %v3261 = vpack.c.b16 %v3229, %v3229
        %v3262 = vpack.c.b16 %v3230, %v3230
        %v3263 = vpack.c.b16 %v3231, %v3231
        %v3264 = vpack.c.b16 %v3232, %v3232
        %v3265 = vpack.c.b16 %v3233, %v3233
        %v3266 = vpack.c.b16 %v3234, %v3234
        %v3267 = vpack.c.b16 %v3235, %v3235
        %v3268 = vpack.c.b16 %v3236, %v3236
        %v3269 = vpack.c.b16 %v3237, %v3237
        %v3270 = vpack.c.b16 %v3238, %v3238
        %v3271 = vpack.c.b16 %v3239, %v3239
        %v3272 = vpack.c.b16 %v3240, %v3240
        %v3273 = vpack.c.b16 %v3241, %v3241
        %v3274 = vpack.c.b16 %v3242, %v3242
        %v3275 = vpack.c.b16 %v3243, %v3243
        %v3276 = vpack.c.b16 %v3244, %v3244
        %v3277 = vpack.c.b16 %v3245, %v3245
        %v3278 = vpack.c.b16 %v3246, %v3246
        %3279 = vrot.lane.b32.xlu0 %v3247, 64
        %v3280 = vpop.permute.xlu0 %3279
        %3281 = vrot.lane.b32.xlu0 %v3248, 64
        %v3282 = vpop.permute.xlu0 %3281
        %3283 = vrot.lane.b32.xlu0 %v3249, 64
        %v3284 = vpop.permute.xlu0 %3283
        %3285 = vrot.lane.b32.xlu0 %v3250, 64
        %v3286 = vpop.permute.xlu0 %3285
        %3287 = vrot.lane.b32.xlu0 %v3251, 64
        %v3288 = vpop.permute.xlu0 %3287
        %3289 = vrot.lane.b32.xlu0 %v3252, 64
        %v3290 = vpop.permute.xlu0 %3289
        %3291 = vrot.lane.b32.xlu0 %v3253, 64
        %v3292 = vpop.permute.xlu0 %3291
        %3293 = vrot.lane.b32.xlu0 %v3254, 64
        %v3294 = vpop.permute.xlu0 %3293
        %3295 = vrot.lane.b32.xlu0 %v3255, 64
        %v3296 = vpop.permute.xlu0 %3295
        %3297 = vrot.lane.b32.xlu0 %v3256, 64
        %v3298 = vpop.permute.xlu0 %3297
        %3299 = vrot.lane.b32.xlu0 %v3257, 64
        %v3300 = vpop.permute.xlu0 %3299
        %3301 = vrot.lane.b32.xlu0 %v3258, 64
        %v3302 = vpop.permute.xlu0 %3301
        %3303 = vrot.lane.b32.xlu0 %v3259, 64
        %v3304 = vpop.permute.xlu0 %3303
        %3305 = vrot.lane.b32.xlu0 %v3260, 64
        %v3306 = vpop.permute.xlu0 %3305
        %3307 = vrot.lane.b32.xlu0 %v3261, 64
        %v3308 = vpop.permute.xlu0 %3307
        %3309 = vrot.lane.b32.xlu0 %v3262, 64
        %v3310 = vpop.permute.xlu0 %3309
        %3311 = vrot.lane.b32.xlu0 %v3263, 64
        %v3312 = vpop.permute.xlu0 %3311
        %3313 = vrot.lane.b32.xlu0 %v3264, 64
        %v3314 = vpop.permute.xlu0 %3313
        %3315 = vrot.lane.b32.xlu0 %v3265, 64
        %v3316 = vpop.permute.xlu0 %3315
        %3317 = vrot.lane.b32.xlu0 %v3266, 64
        %v3318 = vpop.permute.xlu0 %3317
        %3319 = vrot.lane.b32.xlu0 %v3267, 64
        %v3320 = vpop.permute.xlu0 %3319
        %3321 = vrot.lane.b32.xlu0 %v3268, 64
        %v3322 = vpop.permute.xlu0 %3321
        %3323 = vrot.lane.b32.xlu0 %v3269, 64
        %v3324 = vpop.permute.xlu0 %3323
        %3325 = vrot.lane.b32.xlu0 %v3270, 64
        %v3326 = vpop.permute.xlu0 %3325
        %3327 = vrot.lane.b32.xlu0 %v3271, 64
        %v3328 = vpop.permute.xlu0 %3327
        %3329 = vrot.lane.b32.xlu0 %v3272, 64
        %v3330 = vpop.permute.xlu0 %3329
        %3331 = vrot.lane.b32.xlu0 %v3273, 64
        %v3332 = vpop.permute.xlu0 %3331
        %3333 = vrot.lane.b32.xlu0 %v3274, 64
        %v3334 = vpop.permute.xlu0 %3333
        %3335 = vrot.lane.b32.xlu0 %v3275, 64
        %v3336 = vpop.permute.xlu0 %3335
        %3337 = vrot.lane.b32.xlu0 %v3276, 64
        %v3338 = vpop.permute.xlu0 %3337
        %3339 = vrot.lane.b32.xlu0 %v3277, 64
        %v3340 = vpop.permute.xlu0 %3339
        %3341 = vrot.lane.b32.xlu0 %v3278, 64
        %v3342 = vpop.permute.xlu0 %3341
        %vm3375 = vcmask 1043968
        %3376 = vst.msk [vmem:[#allocation5] sm:$0xf] %vm3375, %v3280
        %3377 = vst.msk [vmem:[#allocation5 + $0x14] sm:$0xf] %vm3375, %v3282
        %3378 = vst.msk [vmem:[#allocation5 + $0x28] sm:$0xf] %vm3375, %v3284
        %3379 = vst.msk [vmem:[#allocation5 + $0x3c] sm:$0xf] %vm3375, %v3286
        %3380 = vst.msk [vmem:[#allocation5 + $0x50] sm:$0xf] %vm3375, %v3288
        %3381 = vst.msk [vmem:[#allocation5 + $0x64] sm:$0xf] %vm3375, %v3290
        %3382 = vst.msk [vmem:[#allocation5 + $0x78] sm:$0xf] %vm3375, %v3292
        %3383 = vst.msk [vmem:[#allocation5 + $0x8c] sm:$0xf] %vm3375, %v3294
        %3384 = vst.msk [vmem:[#allocation5 + $0xa0] sm:$0xf] %vm3375, %v3296
        %3385 = vst.msk [vmem:[#allocation5 + $0xb4] sm:$0xf] %vm3375, %v3298
        %3386 = vst.msk [vmem:[#allocation5 + $0xc8] sm:$0xf] %vm3375, %v3300
        %3387 = vst.msk [vmem:[#allocation5 + $0xdc] sm:$0xf] %vm3375, %v3302
        %3388 = vst.msk [vmem:[#allocation5 + $0xf0] sm:$0xf] %vm3375, %v3304
        %3389 = vst.msk [vmem:[#allocation5 + $0x104] sm:$0xf] %vm3375, %v3306
        %3390 = vst.msk [vmem:[#allocation5 + $0x118] sm:$0xf] %vm3375, %v3308
        %3391 = vst.msk [vmem:[#allocation5 + $0x12c] sm:$0xf] %vm3375, %v3310
        %3392 = vst.msk [vmem:[#allocation5 + $0x140] sm:$0xf] %vm3375, %v3312
        %3393 = vst.msk [vmem:[#allocation5 + $0x154] sm:$0xf] %vm3375, %v3314
        %3394 = vst.msk [vmem:[#allocation5 + $0x168] sm:$0xf] %vm3375, %v3316
        %3395 = vst.msk [vmem:[#allocation5 + $0x17c] sm:$0xf] %vm3375, %v3318
        %3396 = vst.msk [vmem:[#allocation5 + $0x190] sm:$0xf] %vm3375, %v3320
        %3397 = vst.msk [vmem:[#allocation5 + $0x1a4] sm:$0xf] %vm3375, %v3322
        %3398 = vst.msk [vmem:[#allocation5 + $0x1b8] sm:$0xf] %vm3375, %v3324
        %3399 = vst.msk [vmem:[#allocation5 + $0x1cc] sm:$0xf] %vm3375, %v3326
        %3400 = vst.msk [vmem:[#allocation5 + $0x1e0] sm:$0xf] %vm3375, %v3328
        %3401 = vst.msk [vmem:[#allocation5 + $0x1f4] sm:$0xf] %vm3375, %v3330
        %3402 = vst.msk [vmem:[#allocation5 + $0x208] sm:$0xf] %vm3375, %v3332
        %3403 = vst.msk [vmem:[#allocation5 + $0x21c] sm:$0xf] %vm3375, %v3334
        %3404 = vst.msk [vmem:[#allocation5 + $0x230] sm:$0xf] %vm3375, %v3336
        %3405 = vst.msk [vmem:[#allocation5 + $0x244] sm:$0xf] %vm3375, %v3338
        %3406 = vst.msk [vmem:[#allocation5 + $0x258] sm:$0xf] %vm3375, %v3340
        %3407 = vst.msk [vmem:[#allocation5 + $0x26c] sm:$0xf] %vm3375, %v3342
        %v3408 = vrot.slane %v2808, 2
        %v3409 = vrot.slane %v2809, 2
        %v3410 = vsel %vm1080, %v3408, %v3409
        %v3411 = vrot.slane %v2810, 2
        %v3412 = vsel %vm1080, %v3409, %v3411
        %v3413 = vrot.slane %v2811, 2
        %v3414 = vrot.slane %v2812, 2
        %v3415 = vsel %vm1080, %v3413, %v3414
        %v3416 = vrot.slane %v2813, 2
        %v3417 = vsel %vm1080, %v3414, %v3416
        %v3418 = vrot.slane %v2814, 2
        %v3419 = vrot.slane %v2815, 2
        %v3420 = vsel %vm1080, %v3418, %v3419
        %v3421 = vrot.slane %v2816, 2
        %v3422 = vsel %vm1080, %v3419, %v3421
        %v3423 = vrot.slane %v2817, 2
        %v3424 = vrot.slane %v2818, 2
        %v3425 = vsel %vm1080, %v3423, %v3424
        %v3426 = vrot.slane %v2819, 2
        %v3427 = vsel %vm1080, %v3424, %v3426
        %v3428 = vrot.slane %v2820, 2
        %v3429 = vrot.slane %v2821, 2
        %v3430 = vsel %vm1080, %v3428, %v3429
        %v3431 = vrot.slane %v2822, 2
        %v3432 = vsel %vm1080, %v3429, %v3431
        %v3433 = vrot.slane %v2823, 2
        %v3434 = vrot.slane %v2824, 2
        %v3435 = vsel %vm1080, %v3433, %v3434
        %v3436 = vrot.slane %v2825, 2
        %v3437 = vsel %vm1080, %v3434, %v3436
        %v3438 = vrot.slane %v2826, 2
        %v3439 = vrot.slane %v2827, 2
        %v3440 = vsel %vm1080, %v3438, %v3439
        %v3441 = vrot.slane %v2828, 2
        %v3442 = vsel %vm1080, %v3439, %v3441
        %v3443 = vrot.slane %v2829, 2
        %v3444 = vrot.slane %v2830, 2
        %v3445 = vsel %vm1080, %v3443, %v3444
        %v3446 = vrot.slane %v2831, 2
        %v3447 = vsel %vm1080, %v3444, %v3446
        %v3448 = vrot.slane %v2832, 2
        %v3449 = vrot.slane %v2833, 2
        %v3450 = vsel %vm1080, %v3448, %v3449
        %v3451 = vrot.slane %v2834, 2
        %v3452 = vsel %vm1080, %v3449, %v3451
        %v3453 = vrot.slane %v2835, 2
        %v3454 = vrot.slane %v2836, 2
        %v3455 = vsel %vm1080, %v3453, %v3454
        %v3456 = vrot.slane %v2837, 2
        %v3457 = vsel %vm1080, %v3454, %v3456
        %v3458 = vrot.slane %v2838, 2
        %v3459 = vrot.slane %v2839, 2
        %v3460 = vsel %vm1080, %v3458, %v3459
        %v3461 = vrot.slane %v2840, 2
        %v3462 = vsel %vm1080, %v3459, %v3461
        %v3463 = vrot.slane %v2841, 2
        %v3464 = vrot.slane %v2842, 2
        %v3465 = vsel %vm1080, %v3463, %v3464
        %v3466 = vrot.slane %v2843, 2
        %v3467 = vsel %vm1080, %v3464, %v3466
        %v3468 = vrot.slane %v2844, 2
        %v3469 = vrot.slane %v2845, 2
        %v3470 = vsel %vm1080, %v3468, %v3469
        %v3471 = vrot.slane %v2846, 2
        %v3472 = vsel %vm1080, %v3469, %v3471
        %v3473 = vrot.slane %v2847, 2
        %v3474 = vrot.slane %v2848, 2
        %v3475 = vsel %vm1080, %v3473, %v3474
        %v3476 = vrot.slane %v2849, 2
        %v3477 = vsel %vm1080, %v3474, %v3476
        %v3478 = vrot.slane %v2850, 2
        %v3479 = vrot.slane %v2851, 2
        %v3480 = vsel %vm1080, %v3478, %v3479
        %v3481 = vrot.slane %v2852, 2
        %v3482 = vsel %vm1080, %v3479, %v3481
        %v3483 = vrot.slane %v2853, 2
        %v3484 = vrot.slane %v2854, 2
        %v3485 = vsel %vm1080, %v3483, %v3484
        %v3486 = vrot.slane %v2855, 2
        %v3487 = vsel %vm1080, %v3484, %v3486
        %v3520 = vpack.c.bf16 %v3412, %v3410
        %v3521 = vpack.c.bf16 %v3417, %v3415
        %v3522 = vpack.c.bf16 %v3422, %v3420
        %v3523 = vpack.c.bf16 %v3427, %v3425
        %v3524 = vpack.c.bf16 %v3432, %v3430
        %v3525 = vpack.c.bf16 %v3437, %v3435
        %v3526 = vpack.c.bf16 %v3442, %v3440
        %v3527 = vpack.c.bf16 %v3447, %v3445
        %v3528 = vpack.c.bf16 %v3452, %v3450
        %v3529 = vpack.c.bf16 %v3457, %v3455
        %v3530 = vpack.c.bf16 %v3462, %v3460
        %v3531 = vpack.c.bf16 %v3467, %v3465
        %v3532 = vpack.c.bf16 %v3472, %v3470
        %v3533 = vpack.c.bf16 %v3477, %v3475
        %v3534 = vpack.c.bf16 %v3482, %v3480
        %v3535 = vpack.c.bf16 %v3487, %v3485
        %v3552 = vunpack.c.l.b16 %v3520
        %v3553 = vunpack.c.h.b16 %v3520
        %v3554 = vunpack.c.l.b16 %v3521
        %v3555 = vunpack.c.h.b16 %v3521
        %v3556 = vunpack.c.l.b16 %v3522
        %v3557 = vunpack.c.h.b16 %v3522
        %v3558 = vunpack.c.l.b16 %v3523
        %v3559 = vunpack.c.h.b16 %v3523
        %v3560 = vunpack.c.l.b16 %v3524
        %v3561 = vunpack.c.h.b16 %v3524
        %v3562 = vunpack.c.l.b16 %v3525
        %v3563 = vunpack.c.h.b16 %v3525
        %v3564 = vunpack.c.l.b16 %v3526
        %v3565 = vunpack.c.h.b16 %v3526
        %v3566 = vunpack.c.l.b16 %v3527
        %v3567 = vunpack.c.h.b16 %v3527
        %v3568 = vunpack.c.l.b16 %v3528
        %v3569 = vunpack.c.h.b16 %v3528
        %v3570 = vunpack.c.l.b16 %v3529
        %v3571 = vunpack.c.h.b16 %v3529
        %v3572 = vunpack.c.l.b16 %v3530
        %v3573 = vunpack.c.h.b16 %v3530
        %v3574 = vunpack.c.l.b16 %v3531
        %v3575 = vunpack.c.h.b16 %v3531
        %v3576 = vunpack.c.l.b16 %v3532
        %v3577 = vunpack.c.h.b16 %v3532
        %v3578 = vunpack.c.l.b16 %v3533
        %v3579 = vunpack.c.h.b16 %v3533
        %v3580 = vunpack.c.l.b16 %v3534
        %v3581 = vunpack.c.h.b16 %v3534
        %v3582 = vunpack.c.l.b16 %v3535
        %v3583 = vunpack.c.h.b16 %v3535
        %v3584 = vpack.c.b16 %v3552, %v3552
        %v3585 = vpack.c.b16 %v3553, %v3553
        %v3586 = vpack.c.b16 %v3554, %v3554
        %v3587 = vpack.c.b16 %v3555, %v3555
        %v3588 = vpack.c.b16 %v3556, %v3556
        %v3589 = vpack.c.b16 %v3557, %v3557
        %v3590 = vpack.c.b16 %v3558, %v3558
        %v3591 = vpack.c.b16 %v3559, %v3559
        %v3592 = vpack.c.b16 %v3560, %v3560
        %v3593 = vpack.c.b16 %v3561, %v3561
        %v3594 = vpack.c.b16 %v3562, %v3562
        %v3595 = vpack.c.b16 %v3563, %v3563
        %v3596 = vpack.c.b16 %v3564, %v3564
        %v3597 = vpack.c.b16 %v3565, %v3565
        %v3598 = vpack.c.b16 %v3566, %v3566
        %v3599 = vpack.c.b16 %v3567, %v3567
        %v3600 = vpack.c.b16 %v3568, %v3568
        %v3601 = vpack.c.b16 %v3569, %v3569
        %v3602 = vpack.c.b16 %v3570, %v3570
        %v3603 = vpack.c.b16 %v3571, %v3571
        %v3604 = vpack.c.b16 %v3572, %v3572
        %v3605 = vpack.c.b16 %v3573, %v3573
        %v3606 = vpack.c.b16 %v3574, %v3574
        %v3607 = vpack.c.b16 %v3575, %v3575
        %v3608 = vpack.c.b16 %v3576, %v3576
        %v3609 = vpack.c.b16 %v3577, %v3577
        %v3610 = vpack.c.b16 %v3578, %v3578
        %v3611 = vpack.c.b16 %v3579, %v3579
        %v3612 = vpack.c.b16 %v3580, %v3580
        %v3613 = vpack.c.b16 %v3581, %v3581
        %v3614 = vpack.c.b16 %v3582, %v3582
        %v3615 = vpack.c.b16 %v3583, %v3583
        %3648 = vst.msk [vmem:[#allocation5 + $0x4] sm:$0xf] %vm2990, %v3584
        %3649 = vst.msk [vmem:[#allocation5 + $0x18] sm:$0xf] %vm2990, %v3585
        %3650 = vst.msk [vmem:[#allocation5 + $0x2c] sm:$0xf] %vm2990, %v3586
        %3651 = vst.msk [vmem:[#allocation5 + $0x40] sm:$0xf] %vm2990, %v3587
        %3652 = vst.msk [vmem:[#allocation5 + $0x54] sm:$0xf] %vm2990, %v3588
        %3653 = vst.msk [vmem:[#allocation5 + $0x68] sm:$0xf] %vm2990, %v3589
        %3654 = vst.msk [vmem:[#allocation5 + $0x7c] sm:$0xf] %vm2990, %v3590
        %3655 = vst.msk [vmem:[#allocation5 + $0x90] sm:$0xf] %vm2990, %v3591
        %3656 = vst.msk [vmem:[#allocation5 + $0xa4] sm:$0xf] %vm2990, %v3592
        %3657 = vst.msk [vmem:[#allocation5 + $0xb8] sm:$0xf] %vm2990, %v3593
        %3658 = vst.msk [vmem:[#allocation5 + $0xcc] sm:$0xf] %vm2990, %v3594
        %3659 = vst.msk [vmem:[#allocation5 + $0xe0] sm:$0xf] %vm2990, %v3595
        %3660 = vst.msk [vmem:[#allocation5 + $0xf4] sm:$0xf] %vm2990, %v3596
        %3661 = vst.msk [vmem:[#allocation5 + $0x108] sm:$0xf] %vm2990, %v3597
        %3662 = vst.msk [vmem:[#allocation5 + $0x11c] sm:$0xf] %vm2990, %v3598
        %3663 = vst.msk [vmem:[#allocation5 + $0x130] sm:$0xf] %vm2990, %v3599
        %3664 = vst.msk [vmem:[#allocation5 + $0x144] sm:$0xf] %vm2990, %v3600
        %3665 = vst.msk [vmem:[#allocation5 + $0x158] sm:$0xf] %vm2990, %v3601
        %3666 = vst.msk [vmem:[#allocation5 + $0x16c] sm:$0xf] %vm2990, %v3602
        %3667 = vst.msk [vmem:[#allocation5 + $0x180] sm:$0xf] %vm2990, %v3603
        %3668 = vst.msk [vmem:[#allocation5 + $0x194] sm:$0xf] %vm2990, %v3604
        %3669 = vst.msk [vmem:[#allocation5 + $0x1a8] sm:$0xf] %vm2990, %v3605
        %3670 = vst.msk [vmem:[#allocation5 + $0x1bc] sm:$0xf] %vm2990, %v3606
        %3671 = vst.msk [vmem:[#allocation5 + $0x1d0] sm:$0xf] %vm2990, %v3607
        %3672 = vst.msk [vmem:[#allocation5 + $0x1e4] sm:$0xf] %vm2990, %v3608
        %3673 = vst.msk [vmem:[#allocation5 + $0x1f8] sm:$0xf] %vm2990, %v3609
        %3674 = vst.msk [vmem:[#allocation5 + $0x20c] sm:$0xf] %vm2990, %v3610
        %3675 = vst.msk [vmem:[#allocation5 + $0x220] sm:$0xf] %vm2990, %v3611
        %3676 = vst.msk [vmem:[#allocation5 + $0x234] sm:$0xf] %vm2990, %v3612
        %3677 = vst.msk [vmem:[#allocation5 + $0x248] sm:$0xf] %vm2990, %v3613
        %3678 = vst.msk [vmem:[#allocation5 + $0x25c] sm:$0xf] %vm2990, %v3614
        %3679 = vst.msk [vmem:[#allocation5 + $0x270] sm:$0xf] %vm2990, %v3615
        %v3680 = vpack.c.bf16 %v2857, %v2856
        %v3682 = vunpack.c.l.b16 %v3680
        %v3683 = vunpack.c.h.b16 %v3680
        %v3684 = vpack.c.b16 %v3682, %v3682
        %v3685 = vpack.c.b16 %v3683, %v3683
        %3686 = vrot.lane.b32.xlu0 %v2928, 64
        %v3687 = vpop.permute.xlu0 %3686
        %3688 = vrot.lane.b32.xlu0 %v2929, 64
        %v3689 = vpop.permute.xlu0 %3688
        %3690 = vrot.lane.b32.xlu0 %v2930, 64
        %v3691 = vpop.permute.xlu0 %3690
        %3692 = vrot.lane.b32.xlu0 %v2931, 64
        %v3693 = vpop.permute.xlu0 %3692
        %3694 = vrot.lane.b32.xlu0 %v2932, 64
        %v3695 = vpop.permute.xlu0 %3694
        %3696 = vrot.lane.b32.xlu0 %v2933, 64
        %v3697 = vpop.permute.xlu0 %3696
        %3698 = vrot.lane.b32.xlu0 %v2934, 64
        %v3699 = vpop.permute.xlu0 %3698
        %3700 = vrot.lane.b32.xlu0 %v2935, 64
        %v3701 = vpop.permute.xlu0 %3700
        %3702 = vrot.lane.b32.xlu0 %v2936, 64
        %v3703 = vpop.permute.xlu0 %3702
        %3704 = vrot.lane.b32.xlu0 %v2937, 64
        %v3705 = vpop.permute.xlu0 %3704
        %3706 = vrot.lane.b32.xlu0 %v2938, 64
        %v3707 = vpop.permute.xlu0 %3706
        %3708 = vrot.lane.b32.xlu0 %v2939, 64
        %v3709 = vpop.permute.xlu0 %3708
        %3710 = vrot.lane.b32.xlu0 %v2940, 64
        %v3711 = vpop.permute.xlu0 %3710
        %3712 = vrot.lane.b32.xlu0 %v2941, 64
        %v3713 = vpop.permute.xlu0 %3712
        %3714 = vrot.lane.b32.xlu0 %v2942, 64
        %v3715 = vpop.permute.xlu0 %3714
        %3716 = vrot.lane.b32.xlu0 %v2943, 64
        %v3717 = vpop.permute.xlu0 %3716
        %3718 = vrot.lane.b32.xlu0 %v2944, 64
        %v3719 = vpop.permute.xlu0 %3718
        %3720 = vrot.lane.b32.xlu0 %v2945, 64
        %v3721 = vpop.permute.xlu0 %3720
        %3722 = vrot.lane.b32.xlu0 %v2946, 64
        %v3723 = vpop.permute.xlu0 %3722
        %3724 = vrot.lane.b32.xlu0 %v2947, 64
        %v3725 = vpop.permute.xlu0 %3724
        %3726 = vrot.lane.b32.xlu0 %v2948, 64
        %v3727 = vpop.permute.xlu0 %3726
        %3728 = vrot.lane.b32.xlu0 %v2949, 64
        %v3729 = vpop.permute.xlu0 %3728
        %3730 = vrot.lane.b32.xlu0 %v2950, 64
        %v3731 = vpop.permute.xlu0 %3730
        %3732 = vrot.lane.b32.xlu0 %v2951, 64
        %v3733 = vpop.permute.xlu0 %3732
        %3734 = vrot.lane.b32.xlu0 %v2952, 64
        %v3735 = vpop.permute.xlu0 %3734
        %3736 = vrot.lane.b32.xlu0 %v2953, 64
        %v3737 = vpop.permute.xlu0 %3736
        %3738 = vrot.lane.b32.xlu0 %v2954, 64
        %v3739 = vpop.permute.xlu0 %3738
        %3740 = vrot.lane.b32.xlu0 %v2955, 64
        %v3741 = vpop.permute.xlu0 %3740
        %3742 = vrot.lane.b32.xlu0 %v2956, 64
        %v3743 = vpop.permute.xlu0 %3742
        %3744 = vrot.lane.b32.xlu0 %v2957, 64
        %v3745 = vpop.permute.xlu0 %3744
        %3746 = vrot.lane.b32.xlu0 %v3684, 64
        %v3747 = vpop.permute.xlu0 %3746
        %3748 = vrot.lane.b32.xlu0 %v3685, 64
        %v3749 = vpop.permute.xlu0 %3748
        %3782 = vst.msk [vmem:[#allocation5 + $0x4] sm:$0xf] %vm3375, %v3687
        %3783 = vst.msk [vmem:[#allocation5 + $0x18] sm:$0xf] %vm3375, %v3689
        %3784 = vst.msk [vmem:[#allocation5 + $0x2c] sm:$0xf] %vm3375, %v3691
        %3785 = vst.msk [vmem:[#allocation5 + $0x40] sm:$0xf] %vm3375, %v3693
        %3786 = vst.msk [vmem:[#allocation5 + $0x54] sm:$0xf] %vm3375, %v3695
        %3787 = vst.msk [vmem:[#allocation5 + $0x68] sm:$0xf] %vm3375, %v3697
        %3788 = vst.msk [vmem:[#allocation5 + $0x7c] sm:$0xf] %vm3375, %v3699
        %3789 = vst.msk [vmem:[#allocation5 + $0x90] sm:$0xf] %vm3375, %v3701
        %3790 = vst.msk [vmem:[#allocation5 + $0xa4] sm:$0xf] %vm3375, %v3703
        %3791 = vst.msk [vmem:[#allocation5 + $0xb8] sm:$0xf] %vm3375, %v3705
        %3792 = vst.msk [vmem:[#allocation5 + $0xcc] sm:$0xf] %vm3375, %v3707
        %3793 = vst.msk [vmem:[#allocation5 + $0xe0] sm:$0xf] %vm3375, %v3709
        %3794 = vst.msk [vmem:[#allocation5 + $0xf4] sm:$0xf] %vm3375, %v3711
        %3795 = vst.msk [vmem:[#allocation5 + $0x108] sm:$0xf] %vm3375, %v3713
        %3796 = vst.msk [vmem:[#allocation5 + $0x11c] sm:$0xf] %vm3375, %v3715
        %3797 = vst.msk [vmem:[#allocation5 + $0x130] sm:$0xf] %vm3375, %v3717
        %3798 = vst.msk [vmem:[#allocation5 + $0x144] sm:$0xf] %vm3375, %v3719
        %3799 = vst.msk [vmem:[#allocation5 + $0x158] sm:$0xf] %vm3375, %v3721
        %3800 = vst.msk [vmem:[#allocation5 + $0x16c] sm:$0xf] %vm3375, %v3723
        %3801 = vst.msk [vmem:[#allocation5 + $0x180] sm:$0xf] %vm3375, %v3725
        %3802 = vst.msk [vmem:[#allocation5 + $0x194] sm:$0xf] %vm3375, %v3727
        %3803 = vst.msk [vmem:[#allocation5 + $0x1a8] sm:$0xf] %vm3375, %v3729
        %3804 = vst.msk [vmem:[#allocation5 + $0x1bc] sm:$0xf] %vm3375, %v3731
        %3805 = vst.msk [vmem:[#allocation5 + $0x1d0] sm:$0xf] %vm3375, %v3733
        %3806 = vst.msk [vmem:[#allocation5 + $0x1e4] sm:$0xf] %vm3375, %v3735
        %3807 = vst.msk [vmem:[#allocation5 + $0x1f8] sm:$0xf] %vm3375, %v3737
        %3808 = vst.msk [vmem:[#allocation5 + $0x20c] sm:$0xf] %vm3375, %v3739
        %3809 = vst.msk [vmem:[#allocation5 + $0x220] sm:$0xf] %vm3375, %v3741
        %3810 = vst.msk [vmem:[#allocation5 + $0x234] sm:$0xf] %vm3375, %v3743
        %3811 = vst.msk [vmem:[#allocation5 + $0x248] sm:$0xf] %vm3375, %v3745
        %3812 = vst.msk [vmem:[#allocation5 + $0x25c] sm:$0xf] %vm3375, %v3747
        %3813 = vst.msk [vmem:[#allocation5 + $0x270] sm:$0xf] %vm3375, %v3749
        %v3817 = vrot.slane %v2856, 1
        %v3818 = vrot.slane %v2857, 1
        %v3819 = vsel %vm742, %v3817, %v3818
        %v3820 = vrot.slane %v2858, 1
        %v3821 = vsel %vm742, %v3818, %v3820
        %v3824 = vpack.c.bf16 %v3821, %v3819
        %v3826 = vunpack.c.l.b16 %v3824
        %v3827 = vunpack.c.h.b16 %v3824
        %v3828 = vpack.c.b16 %v3826, %v3826
        %v3829 = vpack.c.b16 %v3827, %v3827
        %3862 = vst.msk [vmem:[#allocation5 + $0x8] sm:$0xf] %vm2990, %v3249
        %3863 = vst.msk [vmem:[#allocation5 + $0x1c] sm:$0xf] %vm2990, %v3250
        %3864 = vst.msk [vmem:[#allocation5 + $0x30] sm:$0xf] %vm2990, %v3251
        %3865 = vst.msk [vmem:[#allocation5 + $0x44] sm:$0xf] %vm2990, %v3252
        %3866 = vst.msk [vmem:[#allocation5 + $0x58] sm:$0xf] %vm2990, %v3253
        %3867 = vst.msk [vmem:[#allocation5 + $0x6c] sm:$0xf] %vm2990, %v3254
        %3868 = vst.msk [vmem:[#allocation5 + $0x80] sm:$0xf] %vm2990, %v3255
        %3869 = vst.msk [vmem:[#allocation5 + $0x94] sm:$0xf] %vm2990, %v3256
        %3870 = vst.msk [vmem:[#allocation5 + $0xa8] sm:$0xf] %vm2990, %v3257
        %3871 = vst.msk [vmem:[#allocation5 + $0xbc] sm:$0xf] %vm2990, %v3258
        %3872 = vst.msk [vmem:[#allocation5 + $0xd0] sm:$0xf] %vm2990, %v3259
        %3873 = vst.msk [vmem:[#allocation5 + $0xe4] sm:$0xf] %vm2990, %v3260
        %3874 = vst.msk [vmem:[#allocation5 + $0xf8] sm:$0xf] %vm2990, %v3261
        %3875 = vst.msk [vmem:[#allocation5 + $0x10c] sm:$0xf] %vm2990, %v3262
        %3876 = vst.msk [vmem:[#allocation5 + $0x120] sm:$0xf] %vm2990, %v3263
        %3877 = vst.msk [vmem:[#allocation5 + $0x134] sm:$0xf] %vm2990, %v3264
        %3878 = vst.msk [vmem:[#allocation5 + $0x148] sm:$0xf] %vm2990, %v3265
        %3879 = vst.msk [vmem:[#allocation5 + $0x15c] sm:$0xf] %vm2990, %v3266
        %3880 = vst.msk [vmem:[#allocation5 + $0x170] sm:$0xf] %vm2990, %v3267
        %3881 = vst.msk [vmem:[#allocation5 + $0x184] sm:$0xf] %vm2990, %v3268
        %3882 = vst.msk [vmem:[#allocation5 + $0x198] sm:$0xf] %vm2990, %v3269
        %3883 = vst.msk [vmem:[#allocation5 + $0x1ac] sm:$0xf] %vm2990, %v3270
        %3884 = vst.msk [vmem:[#allocation5 + $0x1c0] sm:$0xf] %vm2990, %v3271
        %3885 = vst.msk [vmem:[#allocation5 + $0x1d4] sm:$0xf] %vm2990, %v3272
        %3886 = vst.msk [vmem:[#allocation5 + $0x1e8] sm:$0xf] %vm2990, %v3273
        %3887 = vst.msk [vmem:[#allocation5 + $0x1fc] sm:$0xf] %vm2990, %v3274
        %3888 = vst.msk [vmem:[#allocation5 + $0x210] sm:$0xf] %vm2990, %v3275
        %3889 = vst.msk [vmem:[#allocation5 + $0x224] sm:$0xf] %vm2990, %v3276
        %3890 = vst.msk [vmem:[#allocation5 + $0x238] sm:$0xf] %vm2990, %v3277
        %3891 = vst.msk [vmem:[#allocation5 + $0x24c] sm:$0xf] %vm2990, %v3278
        %3892 = vst.msk [vmem:[#allocation5 + $0x260] sm:$0xf] %vm2990, %v3828
        %3893 = vst.msk [vmem:[#allocation5 + $0x274] sm:$0xf] %vm2990, %v3829
        %v3894 = vrot.slane %v2856, 2
        %v3895 = vrot.slane %v2857, 2
        %v3896 = vsel %vm1080, %v3894, %v3895
        %v3897 = vrot.slane %v2858, 2
        %v3898 = vsel %vm1080, %v3895, %v3897
        %v3901 = vpack.c.bf16 %v3898, %v3896
        %v3903 = vunpack.c.l.b16 %v3901
        %v3904 = vunpack.c.h.b16 %v3901
        %v3905 = vpack.c.b16 %v3903, %v3903
        %v3906 = vpack.c.b16 %v3904, %v3904
        %3907 = vrot.lane.b32.xlu0 %v3586, 64
        %v3908 = vpop.permute.xlu0 %3907
        %3909 = vrot.lane.b32.xlu0 %v3587, 64
        %v3910 = vpop.permute.xlu0 %3909
        %3911 = vrot.lane.b32.xlu0 %v3588, 64
        %v3912 = vpop.permute.xlu0 %3911
        %3913 = vrot.lane.b32.xlu0 %v3589, 64
        %v3914 = vpop.permute.xlu0 %3913
        %3915 = vrot.lane.b32.xlu0 %v3590, 64
        %v3916 = vpop.permute.xlu0 %3915
        %3917 = vrot.lane.b32.xlu0 %v3591, 64
        %v3918 = vpop.permute.xlu0 %3917
        %3919 = vrot.lane.b32.xlu0 %v3592, 64
        %v3920 = vpop.permute.xlu0 %3919
        %3921 = vrot.lane.b32.xlu0 %v3593, 64
        %v3922 = vpop.permute.xlu0 %3921
        %3923 = vrot.lane.b32.xlu0 %v3594, 64
        %v3924 = vpop.permute.xlu0 %3923
        %3925 = vrot.lane.b32.xlu0 %v3595, 64
        %v3926 = vpop.permute.xlu0 %3925
        %3927 = vrot.lane.b32.xlu0 %v3596, 64
        %v3928 = vpop.permute.xlu0 %3927
        %3929 = vrot.lane.b32.xlu0 %v3597, 64
        %v3930 = vpop.permute.xlu0 %3929
        %3931 = vrot.lane.b32.xlu0 %v3598, 64
        %v3932 = vpop.permute.xlu0 %3931
        %3933 = vrot.lane.b32.xlu0 %v3599, 64
        %v3934 = vpop.permute.xlu0 %3933
        %3935 = vrot.lane.b32.xlu0 %v3600, 64
        %v3936 = vpop.permute.xlu0 %3935
        %3937 = vrot.lane.b32.xlu0 %v3601, 64
        %v3938 = vpop.permute.xlu0 %3937
        %3939 = vrot.lane.b32.xlu0 %v3602, 64
        %v3940 = vpop.permute.xlu0 %3939
        %3941 = vrot.lane.b32.xlu0 %v3603, 64
        %v3942 = vpop.permute.xlu0 %3941
        %3943 = vrot.lane.b32.xlu0 %v3604, 64
        %v3944 = vpop.permute.xlu0 %3943
        %3945 = vrot.lane.b32.xlu0 %v3605, 64
        %v3946 = vpop.permute.xlu0 %3945
        %3947 = vrot.lane.b32.xlu0 %v3606, 64
        %v3948 = vpop.permute.xlu0 %3947
        %3949 = vrot.lane.b32.xlu0 %v3607, 64
        %v3950 = vpop.permute.xlu0 %3949
        %3951 = vrot.lane.b32.xlu0 %v3608, 64
        %v3952 = vpop.permute.xlu0 %3951
        %3953 = vrot.lane.b32.xlu0 %v3609, 64
        %v3954 = vpop.permute.xlu0 %3953
        %3955 = vrot.lane.b32.xlu0 %v3610, 64
        %v3956 = vpop.permute.xlu0 %3955
        %3957 = vrot.lane.b32.xlu0 %v3611, 64
        %v3958 = vpop.permute.xlu0 %3957
        %3959 = vrot.lane.b32.xlu0 %v3612, 64
        %v3960 = vpop.permute.xlu0 %3959
        %3961 = vrot.lane.b32.xlu0 %v3613, 64
        %v3962 = vpop.permute.xlu0 %3961
        %3963 = vrot.lane.b32.xlu0 %v3614, 64
        %v3964 = vpop.permute.xlu0 %3963
        %3965 = vrot.lane.b32.xlu0 %v3615, 64
        %v3966 = vpop.permute.xlu0 %3965
        %3967 = vrot.lane.b32.xlu0 %v3905, 64
        %v3968 = vpop.permute.xlu0 %3967
        %3969 = vrot.lane.b32.xlu0 %v3906, 64
        %v3970 = vpop.permute.xlu0 %3969
        %4003 = vst.msk [vmem:[#allocation5 + $0x8] sm:$0xf] %vm3375, %v3908
        %4004 = vst.msk [vmem:[#allocation5 + $0x1c] sm:$0xf] %vm3375, %v3910
        %4005 = vst.msk [vmem:[#allocation5 + $0x30] sm:$0xf] %vm3375, %v3912
        %4006 = vst.msk [vmem:[#allocation5 + $0x44] sm:$0xf] %vm3375, %v3914
        %4007 = vst.msk [vmem:[#allocation5 + $0x58] sm:$0xf] %vm3375, %v3916
        %4008 = vst.msk [vmem:[#allocation5 + $0x6c] sm:$0xf] %vm3375, %v3918
        %4009 = vst.msk [vmem:[#allocation5 + $0x80] sm:$0xf] %vm3375, %v3920
        %4010 = vst.msk [vmem:[#allocation5 + $0x94] sm:$0xf] %vm3375, %v3922
        %4011 = vst.msk [vmem:[#allocation5 + $0xa8] sm:$0xf] %vm3375, %v3924
        %4012 = vst.msk [vmem:[#allocation5 + $0xbc] sm:$0xf] %vm3375, %v3926
        %4013 = vst.msk [vmem:[#allocation5 + $0xd0] sm:$0xf] %vm3375, %v3928
        %4014 = vst.msk [vmem:[#allocation5 + $0xe4] sm:$0xf] %vm3375, %v3930
        %4015 = vst.msk [vmem:[#allocation5 + $0xf8] sm:$0xf] %vm3375, %v3932
        %4016 = vst.msk [vmem:[#allocation5 + $0x10c] sm:$0xf] %vm3375, %v3934
        %4017 = vst.msk [vmem:[#allocation5 + $0x120] sm:$0xf] %vm3375, %v3936
        %4018 = vst.msk [vmem:[#allocation5 + $0x134] sm:$0xf] %vm3375, %v3938
        %4019 = vst.msk [vmem:[#allocation5 + $0x148] sm:$0xf] %vm3375, %v3940
        %4020 = vst.msk [vmem:[#allocation5 + $0x15c] sm:$0xf] %vm3375, %v3942
        %4021 = vst.msk [vmem:[#allocation5 + $0x170] sm:$0xf] %vm3375, %v3944
        %4022 = vst.msk [vmem:[#allocation5 + $0x184] sm:$0xf] %vm3375, %v3946
        %4023 = vst.msk [vmem:[#allocation5 + $0x198] sm:$0xf] %vm3375, %v3948
        %4024 = vst.msk [vmem:[#allocation5 + $0x1ac] sm:$0xf] %vm3375, %v3950
        %4025 = vst.msk [vmem:[#allocation5 + $0x1c0] sm:$0xf] %vm3375, %v3952
        %4026 = vst.msk [vmem:[#allocation5 + $0x1d4] sm:$0xf] %vm3375, %v3954
        %4027 = vst.msk [vmem:[#allocation5 + $0x1e8] sm:$0xf] %vm3375, %v3956
        %4028 = vst.msk [vmem:[#allocation5 + $0x1fc] sm:$0xf] %vm3375, %v3958
        %4029 = vst.msk [vmem:[#allocation5 + $0x210] sm:$0xf] %vm3375, %v3960
        %4030 = vst.msk [vmem:[#allocation5 + $0x224] sm:$0xf] %vm3375, %v3962
        %4031 = vst.msk [vmem:[#allocation5 + $0x238] sm:$0xf] %vm3375, %v3964
        %4032 = vst.msk [vmem:[#allocation5 + $0x24c] sm:$0xf] %vm3375, %v3966
        %4033 = vst.msk [vmem:[#allocation5 + $0x260] sm:$0xf] %vm3375, %v3968
        %4034 = vst.msk [vmem:[#allocation5 + $0x274] sm:$0xf] %vm3375, %v3970
        %v4035 = vpack.c.bf16 %v2860, %v2859
        %v4037 = vunpack.c.l.b16 %v4035
        %v4038 = vunpack.c.h.b16 %v4035
        %v4039 = vpack.c.b16 %v4037, %v4037
        %v4040 = vpack.c.b16 %v4038, %v4038
        %4045 = vst.msk [vmem:[#allocation5 + $0xc] sm:$0xf] %vm2990, %v2930
        %4046 = vst.msk [vmem:[#allocation5 + $0x20] sm:$0xf] %vm2990, %v2931
        %4047 = vst.msk [vmem:[#allocation5 + $0x34] sm:$0xf] %vm2990, %v2932
        %4048 = vst.msk [vmem:[#allocation5 + $0x48] sm:$0xf] %vm2990, %v2933
        %4049 = vst.msk [vmem:[#allocation5 + $0x5c] sm:$0xf] %vm2990, %v2934
        %4050 = vst.msk [vmem:[#allocation5 + $0x70] sm:$0xf] %vm2990, %v2935
        %4051 = vst.msk [vmem:[#allocation5 + $0x84] sm:$0xf] %vm2990, %v2936
        %4052 = vst.msk [vmem:[#allocation5 + $0x98] sm:$0xf] %vm2990, %v2937
        %4053 = vst.msk [vmem:[#allocation5 + $0xac] sm:$0xf] %vm2990, %v2938
        %4054 = vst.msk [vmem:[#allocation5 + $0xc0] sm:$0xf] %vm2990, %v2939
        %4055 = vst.msk [vmem:[#allocation5 + $0xd4] sm:$0xf] %vm2990, %v2940
        %4056 = vst.msk [vmem:[#allocation5 + $0xe8] sm:$0xf] %vm2990, %v2941
        %4057 = vst.msk [vmem:[#allocation5 + $0xfc] sm:$0xf] %vm2990, %v2942
        %4058 = vst.msk [vmem:[#allocation5 + $0x110] sm:$0xf] %vm2990, %v2943
        %4059 = vst.msk [vmem:[#allocation5 + $0x124] sm:$0xf] %vm2990, %v2944
        %4060 = vst.msk [vmem:[#allocation5 + $0x138] sm:$0xf] %vm2990, %v2945
        %4061 = vst.msk [vmem:[#allocation5 + $0x14c] sm:$0xf] %vm2990, %v2946
        %4062 = vst.msk [vmem:[#allocation5 + $0x160] sm:$0xf] %vm2990, %v2947
        %4063 = vst.msk [vmem:[#allocation5 + $0x174] sm:$0xf] %vm2990, %v2948
        %4064 = vst.msk [vmem:[#allocation5 + $0x188] sm:$0xf] %vm2990, %v2949
        %4065 = vst.msk [vmem:[#allocation5 + $0x19c] sm:$0xf] %vm2990, %v2950
        %4066 = vst.msk [vmem:[#allocation5 + $0x1b0] sm:$0xf] %vm2990, %v2951
        %4067 = vst.msk [vmem:[#allocation5 + $0x1c4] sm:$0xf] %vm2990, %v2952
        %4068 = vst.msk [vmem:[#allocation5 + $0x1d8] sm:$0xf] %vm2990, %v2953
        %4069 = vst.msk [vmem:[#allocation5 + $0x1ec] sm:$0xf] %vm2990, %v2954
        %4070 = vst.msk [vmem:[#allocation5 + $0x200] sm:$0xf] %vm2990, %v2955
        %4071 = vst.msk [vmem:[#allocation5 + $0x214] sm:$0xf] %vm2990, %v2956
        %4072 = vst.msk [vmem:[#allocation5 + $0x228] sm:$0xf] %vm2990, %v2957
        %4073 = vst.msk [vmem:[#allocation5 + $0x23c] sm:$0xf] %vm2990, %v3684
        %4074 = vst.msk [vmem:[#allocation5 + $0x250] sm:$0xf] %vm2990, %v3685
        %4075 = vst.msk [vmem:[#allocation5 + $0x264] sm:$0xf] %vm2990, %v4039
        %4076 = vst.msk [vmem:[#allocation5 + $0x278] sm:$0xf] %vm2990, %v4040
        %v4080 = vrot.slane %v2859, 1
        %v4081 = vrot.slane %v2860, 1
        %v4082 = vsel %vm742, %v4080, %v4081
        %v4083 = vrot.slane %v2861, 1
        %v4084 = vsel %vm742, %v4081, %v4083
        %v4087 = vpack.c.bf16 %v4084, %v4082
        %v4089 = vunpack.c.l.b16 %v4087
        %v4090 = vunpack.c.h.b16 %v4087
        %v4091 = vpack.c.b16 %v4089, %v4089
        %v4092 = vpack.c.b16 %v4090, %v4090
        %4093 = vrot.lane.b32.xlu0 %v3828, 64
        %v4094 = vpop.permute.xlu0 %4093
        %4095 = vrot.lane.b32.xlu0 %v3829, 64
        %v4096 = vpop.permute.xlu0 %4095
        %4097 = vrot.lane.b32.xlu0 %v4091, 64
        %v4098 = vpop.permute.xlu0 %4097
        %4099 = vrot.lane.b32.xlu0 %v4092, 64
        %v4100 = vpop.permute.xlu0 %4099
        %4105 = vst.msk [vmem:[#allocation5 + $0xc] sm:$0xf] %vm3375, %v3288
        %4106 = vst.msk [vmem:[#allocation5 + $0x20] sm:$0xf] %vm3375, %v3290
        %4107 = vst.msk [vmem:[#allocation5 + $0x34] sm:$0xf] %vm3375, %v3292
        %4108 = vst.msk [vmem:[#allocation5 + $0x48] sm:$0xf] %vm3375, %v3294
        %4109 = vst.msk [vmem:[#allocation5 + $0x5c] sm:$0xf] %vm3375, %v3296
        %4110 = vst.msk [vmem:[#allocation5 + $0x70] sm:$0xf] %vm3375, %v3298
        %4111 = vst.msk [vmem:[#allocation5 + $0x84] sm:$0xf] %vm3375, %v3300
        %4112 = vst.msk [vmem:[#allocation5 + $0x98] sm:$0xf] %vm3375, %v3302
        %4113 = vst.msk [vmem:[#allocation5 + $0xac] sm:$0xf] %vm3375, %v3304
        %4114 = vst.msk [vmem:[#allocation5 + $0xc0] sm:$0xf] %vm3375, %v3306
        %4115 = vst.msk [vmem:[#allocation5 + $0xd4] sm:$0xf] %vm3375, %v3308
        %4116 = vst.msk [vmem:[#allocation5 + $0xe8] sm:$0xf] %vm3375, %v3310
        %4117 = vst.msk [vmem:[#allocation5 + $0xfc] sm:$0xf] %vm3375, %v3312
        %4118 = vst.msk [vmem:[#allocation5 + $0x110] sm:$0xf] %vm3375, %v3314
        %4119 = vst.msk [vmem:[#allocation5 + $0x124] sm:$0xf] %vm3375, %v3316
        %4120 = vst.msk [vmem:[#allocation5 + $0x138] sm:$0xf] %vm3375, %v3318
        %4121 = vst.msk [vmem:[#allocation5 + $0x14c] sm:$0xf] %vm3375, %v3320
        %4122 = vst.msk [vmem:[#allocation5 + $0x160] sm:$0xf] %vm3375, %v3322
        %4123 = vst.msk [vmem:[#allocation5 + $0x174] sm:$0xf] %vm3375, %v3324
        %4124 = vst.msk [vmem:[#allocation5 + $0x188] sm:$0xf] %vm3375, %v3326
        %4125 = vst.msk [vmem:[#allocation5 + $0x19c] sm:$0xf] %vm3375, %v3328
        %4126 = vst.msk [vmem:[#allocation5 + $0x1b0] sm:$0xf] %vm3375, %v3330
        %4127 = vst.msk [vmem:[#allocation5 + $0x1c4] sm:$0xf] %vm3375, %v3332
        %4128 = vst.msk [vmem:[#allocation5 + $0x1d8] sm:$0xf] %vm3375, %v3334
        %4129 = vst.msk [vmem:[#allocation5 + $0x1ec] sm:$0xf] %vm3375, %v3336
        %4130 = vst.msk [vmem:[#allocation5 + $0x200] sm:$0xf] %vm3375, %v3338
        %4131 = vst.msk [vmem:[#allocation5 + $0x214] sm:$0xf] %vm3375, %v3340
        %4132 = vst.msk [vmem:[#allocation5 + $0x228] sm:$0xf] %vm3375, %v3342
        %4133 = vst.msk [vmem:[#allocation5 + $0x23c] sm:$0xf] %vm3375, %v4094
        %4134 = vst.msk [vmem:[#allocation5 + $0x250] sm:$0xf] %vm3375, %v4096
        %4135 = vst.msk [vmem:[#allocation5 + $0x264] sm:$0xf] %vm3375, %v4098
        %4136 = vst.msk [vmem:[#allocation5 + $0x278] sm:$0xf] %vm3375, %v4100
        %v4137 = vrot.slane %v2859, 2
        %v4138 = vrot.slane %v2860, 2
        %v4139 = vsel %vm1080, %v4137, %v4138
        %v4140 = vrot.slane %v2861, 2
        %v4141 = vsel %vm1080, %v4138, %v4140
        %v4144 = vpack.c.bf16 %v4141, %v4139
        %v4146 = vunpack.c.l.b16 %v4144
        %v4147 = vunpack.c.h.b16 %v4144
        %v4148 = vpack.c.b16 %v4146, %v4146
        %v4149 = vpack.c.b16 %v4147, %v4147
        %4154 = vst.msk [vmem:[#allocation5 + $0x10] sm:$0xf] %vm2990, %v3588
        %4155 = vst.msk [vmem:[#allocation5 + $0x24] sm:$0xf] %vm2990, %v3589
        %4156 = vst.msk [vmem:[#allocation5 + $0x38] sm:$0xf] %vm2990, %v3590
        %4157 = vst.msk [vmem:[#allocation5 + $0x4c] sm:$0xf] %vm2990, %v3591
        %4158 = vst.msk [vmem:[#allocation5 + $0x60] sm:$0xf] %vm2990, %v3592
        %4159 = vst.msk [vmem:[#allocation5 + $0x74] sm:$0xf] %vm2990, %v3593
        %4160 = vst.msk [vmem:[#allocation5 + $0x88] sm:$0xf] %vm2990, %v3594
        %4161 = vst.msk [vmem:[#allocation5 + $0x9c] sm:$0xf] %vm2990, %v3595
        %4162 = vst.msk [vmem:[#allocation5 + $0xb0] sm:$0xf] %vm2990, %v3596
        %4163 = vst.msk [vmem:[#allocation5 + $0xc4] sm:$0xf] %vm2990, %v3597
        %4164 = vst.msk [vmem:[#allocation5 + $0xd8] sm:$0xf] %vm2990, %v3598
        %4165 = vst.msk [vmem:[#allocation5 + $0xec] sm:$0xf] %vm2990, %v3599
        %4166 = vst.msk [vmem:[#allocation5 + $0x100] sm:$0xf] %vm2990, %v3600
        %4167 = vst.msk [vmem:[#allocation5 + $0x114] sm:$0xf] %vm2990, %v3601
        %4168 = vst.msk [vmem:[#allocation5 + $0x128] sm:$0xf] %vm2990, %v3602
        %4169 = vst.msk [vmem:[#allocation5 + $0x13c] sm:$0xf] %vm2990, %v3603
        %4170 = vst.msk [vmem:[#allocation5 + $0x150] sm:$0xf] %vm2990, %v3604
        %4171 = vst.msk [vmem:[#allocation5 + $0x164] sm:$0xf] %vm2990, %v3605
        %4172 = vst.msk [vmem:[#allocation5 + $0x178] sm:$0xf] %vm2990, %v3606
        %4173 = vst.msk [vmem:[#allocation5 + $0x18c] sm:$0xf] %vm2990, %v3607
        %4174 = vst.msk [vmem:[#allocation5 + $0x1a0] sm:$0xf] %vm2990, %v3608
        %4175 = vst.msk [vmem:[#allocation5 + $0x1b4] sm:$0xf] %vm2990, %v3609
        %4176 = vst.msk [vmem:[#allocation5 + $0x1c8] sm:$0xf] %vm2990, %v3610
        %4177 = vst.msk [vmem:[#allocation5 + $0x1dc] sm:$0xf] %vm2990, %v3611
        %4178 = vst.msk [vmem:[#allocation5 + $0x1f0] sm:$0xf] %vm2990, %v3612
        %4179 = vst.msk [vmem:[#allocation5 + $0x204] sm:$0xf] %vm2990, %v3613
        %4180 = vst.msk [vmem:[#allocation5 + $0x218] sm:$0xf] %vm2990, %v3614
        %4181 = vst.msk [vmem:[#allocation5 + $0x22c] sm:$0xf] %vm2990, %v3615
        %4182 = vst.msk [vmem:[#allocation5 + $0x240] sm:$0xf] %vm2990, %v3905
        %4183 = vst.msk [vmem:[#allocation5 + $0x254] sm:$0xf] %vm2990, %v3906
        %4184 = vst.msk [vmem:[#allocation5 + $0x268] sm:$0xf] %vm2990, %v4148
        %4185 = vst.msk [vmem:[#allocation5 + $0x27c] sm:$0xf] %vm2990, %v4149
        %v4186 = vld [vmem:[#allocation5] sm:$0xff]
        %v4187 = vld [vmem:[#allocation5 + $0x8] sm:$0xff]
        %v4188 = vld [vmem:[#allocation5 + $0x10] sm:$0xf]
        %v4189 = vld [vmem:[#allocation5 + $0x14] sm:$0xff]
        %v4190 = vld [vmem:[#allocation5 + $0x1c] sm:$0xff]
        %v4191 = vld [vmem:[#allocation5 + $0x24] sm:$0xf]
        %v4192 = vld [vmem:[#allocation5 + $0x28] sm:$0xff]
        %v4193 = vld [vmem:[#allocation5 + $0x30] sm:$0xff]
        %v4194 = vld [vmem:[#allocation5 + $0x38] sm:$0xf]
        %v4195 = vld [vmem:[#allocation5 + $0x3c] sm:$0xff]
        %v4196 = vld [vmem:[#allocation5 + $0x44] sm:$0xff]
        %v4197 = vld [vmem:[#allocation5 + $0x4c] sm:$0xf]
        %v4198 = vld [vmem:[#allocation5 + $0x50] sm:$0xff]
        %v4199 = vld [vmem:[#allocation5 + $0x58] sm:$0xff]
        %v4200 = vld [vmem:[#allocation5 + $0x60] sm:$0xf]
        %v4201 = vld [vmem:[#allocation5 + $0x64] sm:$0xff]
        %v4202 = vld [vmem:[#allocation5 + $0x6c] sm:$0xff]
        %v4203 = vld [vmem:[#allocation5 + $0x74] sm:$0xf]
        %v4204 = vld [vmem:[#allocation5 + $0x78] sm:$0xff]
        %v4205 = vld [vmem:[#allocation5 + $0x80] sm:$0xff]
        %v4206 = vld [vmem:[#allocation5 + $0x88] sm:$0xf]
        %v4207 = vld [vmem:[#allocation5 + $0x8c] sm:$0xff]
        %v4208 = vld [vmem:[#allocation5 + $0x94] sm:$0xff]
        %v4209 = vld [vmem:[#allocation5 + $0x9c] sm:$0xf]
        %v4210 = vld [vmem:[#allocation5 + $0xa0] sm:$0xff]
        %v4211 = vld [vmem:[#allocation5 + $0xa8] sm:$0xff]
        %v4212 = vld [vmem:[#allocation5 + $0xb0] sm:$0xf]
        %v4213 = vld [vmem:[#allocation5 + $0xb4] sm:$0xff]
        %v4214 = vld [vmem:[#allocation5 + $0xbc] sm:$0xff]
        %v4215 = vld [vmem:[#allocation5 + $0xc4] sm:$0xf]
        %v4216 = vld [vmem:[#allocation5 + $0xc8] sm:$0xff]
        %v4217 = vld [vmem:[#allocation5 + $0xd0] sm:$0xff]
        %v4218 = vld [vmem:[#allocation5 + $0xd8] sm:$0xf]
        %v4219 = vld [vmem:[#allocation5 + $0xdc] sm:$0xff]
        %v4220 = vld [vmem:[#allocation5 + $0xe4] sm:$0xff]
        %v4221 = vld [vmem:[#allocation5 + $0xec] sm:$0xf]
        %v4222 = vld [vmem:[#allocation5 + $0xf0] sm:$0xff]
        %v4223 = vld [vmem:[#allocation5 + $0xf8] sm:$0xff]
        %v4224 = vld [vmem:[#allocation5 + $0x100] sm:$0xf]
        %v4225 = vld [vmem:[#allocation5 + $0x104] sm:$0xff]
        %v4226 = vld [vmem:[#allocation5 + $0x10c] sm:$0xff]
        %v4227 = vld [vmem:[#allocation5 + $0x114] sm:$0xf]
        %v4228 = vld [vmem:[#allocation5 + $0x118] sm:$0xff]
        %v4229 = vld [vmem:[#allocation5 + $0x120] sm:$0xff]
        %v4230 = vld [vmem:[#allocation5 + $0x128] sm:$0xf]
        %v4231 = vld [vmem:[#allocation5 + $0x12c] sm:$0xff]
        %v4232 = vld [vmem:[#allocation5 + $0x134] sm:$0xff]
        %v4233 = vld [vmem:[#allocation5 + $0x13c] sm:$0xf]
        %v4234 = vld [vmem:[#allocation5 + $0x140] sm:$0xff]
        %v4235 = vld [vmem:[#allocation5 + $0x148] sm:$0xff]
        %v4236 = vld [vmem:[#allocation5 + $0x150] sm:$0xf]
        %v4237 = vld [vmem:[#allocation5 + $0x154] sm:$0xff]
        %v4238 = vld [vmem:[#allocation5 + $0x15c] sm:$0xff]
        %v4239 = vld [vmem:[#allocation5 + $0x164] sm:$0xf]
        %v4240 = vld [vmem:[#allocation5 + $0x168] sm:$0xff]
        %v4241 = vld [vmem:[#allocation5 + $0x170] sm:$0xff]
        %v4242 = vld [vmem:[#allocation5 + $0x178] sm:$0xf]
        %v4243 = vld [vmem:[#allocation5 + $0x17c] sm:$0xff]
        %v4244 = vld [vmem:[#allocation5 + $0x184] sm:$0xff]
        %v4245 = vld [vmem:[#allocation5 + $0x18c] sm:$0xf]
        %v4246 = vld [vmem:[#allocation5 + $0x190] sm:$0xff]
        %v4247 = vld [vmem:[#allocation5 + $0x198] sm:$0xff]
        %v4248 = vld [vmem:[#allocation5 + $0x1a0] sm:$0xf]
        %v4249 = vld [vmem:[#allocation5 + $0x1a4] sm:$0xff]
        %v4250 = vld [vmem:[#allocation5 + $0x1ac] sm:$0xff]
        %v4251 = vld [vmem:[#allocation5 + $0x1b4] sm:$0xf]
        %v4252 = vld [vmem:[#allocation5 + $0x1b8] sm:$0xff]
        %v4253 = vld [vmem:[#allocation5 + $0x1c0] sm:$0xff]
        %v4254 = vld [vmem:[#allocation5 + $0x1c8] sm:$0xf]
        %v4255 = vld [vmem:[#allocation5 + $0x1cc] sm:$0xff]
        %v4256 = vld [vmem:[#allocation5 + $0x1d4] sm:$0xff]
        %v4257 = vld [vmem:[#allocation5 + $0x1dc] sm:$0xf]
        %v4258 = vld [vmem:[#allocation5 + $0x1e0] sm:$0xff]
        %v4259 = vld [vmem:[#allocation5 + $0x1e8] sm:$0xff]
        %v4260 = vld [vmem:[#allocation5 + $0x1f0] sm:$0xf]
        %v4261 = vld [vmem:[#allocation5 + $0x1f4] sm:$0xff]
        %v4262 = vld [vmem:[#allocation5 + $0x1fc] sm:$0xff]
        %v4263 = vld [vmem:[#allocation5 + $0x204] sm:$0xf]
        %v4264 = vld [vmem:[#allocation5 + $0x208] sm:$0xff]
        %v4265 = vld [vmem:[#allocation5 + $0x210] sm:$0xff]
        %v4266 = vld [vmem:[#allocation5 + $0x218] sm:$0xf]
        %v4267 = vld [vmem:[#allocation5 + $0x21c] sm:$0xff]
        %v4268 = vld [vmem:[#allocation5 + $0x224] sm:$0xff]
        %v4269 = vld [vmem:[#allocation5 + $0x22c] sm:$0xf]
        %v4270 = vld [vmem:[#allocation5 + $0x230] sm:$0xff]
        %v4271 = vld [vmem:[#allocation5 + $0x238] sm:$0xff]
        %v4272 = vld [vmem:[#allocation5 + $0x240] sm:$0xf]
        %v4273 = vld [vmem:[#allocation5 + $0x244] sm:$0xff]
        %v4274 = vld [vmem:[#allocation5 + $0x24c] sm:$0xff]
        %v4275 = vld [vmem:[#allocation5 + $0x254] sm:$0xf]
        %v4276 = vld [vmem:[#allocation5 + $0x258] sm:$0xff]
        %v4277 = vld [vmem:[#allocation5 + $0x260] sm:$0xff]
        %v4278 = vld [vmem:[#allocation5 + $0x268] sm:$0xf]
        %v4279 = vld [vmem:[#allocation5 + $0x26c] sm:$0xff]
        %v4280 = vld [vmem:[#allocation5 + $0x274] sm:$0xff]
        %v4281 = vld [vmem:[#allocation5 + $0x27c] sm:$0xf]
        %v4282 = vlaneseq
        %v4283 = vshrl.u32 %v4282, 7
        %v4284 = vsub.s32 0, %v4283
        %v4285 = vrot.slane %v301, %v4284
        %v4382 = vunpack.c.l.b16 %v4186
        %v4383 = vunpack.c.h.b16 %v4186
        %v4384 = vunpack.c.l.b16 %v4187
        %v4385 = vunpack.c.h.b16 %v4187
        %v4386 = vunpack.c.l.b16 %v4188
        %v4387 = vunpack.c.l.b16 %v4189
        %v4388 = vunpack.c.h.b16 %v4189
        %v4389 = vunpack.c.l.b16 %v4190
        %v4390 = vunpack.c.h.b16 %v4190
        %v4391 = vunpack.c.l.b16 %v4191
        %v4392 = vunpack.c.l.b16 %v4192
        %v4393 = vunpack.c.h.b16 %v4192
        %v4394 = vunpack.c.l.b16 %v4193
        %v4395 = vunpack.c.h.b16 %v4193
        %v4396 = vunpack.c.l.b16 %v4194
        %v4397 = vunpack.c.l.b16 %v4195
        %v4398 = vunpack.c.h.b16 %v4195
        %v4399 = vunpack.c.l.b16 %v4196
        %v4400 = vunpack.c.h.b16 %v4196
        %v4401 = vunpack.c.l.b16 %v4197
        %v4402 = vunpack.c.l.b16 %v4198
        %v4403 = vunpack.c.h.b16 %v4198
        %v4404 = vunpack.c.l.b16 %v4199
        %v4405 = vunpack.c.h.b16 %v4199
        %v4406 = vunpack.c.l.b16 %v4200
        %v4407 = vunpack.c.l.b16 %v4201
        %v4408 = vunpack.c.h.b16 %v4201
        %v4409 = vunpack.c.l.b16 %v4202
        %v4410 = vunpack.c.h.b16 %v4202
        %v4411 = vunpack.c.l.b16 %v4203
        %v4412 = vunpack.c.l.b16 %v4204
        %v4413 = vunpack.c.h.b16 %v4204
        %v4414 = vunpack.c.l.b16 %v4205
        %v4415 = vunpack.c.h.b16 %v4205
        %v4416 = vunpack.c.l.b16 %v4206
        %v4417 = vunpack.c.l.b16 %v4207
        %v4418 = vunpack.c.h.b16 %v4207
        %v4419 = vunpack.c.l.b16 %v4208
        %v4420 = vunpack.c.h.b16 %v4208
        %v4421 = vunpack.c.l.b16 %v4209
        %v4422 = vunpack.c.l.b16 %v4210
        %v4423 = vunpack.c.h.b16 %v4210
        %v4424 = vunpack.c.l.b16 %v4211
        %v4425 = vunpack.c.h.b16 %v4211
        %v4426 = vunpack.c.l.b16 %v4212
        %v4427 = vunpack.c.l.b16 %v4213
        %v4428 = vunpack.c.h.b16 %v4213
        %v4429 = vunpack.c.l.b16 %v4214
        %v4430 = vunpack.c.h.b16 %v4214
        %v4431 = vunpack.c.l.b16 %v4215
        %v4432 = vunpack.c.l.b16 %v4216
        %v4433 = vunpack.c.h.b16 %v4216
        %v4434 = vunpack.c.l.b16 %v4217
        %v4435 = vunpack.c.h.b16 %v4217
        %v4436 = vunpack.c.l.b16 %v4218
        %v4437 = vunpack.c.l.b16 %v4219
        %v4438 = vunpack.c.h.b16 %v4219
        %v4439 = vunpack.c.l.b16 %v4220
        %v4440 = vunpack.c.h.b16 %v4220
        %v4441 = vunpack.c.l.b16 %v4221
        %v4442 = vunpack.c.l.b16 %v4222
        %v4443 = vunpack.c.h.b16 %v4222
        %v4444 = vunpack.c.l.b16 %v4223
        %v4445 = vunpack.c.h.b16 %v4223
        %v4446 = vunpack.c.l.b16 %v4224
        %v4447 = vunpack.c.l.b16 %v4225
        %v4448 = vunpack.c.h.b16 %v4225
        %v4449 = vunpack.c.l.b16 %v4226
        %v4450 = vunpack.c.h.b16 %v4226
        %v4451 = vunpack.c.l.b16 %v4227
        %v4452 = vunpack.c.l.b16 %v4228
        %v4453 = vunpack.c.h.b16 %v4228
        %v4454 = vunpack.c.l.b16 %v4229
        %v4455 = vunpack.c.h.b16 %v4229
        %v4456 = vunpack.c.l.b16 %v4230
        %v4457 = vunpack.c.l.b16 %v4231
        %v4458 = vunpack.c.h.b16 %v4231
        %v4459 = vunpack.c.l.b16 %v4232
        %v4460 = vunpack.c.h.b16 %v4232
        %v4461 = vunpack.c.l.b16 %v4233
        %v4462 = vunpack.c.l.b16 %v4234
        %v4463 = vunpack.c.h.b16 %v4234
        %v4464 = vunpack.c.l.b16 %v4235
        %v4465 = vunpack.c.h.b16 %v4235
        %v4466 = vunpack.c.l.b16 %v4236
        %v4467 = vunpack.c.l.b16 %v4237
        %v4468 = vunpack.c.h.b16 %v4237
        %v4469 = vunpack.c.l.b16 %v4238
        %v4470 = vunpack.c.h.b16 %v4238
        %v4471 = vunpack.c.l.b16 %v4239
        %v4472 = vunpack.c.l.b16 %v4240
        %v4473 = vunpack.c.h.b16 %v4240
        %v4474 = vunpack.c.l.b16 %v4241
        %v4475 = vunpack.c.h.b16 %v4241
        %v4476 = vunpack.c.l.b16 %v4242
        %v4477 = vunpack.c.l.b16 %v4243
        %v4478 = vunpack.c.h.b16 %v4243
        %v4479 = vunpack.c.l.b16 %v4244
        %v4480 = vunpack.c.h.b16 %v4244
        %v4481 = vunpack.c.l.b16 %v4245
        %v4482 = vunpack.c.l.b16 %v4246
        %v4483 = vunpack.c.h.b16 %v4246
        %v4484 = vunpack.c.l.b16 %v4247
        %v4485 = vunpack.c.h.b16 %v4247
        %v4486 = vunpack.c.l.b16 %v4248
        %v4487 = vunpack.c.l.b16 %v4249
        %v4488 = vunpack.c.h.b16 %v4249
        %v4489 = vunpack.c.l.b16 %v4250
        %v4490 = vunpack.c.h.b16 %v4250
        %v4491 = vunpack.c.l.b16 %v4251
        %v4492 = vunpack.c.l.b16 %v4252
        %v4493 = vunpack.c.h.b16 %v4252
        %v4494 = vunpack.c.l.b16 %v4253
        %v4495 = vunpack.c.h.b16 %v4253
        %v4496 = vunpack.c.l.b16 %v4254
        %v4497 = vunpack.c.l.b16 %v4255
        %v4498 = vunpack.c.h.b16 %v4255
        %v4499 = vunpack.c.l.b16 %v4256
        %v4500 = vunpack.c.h.b16 %v4256
        %v4501 = vunpack.c.l.b16 %v4257
        %v4502 = vunpack.c.l.b16 %v4258
        %v4503 = vunpack.c.h.b16 %v4258
        %v4504 = vunpack.c.l.b16 %v4259
        %v4505 = vunpack.c.h.b16 %v4259
        %v4506 = vunpack.c.l.b16 %v4260
        %v4507 = vunpack.c.l.b16 %v4261
        %v4508 = vunpack.c.h.b16 %v4261
        %v4509 = vunpack.c.l.b16 %v4262
        %v4510 = vunpack.c.h.b16 %v4262
        %v4511 = vunpack.c.l.b16 %v4263
        %v4512 = vunpack.c.l.b16 %v4264
        %v4513 = vunpack.c.h.b16 %v4264
        %v4514 = vunpack.c.l.b16 %v4265
        %v4515 = vunpack.c.h.b16 %v4265
        %v4516 = vunpack.c.l.b16 %v4266
        %v4517 = vunpack.c.l.b16 %v4267
        %v4518 = vunpack.c.h.b16 %v4267
        %v4519 = vunpack.c.l.b16 %v4268
        %v4520 = vunpack.c.h.b16 %v4268
        %v4521 = vunpack.c.l.b16 %v4269
        %v4522 = vunpack.c.l.b16 %v4270
        %v4523 = vunpack.c.h.b16 %v4270
        %v4524 = vunpack.c.l.b16 %v4271
        %v4525 = vunpack.c.h.b16 %v4271
        %v4526 = vunpack.c.l.b16 %v4272
        %v4527 = vunpack.c.l.b16 %v4273
        %v4528 = vunpack.c.h.b16 %v4273
        %v4529 = vunpack.c.l.b16 %v4274
        %v4530 = vunpack.c.h.b16 %v4274
        %v4531 = vunpack.c.l.b16 %v4275
        %v4532 = vunpack.c.l.b16 %v4276
        %v4533 = vunpack.c.h.b16 %v4276
        %v4534 = vunpack.c.l.b16 %v4277
        %v4535 = vunpack.c.h.b16 %v4277
        %v4536 = vunpack.c.l.b16 %v4278
        %v4537 = vunpack.c.l.b16 %v4279
        %v4538 = vunpack.c.h.b16 %v4279
        %v4539 = vunpack.c.l.b16 %v4280
        %v4540 = vunpack.c.h.b16 %v4280
        %v4541 = vunpack.c.l.b16 %v4281
        %v4542 = vpack.c.b16 %v4387, %v4382
        %v4543 = vpack.c.b16 %v4388, %v4383
        %v4544 = vpack.c.b16 %v4389, %v4384
        %v4545 = vpack.c.b16 %v4390, %v4385
        %v4546 = vpack.c.b16 %v4391, %v4386
        %v4547 = vpack.c.b16 %v4397, %v4392
        %v4548 = vpack.c.b16 %v4398, %v4393
        %v4549 = vpack.c.b16 %v4399, %v4394
        %v4550 = vpack.c.b16 %v4400, %v4395
        %v4551 = vpack.c.b16 %v4401, %v4396
        %v4552 = vpack.c.b16 %v4407, %v4402
        %v4553 = vpack.c.b16 %v4408, %v4403
        %v4554 = vpack.c.b16 %v4409, %v4404
        %v4555 = vpack.c.b16 %v4410, %v4405
        %v4556 = vpack.c.b16 %v4411, %v4406
        %v4557 = vpack.c.b16 %v4417, %v4412
        %v4558 = vpack.c.b16 %v4418, %v4413
        %v4559 = vpack.c.b16 %v4419, %v4414
        %v4560 = vpack.c.b16 %v4420, %v4415
        %v4561 = vpack.c.b16 %v4421, %v4416
        %v4562 = vpack.c.b16 %v4427, %v4422
        %v4563 = vpack.c.b16 %v4428, %v4423
        %v4564 = vpack.c.b16 %v4429, %v4424
        %v4565 = vpack.c.b16 %v4430, %v4425
        %v4566 = vpack.c.b16 %v4431, %v4426
        %v4567 = vpack.c.b16 %v4437, %v4432
        %v4568 = vpack.c.b16 %v4438, %v4433
        %v4569 = vpack.c.b16 %v4439, %v4434
        %v4570 = vpack.c.b16 %v4440, %v4435
        %v4571 = vpack.c.b16 %v4441, %v4436
        %v4572 = vpack.c.b16 %v4447, %v4442
        %v4573 = vpack.c.b16 %v4448, %v4443
        %v4574 = vpack.c.b16 %v4449, %v4444
        %v4575 = vpack.c.b16 %v4450, %v4445
        %v4576 = vpack.c.b16 %v4451, %v4446
        %v4577 = vpack.c.b16 %v4457, %v4452
        %v4578 = vpack.c.b16 %v4458, %v4453
        %v4579 = vpack.c.b16 %v4459, %v4454
        %v4580 = vpack.c.b16 %v4460, %v4455
        %v4581 = vpack.c.b16 %v4461, %v4456
        %v4582 = vpack.c.b16 %v4467, %v4462
        %v4583 = vpack.c.b16 %v4468, %v4463
        %v4584 = vpack.c.b16 %v4469, %v4464
        %v4585 = vpack.c.b16 %v4470, %v4465
        %v4586 = vpack.c.b16 %v4471, %v4466
        %v4587 = vpack.c.b16 %v4477, %v4472
        %v4588 = vpack.c.b16 %v4478, %v4473
        %v4589 = vpack.c.b16 %v4479, %v4474
        %v4590 = vpack.c.b16 %v4480, %v4475
        %v4591 = vpack.c.b16 %v4481, %v4476
        %v4592 = vpack.c.b16 %v4487, %v4482
        %v4593 = vpack.c.b16 %v4488, %v4483
        %v4594 = vpack.c.b16 %v4489, %v4484
        %v4595 = vpack.c.b16 %v4490, %v4485
        %v4596 = vpack.c.b16 %v4491, %v4486
        %v4597 = vpack.c.b16 %v4497, %v4492
        %v4598 = vpack.c.b16 %v4498, %v4493
        %v4599 = vpack.c.b16 %v4499, %v4494
        %v4600 = vpack.c.b16 %v4500, %v4495
        %v4601 = vpack.c.b16 %v4501, %v4496
        %v4602 = vpack.c.b16 %v4507, %v4502
        %v4603 = vpack.c.b16 %v4508, %v4503
        %v4604 = vpack.c.b16 %v4509, %v4504
        %v4605 = vpack.c.b16 %v4510, %v4505
        %v4606 = vpack.c.b16 %v4511, %v4506
        %v4607 = vpack.c.b16 %v4517, %v4512
        %v4608 = vpack.c.b16 %v4518, %v4513
        %v4609 = vpack.c.b16 %v4519, %v4514
        %v4610 = vpack.c.b16 %v4520, %v4515
        %v4611 = vpack.c.b16 %v4521, %v4516
        %v4612 = vpack.c.b16 %v4527, %v4522
        %v4613 = vpack.c.b16 %v4528, %v4523
        %v4614 = vpack.c.b16 %v4529, %v4524
        %v4615 = vpack.c.b16 %v4530, %v4525
        %v4616 = vpack.c.b16 %v4531, %v4526
        %v4617 = vpack.c.b16 %v4537, %v4532
        %v4618 = vpack.c.b16 %v4538, %v4533
        %v4619 = vpack.c.b16 %v4539, %v4534
        %v4620 = vpack.c.b16 %v4540, %v4535
        %v4621 = vpack.c.b16 %v4541, %v4536
        %v4758 = vunpack.c.l.b16 %v228
        %v4759 = vunpack.c.l.b16 %v229
        %v4760 = vunpack.c.l.b16 %v230
        %v4761 = vunpack.c.l.b16 %v231
        %v4762 = vunpack.c.l.b16 %v232
        %v4763 = vunpack.c.l.b16 %v233
        %v4764 = vunpack.c.l.b16 %v234
        %v4765 = vunpack.c.l.b16 %v235
        %v4766 = vunpack.c.l.b16 %v236
        %v4767 = vunpack.c.l.b16 %v237
        %v4768 = vunpack.c.l.b16 %v238
        %v4769 = vunpack.c.l.b16 %v239
        %v4770 = vunpack.c.l.b16 %v240
        %v4771 = vunpack.c.l.b16 %v241
        %v4772 = vunpack.c.l.b16 %v242
        %v4773 = vunpack.c.l.b16 %v243
        %v4774 = vunpack.c.l.b16 %v244
        %v4775 = vunpack.c.l.b16 %v245
        %v4776 = vunpack.c.l.b16 %v246
        %v4777 = vunpack.c.l.b16 %v247
        %v4778 = vunpack.c.l.b16 %v248
        %v4779 = vunpack.c.l.b16 %v249
        %v4780 = vunpack.c.l.b16 %v250
        %v4781 = vunpack.c.l.b16 %v251
        %v4782 = vunpack.c.l.b16 %v252
        %v4783 = vunpack.c.l.b16 %v253
        %v4784 = vunpack.c.l.b16 %v254
        %v4785 = vunpack.c.l.b16 %v255
        %v4786 = vunpack.c.l.b16 %v256
        %v4787 = vunpack.c.l.b16 %v257
        %v4788 = vunpack.c.l.b16 %v258
        %v4789 = vunpack.c.l.b16 %v259
        %v4790 = vunpack.c.l.b16 %v260
        %v4791 = vunpack.c.l.b16 %v261
        %v4792 = vunpack.c.l.b16 %v262
        %v4793 = vunpack.c.l.b16 %v263
        %v4794 = vunpack.c.l.b16 %v264
        %v4795 = vunpack.c.l.b16 %v265
        %v4796 = vunpack.c.l.b16 %v266
        %v4797 = vunpack.c.l.b16 %v267
        %v4798 = vunpack.c.l.b16 %v268
        %v4799 = vunpack.c.l.b16 %v269
        %v4800 = vunpack.c.l.b16 %v270
        %v4801 = vunpack.c.l.b16 %v271
        %v4802 = vunpack.c.l.b16 %v272
        %v4803 = vunpack.c.l.b16 %v273
        %v4804 = vunpack.c.l.b16 %v274
        %v4805 = vunpack.c.l.b16 %v275
        %v4806 = vunpack.c.l.b16 %v276
        %v4807 = vunpack.c.l.b16 %v277
        %v4808 = vunpack.c.l.b16 %v278
        %v4809 = vunpack.c.l.b16 %v279
        %v4810 = vunpack.c.l.b16 %v280
        %v4811 = vunpack.c.l.b16 %v281
        %v4812 = vunpack.c.l.b16 %v282
        %v4813 = vunpack.c.l.b16 %v283
        %v4814 = vunpack.c.l.b16 %v284
        %v4815 = vunpack.c.l.b16 %v285
        %v4816 = vunpack.c.l.b16 %v286
        %v4817 = vunpack.c.l.b16 %v287
        %v4818 = vunpack.c.l.b16 %v288
        %v4819 = vunpack.c.l.b16 %v289
        %v4820 = vunpack.c.l.b16 %v290
        %v4821 = vunpack.c.l.b16 %v291
        %v4822 = vunpack.c.l.b16 %v292
        %v4823 = vunpack.c.l.b16 %v293
        %v4824 = vunpack.c.l.b16 %v294
        %v4825 = vunpack.c.l.b16 %v295
        %v4826 = vunpack.c.l.b16 %v296
        %v4827 = vunpack.c.l.b16 %v297
        %v4828 = vunpack.c.l.b16 %v298
        %v4829 = vunpack.c.l.b16 %v299
        %v4830 = vpack.c.b16 %v4759, %v4758
        %v4831 = vpack.c.b16 %v4761, %v4760
        %v4832 = vpack.c.b16 %v4763, %v4762
        %v4833 = vpack.c.b16 %v4765, %v4764
        %v4834 = vpack.c.b16 %v4767, %v4766
        %v4835 = vpack.c.b16 %v4769, %v4768
        %v4836 = vpack.c.b16 %v4771, %v4770
        %v4837 = vpack.c.b16 %v4773, %v4772
        %v4838 = vpack.c.b16 %v4775, %v4774
        %v4839 = vpack.c.b16 %v4777, %v4776
        %v4840 = vpack.c.b16 %v4779, %v4778
        %v4841 = vpack.c.b16 %v4781, %v4780
        %v4842 = vpack.c.b16 %v4783, %v4782
        %v4843 = vpack.c.b16 %v4785, %v4784
        %v4844 = vpack.c.b16 %v4787, %v4786
        %v4845 = vpack.c.b16 %v4789, %v4788
        %v4846 = vpack.c.b16 %v4791, %v4790
        %v4847 = vpack.c.b16 %v4793, %v4792
        %v4848 = vpack.c.b16 %v4795, %v4794
        %v4849 = vpack.c.b16 %v4797, %v4796
        %v4850 = vpack.c.b16 %v4799, %v4798
        %v4851 = vpack.c.b16 %v4801, %v4800
        %v4852 = vpack.c.b16 %v4803, %v4802
        %v4853 = vpack.c.b16 %v4805, %v4804
        %v4854 = vpack.c.b16 %v4807, %v4806
        %v4855 = vpack.c.b16 %v4809, %v4808
        %v4856 = vpack.c.b16 %v4811, %v4810
        %v4857 = vpack.c.b16 %v4813, %v4812
        %v4858 = vpack.c.b16 %v4815, %v4814
        %v4859 = vpack.c.b16 %v4817, %v4816
        %v4860 = vpack.c.b16 %v4819, %v4818
        %v4861 = vpack.c.b16 %v4821, %v4820
        %v4862 = vpack.c.b16 %v4823, %v4822
        %v4863 = vpack.c.b16 %v4825, %v4824
        %v4864 = vpack.c.b16 %v4827, %v4826
        %v4865 = vpack.c.b16 %v4829, %v4828
        %v4903 = vsel %vm358, %v4546, 0
        %v4906 = vsel %vm358, %v4551, 0
        %v4909 = vsel %vm358, %v4556, 0
        %v4912 = vsel %vm358, %v4561, 0
        %v4915 = vsel %vm358, %v4566, 0
        %v4918 = vsel %vm358, %v4571, 0
        %v4921 = vsel %vm358, %v4576, 0
        %v4924 = vsel %vm358, %v4581, 0
        %v4927 = vsel %vm358, %v4586, 0
        %v4930 = vsel %vm358, %v4591, 0
        %v4933 = vsel %vm358, %v4596, 0
        %v4936 = vsel %vm358, %v4601, 0
        %v4939 = vsel %vm358, %v4606, 0
        %v4942 = vsel %vm358, %v4611, 0
        %v4945 = vsel %vm358, %v4616, 0
        %v4948 = vsel %vm358, %v4621, 0
        %4950 = vmatprep.subr.bf16.mxu0 0
        %4951 = vmatpush1.bf16.msra.mxu0 %v4837
        %4952 = vmatprep.subr.bf16.mxu0 0
        %4953 = vmatpush1.bf16.msra.mxu0 %v4836
        %4954 = vmatprep.subr.bf16.mxu0 0
        %4955 = vmatpush1.bf16.msra.mxu0 %v4835
        %4956 = vmatprep.subr.bf16.mxu0 0
        %4957 = vmatpush1.bf16.msra.mxu0 %v4834
        %4958 = vmatprep.subr.bf16.mxu0 0
        %4959 = vmatpush1.bf16.msra.mxu0 %v4833
        %4960 = vmatprep.subr.bf16.mxu0 0
        %4961 = vmatpush1.bf16.msra.mxu0 %v4832
        %4962 = vmatprep.subr.bf16.mxu0 0
        %4963 = vmatpush1.bf16.msra.mxu0 %v4831
        %4964 = vmatprep.subr.bf16.mxu0 0
        %4965 = vmatpush1.bf16.msra.mxu0 %v4830
        %4966 = vmatprep.subr.bf16.mxu0 0
        %4967 = vmatpush2.bf16.msra.mxu0 %v4845
        %4968 = vmatprep.subr.bf16.mxu0 0
        %4969 = vmatpush2.bf16.msra.mxu0 %v4844
        %4970 = vmatprep.subr.bf16.mxu0 0
        %4971 = vmatpush2.bf16.msra.mxu0 %v4843
        %4972 = vmatprep.subr.bf16.mxu0 0
        %4973 = vmatpush2.bf16.msra.mxu0 %v4842
        %4974 = vmatprep.subr.bf16.mxu0 0
        %4975 = vmatpush2.bf16.msra.mxu0 %v4841
        %4976 = vmatprep.subr.bf16.mxu0 0
        %4977 = vmatpush2.bf16.msra.mxu0 %v4840
        %4978 = vmatprep.subr.bf16.mxu0 0
        %4979 = vmatpush2.bf16.msra.mxu0 %v4839
        %4980 = vmatprep.subr.bf16.mxu0 0
        %4981 = vmatpush2.bf16.msra.mxu0 %v4838
        %4982 = vmatprep.mubr.bf16.mxu0 %v4543
        %4983 = vmatmul.mubr.bf16.gmra.mxu0 %v4542
        %v4984 = vpop.f32.mrf.mxu0
        %v4985 = vadd.f32 %v4285, %v4984
        %v4986 = vpop.f32.mrf.mxu0
        %v4987 = vpop.f32.mrf.mxu0
        %v4988 = vadd.f32 %v4285, %v4987
        %v4989 = vpop.f32.mrf.mxu0
        %4990 = vmatprep.mubr.bf16.mxu0 %v4548
        %4991 = vmatmul.mubr.bf16.gmra.mxu0 %v4547
        %v4992 = vpop.f32.mrf.mxu0
        %v4993 = vadd.f32 %v4285, %v4992
        %v4994 = vpop.f32.mrf.mxu0
        %v4995 = vpop.f32.mrf.mxu0
        %v4996 = vadd.f32 %v4285, %v4995
        %v4997 = vpop.f32.mrf.mxu0
        %4998 = vmatprep.mubr.bf16.mxu0 %v4553
        %4999 = vmatmul.mubr.bf16.gmra.mxu0 %v4552
        %v5000 = vpop.f32.mrf.mxu0
        %v5001 = vadd.f32 %v4285, %v5000
        %v5002 = vpop.f32.mrf.mxu0
        %v5003 = vpop.f32.mrf.mxu0
        %v5004 = vadd.f32 %v4285, %v5003
        %v5005 = vpop.f32.mrf.mxu0
        %5006 = vmatprep.mubr.bf16.mxu0 %v4558
        %5007 = vmatmul.mubr.bf16.gmra.mxu0 %v4557
        %v5008 = vpop.f32.mrf.mxu0
        %v5009 = vadd.f32 %v4285, %v5008
        %v5010 = vpop.f32.mrf.mxu0
        %v5011 = vpop.f32.mrf.mxu0
        %v5012 = vadd.f32 %v4285, %v5011
        %v5013 = vpop.f32.mrf.mxu0
        %5014 = vmatprep.mubr.bf16.mxu0 %v4563
        %5015 = vmatmul.mubr.bf16.gmra.mxu0 %v4562
        %v5016 = vpop.f32.mrf.mxu0
        %v5017 = vadd.f32 %v4285, %v5016
        %v5018 = vpop.f32.mrf.mxu0
        %v5019 = vpop.f32.mrf.mxu0
        %v5020 = vadd.f32 %v4285, %v5019
        %v5021 = vpop.f32.mrf.mxu0
        %5022 = vmatprep.mubr.bf16.mxu0 %v4568
        %5023 = vmatmul.mubr.bf16.gmra.mxu0 %v4567
        %v5024 = vpop.f32.mrf.mxu0
        %v5025 = vadd.f32 %v4285, %v5024
        %v5026 = vpop.f32.mrf.mxu0
        %v5027 = vpop.f32.mrf.mxu0
        %v5028 = vadd.f32 %v4285, %v5027
        %v5029 = vpop.f32.mrf.mxu0
        %5030 = vmatprep.mubr.bf16.mxu0 %v4573
        %5031 = vmatmul.mubr.bf16.gmra.mxu0 %v4572
        %v5032 = vpop.f32.mrf.mxu0
        %v5033 = vadd.f32 %v4285, %v5032
        %v5034 = vpop.f32.mrf.mxu0
        %v5035 = vpop.f32.mrf.mxu0
        %v5036 = vadd.f32 %v4285, %v5035
        %v5037 = vpop.f32.mrf.mxu0
        %5038 = vmatprep.mubr.bf16.mxu0 %v4578
        %5039 = vmatmul.mubr.bf16.gmra.mxu0 %v4577
        %v5040 = vpop.f32.mrf.mxu0
        %v5041 = vadd.f32 %v4285, %v5040
        %v5042 = vpop.f32.mrf.mxu0
        %v5043 = vpop.f32.mrf.mxu0
        %v5044 = vadd.f32 %v4285, %v5043
        %v5045 = vpop.f32.mrf.mxu0
        %5046 = vmatprep.mubr.bf16.mxu0 %v4583
        %5047 = vmatmul.mubr.bf16.gmra.mxu0 %v4582
        %v5048 = vpop.f32.mrf.mxu0
        %v5049 = vadd.f32 %v4285, %v5048
        %v5050 = vpop.f32.mrf.mxu0
        %v5051 = vpop.f32.mrf.mxu0
        %v5052 = vadd.f32 %v4285, %v5051
        %v5053 = vpop.f32.mrf.mxu0
        %5054 = vmatprep.mubr.bf16.mxu0 %v4588
        %5055 = vmatmul.mubr.bf16.gmra.mxu0 %v4587
        %v5056 = vpop.f32.mrf.mxu0
        %v5057 = vadd.f32 %v4285, %v5056
        %v5058 = vpop.f32.mrf.mxu0
        %v5059 = vpop.f32.mrf.mxu0
        %v5060 = vadd.f32 %v4285, %v5059
        %v5061 = vpop.f32.mrf.mxu0
        %5062 = vmatprep.mubr.bf16.mxu0 %v4593
        %5063 = vmatmul.mubr.bf16.gmra.mxu0 %v4592
        %v5064 = vpop.f32.mrf.mxu0
        %v5065 = vadd.f32 %v4285, %v5064
        %v5066 = vpop.f32.mrf.mxu0
        %v5067 = vpop.f32.mrf.mxu0
        %v5068 = vadd.f32 %v4285, %v5067
        %v5069 = vpop.f32.mrf.mxu0
        %5070 = vmatprep.mubr.bf16.mxu0 %v4598
        %5071 = vmatmul.mubr.bf16.gmra.mxu0 %v4597
        %v5072 = vpop.f32.mrf.mxu0
        %v5073 = vadd.f32 %v4285, %v5072
        %v5074 = vpop.f32.mrf.mxu0
        %v5075 = vpop.f32.mrf.mxu0
        %v5076 = vadd.f32 %v4285, %v5075
        %v5077 = vpop.f32.mrf.mxu0
        %5078 = vmatprep.mubr.bf16.mxu0 %v4603
        %5079 = vmatmul.mubr.bf16.gmra.mxu0 %v4602
        %v5080 = vpop.f32.mrf.mxu0
        %v5081 = vadd.f32 %v4285, %v5080
        %v5082 = vpop.f32.mrf.mxu0
        %v5083 = vpop.f32.mrf.mxu0
        %v5084 = vadd.f32 %v4285, %v5083
        %v5085 = vpop.f32.mrf.mxu0
        %5086 = vmatprep.mubr.bf16.mxu0 %v4608
        %5087 = vmatmul.mubr.bf16.gmra.mxu0 %v4607
        %v5088 = vpop.f32.mrf.mxu0
        %v5089 = vadd.f32 %v4285, %v5088
        %v5090 = vpop.f32.mrf.mxu0
        %v5091 = vpop.f32.mrf.mxu0
        %v5092 = vadd.f32 %v4285, %v5091
        %v5093 = vpop.f32.mrf.mxu0
        %5094 = vmatprep.mubr.bf16.mxu0 %v4613
        %5095 = vmatmul.mubr.bf16.gmra.mxu0 %v4612
        %v5096 = vpop.f32.mrf.mxu0
        %v5097 = vadd.f32 %v4285, %v5096
        %v5098 = vpop.f32.mrf.mxu0
        %v5099 = vpop.f32.mrf.mxu0
        %v5100 = vadd.f32 %v4285, %v5099
        %v5101 = vpop.f32.mrf.mxu0
        %5102 = vmatprep.mubr.bf16.mxu0 %v4618
        %5103 = vmatmul.mubr.bf16.gmra.mxu0 %v4617
        %v5104 = vpop.f32.mrf.mxu0
        %v5105 = vadd.f32 %v4285, %v5104
        %v5106 = vpop.f32.mrf.mxu0
        %v5107 = vpop.f32.mrf.mxu0
        %v5108 = vadd.f32 %v4285, %v5107
        %v5109 = vpop.f32.mrf.mxu0
        %5110 = vdwg.mxu0
        %5111 = vmatprep.subr.bf16.mxu0 0
        %5112 = vmatpush1.bf16.msra.mxu0 %v4853
        %5113 = vmatprep.subr.bf16.mxu0 0
        %5114 = vmatpush1.bf16.msra.mxu0 %v4852
        %5115 = vmatprep.subr.bf16.mxu0 0
        %5116 = vmatpush1.bf16.msra.mxu0 %v4851
        %5117 = vmatprep.subr.bf16.mxu0 0
        %5118 = vmatpush1.bf16.msra.mxu0 %v4850
        %5119 = vmatprep.subr.bf16.mxu0 0
        %5120 = vmatpush1.bf16.msra.mxu0 %v4849
        %5121 = vmatprep.subr.bf16.mxu0 0
        %5122 = vmatpush1.bf16.msra.mxu0 %v4848
        %5123 = vmatprep.subr.bf16.mxu0 0
        %5124 = vmatpush1.bf16.msra.mxu0 %v4847
        %5125 = vmatprep.subr.bf16.mxu0 0
        %5126 = vmatpush1.bf16.msra.mxu0 %v4846
        %5127 = vmatprep.subr.bf16.mxu0 0
        %5128 = vmatpush2.bf16.msra.mxu0 %v4861
        %5129 = vmatprep.subr.bf16.mxu0 0
        %5130 = vmatpush2.bf16.msra.mxu0 %v4860
        %5131 = vmatprep.subr.bf16.mxu0 0
        %5132 = vmatpush2.bf16.msra.mxu0 %v4859
        %5133 = vmatprep.subr.bf16.mxu0 0
        %5134 = vmatpush2.bf16.msra.mxu0 %v4858
        %5135 = vmatprep.subr.bf16.mxu0 0
        %5136 = vmatpush2.bf16.msra.mxu0 %v4857
        %5137 = vmatprep.subr.bf16.mxu0 0
        %5138 = vmatpush2.bf16.msra.mxu0 %v4856
        %5139 = vmatprep.subr.bf16.mxu0 0
        %5140 = vmatpush2.bf16.msra.mxu0 %v4855
        %5141 = vmatprep.subr.bf16.mxu0 0
        %5142 = vmatpush2.bf16.msra.mxu0 %v4854
        %5143 = vmatprep.mubr.bf16.mxu0 %v4545
        %5144 = vmatmul.mubr.bf16.gmra.mxu0 %v4544
        %v5145 = vpop.f32.mrf.mxu0
        %v5146 = vadd.f32 %v4985, %v5145
        %v5147 = vpop.f32.mrf.mxu0
        %v5148 = vpop.f32.mrf.mxu0
        %v5149 = vadd.f32 %v4988, %v5148
        %v5150 = vpop.f32.mrf.mxu0
        %5151 = vmatprep.mubr.bf16.mxu0 %v4550
        %5152 = vmatmul.mubr.bf16.gmra.mxu0 %v4549
        %v5153 = vpop.f32.mrf.mxu0
        %v5154 = vadd.f32 %v4993, %v5153
        %v5155 = vpop.f32.mrf.mxu0
        %v5156 = vpop.f32.mrf.mxu0
        %v5157 = vadd.f32 %v4996, %v5156
        %v5158 = vpop.f32.mrf.mxu0
        %5159 = vmatprep.mubr.bf16.mxu0 %v4555
        %5160 = vmatmul.mubr.bf16.gmra.mxu0 %v4554
        %v5161 = vpop.f32.mrf.mxu0
        %v5162 = vadd.f32 %v5001, %v5161
        %v5163 = vpop.f32.mrf.mxu0
        %v5164 = vpop.f32.mrf.mxu0
        %v5165 = vadd.f32 %v5004, %v5164
        %v5166 = vpop.f32.mrf.mxu0
        %5167 = vmatprep.mubr.bf16.mxu0 %v4560
        %5168 = vmatmul.mubr.bf16.gmra.mxu0 %v4559
        %v5169 = vpop.f32.mrf.mxu0
        %v5170 = vadd.f32 %v5009, %v5169
        %v5171 = vpop.f32.mrf.mxu0
        %v5172 = vpop.f32.mrf.mxu0
        %v5173 = vadd.f32 %v5012, %v5172
        %v5174 = vpop.f32.mrf.mxu0
        %5175 = vmatprep.mubr.bf16.mxu0 %v4565
        %5176 = vmatmul.mubr.bf16.gmra.mxu0 %v4564
        %v5177 = vpop.f32.mrf.mxu0
        %v5178 = vadd.f32 %v5017, %v5177
        %v5179 = vpop.f32.mrf.mxu0
        %v5180 = vpop.f32.mrf.mxu0
        %v5181 = vadd.f32 %v5020, %v5180
        %v5182 = vpop.f32.mrf.mxu0
        %5183 = vmatprep.mubr.bf16.mxu0 %v4570
        %5184 = vmatmul.mubr.bf16.gmra.mxu0 %v4569
        %v5185 = vpop.f32.mrf.mxu0
        %v5186 = vadd.f32 %v5025, %v5185
        %v5187 = vpop.f32.mrf.mxu0
        %v5188 = vpop.f32.mrf.mxu0
        %v5189 = vadd.f32 %v5028, %v5188
        %v5190 = vpop.f32.mrf.mxu0
        %5191 = vmatprep.mubr.bf16.mxu0 %v4575
        %5192 = vmatmul.mubr.bf16.gmra.mxu0 %v4574
        %v5193 = vpop.f32.mrf.mxu0
        %v5194 = vadd.f32 %v5033, %v5193
        %v5195 = vpop.f32.mrf.mxu0
        %v5196 = vpop.f32.mrf.mxu0
        %v5197 = vadd.f32 %v5036, %v5196
        %v5198 = vpop.f32.mrf.mxu0
        %5199 = vmatprep.mubr.bf16.mxu0 %v4580
        %5200 = vmatmul.mubr.bf16.gmra.mxu0 %v4579
        %v5201 = vpop.f32.mrf.mxu0
        %v5202 = vadd.f32 %v5041, %v5201
        %v5203 = vpop.f32.mrf.mxu0
        %v5204 = vpop.f32.mrf.mxu0
        %v5205 = vadd.f32 %v5044, %v5204
        %v5206 = vpop.f32.mrf.mxu0
        %5207 = vmatprep.mubr.bf16.mxu0 %v4585
        %5208 = vmatmul.mubr.bf16.gmra.mxu0 %v4584
        %v5209 = vpop.f32.mrf.mxu0
        %v5210 = vadd.f32 %v5049, %v5209
        %v5211 = vpop.f32.mrf.mxu0
        %v5212 = vpop.f32.mrf.mxu0
        %v5213 = vadd.f32 %v5052, %v5212
        %v5214 = vpop.f32.mrf.mxu0
        %5215 = vmatprep.mubr.bf16.mxu0 %v4590
        %5216 = vmatmul.mubr.bf16.gmra.mxu0 %v4589
        %v5217 = vpop.f32.mrf.mxu0
        %v5218 = vadd.f32 %v5057, %v5217
        %v5219 = vpop.f32.mrf.mxu0
        %v5220 = vpop.f32.mrf.mxu0
        %v5221 = vadd.f32 %v5060, %v5220
        %v5222 = vpop.f32.mrf.mxu0
        %5223 = vmatprep.mubr.bf16.mxu0 %v4595
        %5224 = vmatmul.mubr.bf16.gmra.mxu0 %v4594
        %v5225 = vpop.f32.mrf.mxu0
        %v5226 = vadd.f32 %v5065, %v5225
        %v5227 = vpop.f32.mrf.mxu0
        %v5228 = vpop.f32.mrf.mxu0
        %v5229 = vadd.f32 %v5068, %v5228
        %v5230 = vpop.f32.mrf.mxu0
        %5231 = vmatprep.mubr.bf16.mxu0 %v4600
        %5232 = vmatmul.mubr.bf16.gmra.mxu0 %v4599
        %v5233 = vpop.f32.mrf.mxu0
        %v5234 = vadd.f32 %v5073, %v5233
        %v5235 = vpop.f32.mrf.mxu0
        %v5236 = vpop.f32.mrf.mxu0
        %v5237 = vadd.f32 %v5076, %v5236
        %v5238 = vpop.f32.mrf.mxu0
        %5239 = vmatprep.mubr.bf16.mxu0 %v4605
        %5240 = vmatmul.mubr.bf16.gmra.mxu0 %v4604
        %v5241 = vpop.f32.mrf.mxu0
        %v5242 = vadd.f32 %v5081, %v5241
        %v5243 = vpop.f32.mrf.mxu0
        %v5244 = vpop.f32.mrf.mxu0
        %v5245 = vadd.f32 %v5084, %v5244
        %v5246 = vpop.f32.mrf.mxu0
        %5247 = vmatprep.mubr.bf16.mxu0 %v4610
        %5248 = vmatmul.mubr.bf16.gmra.mxu0 %v4609
        %v5249 = vpop.f32.mrf.mxu0
        %v5250 = vadd.f32 %v5089, %v5249
        %v5251 = vpop.f32.mrf.mxu0
        %v5252 = vpop.f32.mrf.mxu0
        %v5253 = vadd.f32 %v5092, %v5252
        %v5254 = vpop.f32.mrf.mxu0
        %5255 = vmatprep.mubr.bf16.mxu0 %v4615
        %5256 = vmatmul.mubr.bf16.gmra.mxu0 %v4614
        %v5257 = vpop.f32.mrf.mxu0
        %v5258 = vadd.f32 %v5097, %v5257
        %v5259 = vpop.f32.mrf.mxu0
        %v5260 = vpop.f32.mrf.mxu0
        %v5261 = vadd.f32 %v5100, %v5260
        %v5262 = vpop.f32.mrf.mxu0
        %5263 = vmatprep.mubr.bf16.mxu0 %v4620
        %5264 = vmatmul.mubr.bf16.gmra.mxu0 %v4619
        %v5265 = vpop.f32.mrf.mxu0
        %v5266 = vadd.f32 %v5105, %v5265
        %v5267 = vpop.f32.mrf.mxu0
        %v5268 = vpop.f32.mrf.mxu0
        %v5269 = vadd.f32 %v5108, %v5268
        %v5270 = vpop.f32.mrf.mxu0
        %5271 = vdwg.mxu0
        %5272 = vmatprep.subr.bf16.mxu0 0
        %5273 = vmatpush1.bf16.msra.mxu0 0
        %5274 = vmatprep.subr.bf16.mxu0 0
        %5275 = vmatpush1.bf16.msra.mxu0 0
        %5276 = vmatprep.subr.bf16.mxu0 0
        %5277 = vmatpush1.bf16.msra.mxu0 0
        %5278 = vmatprep.subr.bf16.mxu0 0
        %5279 = vmatpush1.bf16.msra.mxu0 0
        %5280 = vmatprep.subr.bf16.mxu0 0
        %5281 = vmatpush1.bf16.msra.mxu0 %v4865
        %5282 = vmatprep.subr.bf16.mxu0 0
        %5283 = vmatpush1.bf16.msra.mxu0 %v4864
        %5284 = vmatprep.subr.bf16.mxu0 0
        %5285 = vmatpush1.bf16.msra.mxu0 %v4863
        %5286 = vmatprep.subr.bf16.mxu0 0
        %5287 = vmatpush1.bf16.msra.mxu0 %v4862
        %5288 = vmatprep.subr.bf16.mxu0 0
        %5289 = vmatpush2.bf16.msra.mxu0 0
        %5290 = vmatprep.subr.bf16.mxu0 0
        %5291 = vmatpush2.bf16.msra.mxu0 0
        %5292 = vmatprep.subr.bf16.mxu0 0
        %5293 = vmatpush2.bf16.msra.mxu0 0
        %5294 = vmatprep.subr.bf16.mxu0 0
        %5295 = vmatpush2.bf16.msra.mxu0 0
        %5296 = vmatprep.subr.bf16.mxu0 0
        %5297 = vmatpush2.bf16.msra.mxu0 0
        %5298 = vmatprep.subr.bf16.mxu0 0
        %5299 = vmatpush2.bf16.msra.mxu0 0
        %5300 = vmatprep.subr.bf16.mxu0 0
        %5301 = vmatpush2.bf16.msra.mxu0 0
        %5302 = vmatprep.subr.bf16.mxu0 0
        %5303 = vmatpush2.bf16.msra.mxu0 0
        %5304 = vmatprep.mubr.bf16.mxu0 0
        %5305 = vmatmul.mubr.bf16.gmra.mxu0 %v4903
        %v5306 = vpop.f32.mrf.mxu0
        %v5307 = vadd.f32 %v5146, %v5306
        %v5308 = vpop.f32.mrf.mxu0
        %v5309 = vpop.f32.mrf.mxu0
        %v5310 = vadd.f32 %v5149, %v5309
        %v5311 = vpop.f32.mrf.mxu0
        %5312 = vmatprep.mubr.bf16.mxu0 0
        %5313 = vmatmul.mubr.bf16.gmra.mxu0 %v4906
        %v5314 = vpop.f32.mrf.mxu0
        %v5315 = vadd.f32 %v5154, %v5314
        %v5316 = vpop.f32.mrf.mxu0
        %v5317 = vpop.f32.mrf.mxu0
        %v5318 = vadd.f32 %v5157, %v5317
        %v5319 = vpop.f32.mrf.mxu0
        %5320 = vmatprep.mubr.bf16.mxu0 0
        %5321 = vmatmul.mubr.bf16.gmra.mxu0 %v4909
        %v5322 = vpop.f32.mrf.mxu0
        %v5323 = vadd.f32 %v5162, %v5322
        %v5324 = vpop.f32.mrf.mxu0
        %v5325 = vpop.f32.mrf.mxu0
        %v5326 = vadd.f32 %v5165, %v5325
        %v5327 = vpop.f32.mrf.mxu0
        %5328 = vmatprep.mubr.bf16.mxu0 0
        %5329 = vmatmul.mubr.bf16.gmra.mxu0 %v4912
        %v5330 = vpop.f32.mrf.mxu0
        %v5331 = vadd.f32 %v5170, %v5330
        %v5332 = vpop.f32.mrf.mxu0
        %v5333 = vpop.f32.mrf.mxu0
        %v5334 = vadd.f32 %v5173, %v5333
        %v5335 = vpop.f32.mrf.mxu0
        %5336 = vmatprep.mubr.bf16.mxu0 0
        %5337 = vmatmul.mubr.bf16.gmra.mxu0 %v4915
        %v5338 = vpop.f32.mrf.mxu0
        %v5339 = vadd.f32 %v5178, %v5338
        %v5340 = vpop.f32.mrf.mxu0
        %v5341 = vpop.f32.mrf.mxu0
        %v5342 = vadd.f32 %v5181, %v5341
        %v5343 = vpop.f32.mrf.mxu0
        %5344 = vmatprep.mubr.bf16.mxu0 0
        %5345 = vmatmul.mubr.bf16.gmra.mxu0 %v4918
        %v5346 = vpop.f32.mrf.mxu0
        %v5347 = vadd.f32 %v5186, %v5346
        %v5348 = vpop.f32.mrf.mxu0
        %v5349 = vpop.f32.mrf.mxu0
        %v5350 = vadd.f32 %v5189, %v5349
        %v5351 = vpop.f32.mrf.mxu0
        %5352 = vmatprep.mubr.bf16.mxu0 0
        %5353 = vmatmul.mubr.bf16.gmra.mxu0 %v4921
        %v5354 = vpop.f32.mrf.mxu0
        %v5355 = vadd.f32 %v5194, %v5354
        %v5356 = vpop.f32.mrf.mxu0
        %v5357 = vpop.f32.mrf.mxu0
        %v5358 = vadd.f32 %v5197, %v5357
        %v5359 = vpop.f32.mrf.mxu0
        %5360 = vmatprep.mubr.bf16.mxu0 0
        %5361 = vmatmul.mubr.bf16.gmra.mxu0 %v4924
        %v5362 = vpop.f32.mrf.mxu0
        %v5363 = vadd.f32 %v5202, %v5362
        %v5364 = vpop.f32.mrf.mxu0
        %v5365 = vpop.f32.mrf.mxu0
        %v5366 = vadd.f32 %v5205, %v5365
        %v5367 = vpop.f32.mrf.mxu0
        %5368 = vmatprep.mubr.bf16.mxu0 0
        %5369 = vmatmul.mubr.bf16.gmra.mxu0 %v4927
        %v5370 = vpop.f32.mrf.mxu0
        %v5371 = vadd.f32 %v5210, %v5370
        %v5372 = vpop.f32.mrf.mxu0
        %v5373 = vpop.f32.mrf.mxu0
        %v5374 = vadd.f32 %v5213, %v5373
        %v5375 = vpop.f32.mrf.mxu0
        %5376 = vmatprep.mubr.bf16.mxu0 0
        %5377 = vmatmul.mubr.bf16.gmra.mxu0 %v4930
        %v5378 = vpop.f32.mrf.mxu0
        %v5379 = vadd.f32 %v5218, %v5378
        %v5380 = vpop.f32.mrf.mxu0
        %v5381 = vpop.f32.mrf.mxu0
        %v5382 = vadd.f32 %v5221, %v5381
        %v5383 = vpop.f32.mrf.mxu0
        %5384 = vmatprep.mubr.bf16.mxu0 0
        %5385 = vmatmul.mubr.bf16.gmra.mxu0 %v4933
        %v5386 = vpop.f32.mrf.mxu0
        %v5387 = vadd.f32 %v5226, %v5386
        %v5388 = vpop.f32.mrf.mxu0
        %v5389 = vpop.f32.mrf.mxu0
        %v5390 = vadd.f32 %v5229, %v5389
        %v5391 = vpop.f32.mrf.mxu0
        %5392 = vmatprep.mubr.bf16.mxu0 0
        %5393 = vmatmul.mubr.bf16.gmra.mxu0 %v4936
        %v5394 = vpop.f32.mrf.mxu0
        %v5395 = vadd.f32 %v5234, %v5394
        %v5396 = vpop.f32.mrf.mxu0
        %v5397 = vpop.f32.mrf.mxu0
        %v5398 = vadd.f32 %v5237, %v5397
        %v5399 = vpop.f32.mrf.mxu0
        %5400 = vmatprep.mubr.bf16.mxu0 0
        %5401 = vmatmul.mubr.bf16.gmra.mxu0 %v4939
        %v5402 = vpop.f32.mrf.mxu0
        %v5403 = vadd.f32 %v5242, %v5402
        %v5404 = vpop.f32.mrf.mxu0
        %v5405 = vpop.f32.mrf.mxu0
        %v5406 = vadd.f32 %v5245, %v5405
        %v5407 = vpop.f32.mrf.mxu0
        %5408 = vmatprep.mubr.bf16.mxu0 0
        %5409 = vmatmul.mubr.bf16.gmra.mxu0 %v4942
        %v5410 = vpop.f32.mrf.mxu0
        %v5411 = vadd.f32 %v5250, %v5410
        %v5412 = vpop.f32.mrf.mxu0
        %v5413 = vpop.f32.mrf.mxu0
        %v5414 = vadd.f32 %v5253, %v5413
        %v5415 = vpop.f32.mrf.mxu0
        %5416 = vmatprep.mubr.bf16.mxu0 0
        %5417 = vmatmul.mubr.bf16.gmra.mxu0 %v4945
        %v5418 = vpop.f32.mrf.mxu0
        %v5419 = vadd.f32 %v5258, %v5418
        %v5420 = vpop.f32.mrf.mxu0
        %v5421 = vpop.f32.mrf.mxu0
        %v5422 = vadd.f32 %v5261, %v5421
        %v5423 = vpop.f32.mrf.mxu0
        %5424 = vmatprep.mubr.bf16.mxu0 0
        %5425 = vmatmul.mubr.bf16.gmra.mxu0 %v4948
        %v5426 = vpop.f32.mrf.mxu0
        %v5427 = vadd.f32 %v5266, %v5426
        %v5428 = vpop.f32.mrf.mxu0
        %v5429 = vpop.f32.mrf.mxu0
        %v5430 = vadd.f32 %v5269, %v5429
        %v5431 = vpop.f32.mrf.mxu0
        %5432 = vdwg.mxu0
        %vm5433 = vcmp.gt.f32.partialorder %v5307, 0.0
        %vm5434 = vcmp.gt.f32.partialorder %v5310, 0.0
        %vm5435 = vcmp.gt.f32.partialorder %v5315, 0.0
        %vm5436 = vcmp.gt.f32.partialorder %v5318, 0.0
        %vm5437 = vcmp.gt.f32.partialorder %v5323, 0.0
        %vm5438 = vcmp.gt.f32.partialorder %v5326, 0.0
        %vm5439 = vcmp.gt.f32.partialorder %v5331, 0.0
        %vm5440 = vcmp.gt.f32.partialorder %v5334, 0.0
        %vm5441 = vcmp.gt.f32.partialorder %v5339, 0.0
        %vm5442 = vcmp.gt.f32.partialorder %v5342, 0.0
        %vm5443 = vcmp.gt.f32.partialorder %v5347, 0.0
        %vm5444 = vcmp.gt.f32.partialorder %v5350, 0.0
        %vm5445 = vcmp.gt.f32.partialorder %v5355, 0.0
        %vm5446 = vcmp.gt.f32.partialorder %v5358, 0.0
        %vm5447 = vcmp.gt.f32.partialorder %v5363, 0.0
        %vm5448 = vcmp.gt.f32.partialorder %v5366, 0.0
        %vm5449 = vcmp.gt.f32.partialorder %v5371, 0.0
        %vm5450 = vcmp.gt.f32.partialorder %v5374, 0.0
        %vm5451 = vcmp.gt.f32.partialorder %v5379, 0.0
        %vm5452 = vcmp.gt.f32.partialorder %v5382, 0.0
        %vm5453 = vcmp.gt.f32.partialorder %v5387, 0.0
        %vm5454 = vcmp.gt.f32.partialorder %v5390, 0.0
        %vm5455 = vcmp.gt.f32.partialorder %v5395, 0.0
        %vm5456 = vcmp.gt.f32.partialorder %v5398, 0.0
        %vm5457 = vcmp.gt.f32.partialorder %v5403, 0.0
        %vm5458 = vcmp.gt.f32.partialorder %v5406, 0.0
        %vm5459 = vcmp.gt.f32.partialorder %v5411, 0.0
        %vm5460 = vcmp.gt.f32.partialorder %v5414, 0.0
        %vm5461 = vcmp.gt.f32.partialorder %v5419, 0.0
        %vm5462 = vcmp.gt.f32.partialorder %v5422, 0.0
        %vm5463 = vcmp.gt.f32.partialorder %v5427, 0.0
        %vm5464 = vcmp.gt.f32.partialorder %v5430, 0.0
        %v5465 = vmul.f32 %v5307, 0.01
        %v5466 = vmul.f32 %v5310, 0.01
        %v5467 = vmul.f32 %v5315, 0.01
        %v5468 = vmul.f32 %v5318, 0.01
        %v5469 = vmul.f32 %v5323, 0.01
        %v5470 = vmul.f32 %v5326, 0.01
        %v5471 = vmul.f32 %v5331, 0.01
        %v5472 = vmul.f32 %v5334, 0.01
        %v5473 = vmul.f32 %v5339, 0.01
        %v5474 = vmul.f32 %v5342, 0.01
        %v5475 = vmul.f32 %v5347, 0.01
        %v5476 = vmul.f32 %v5350, 0.01
        %v5477 = vmul.f32 %v5355, 0.01
        %v5478 = vmul.f32 %v5358, 0.01
        %v5479 = vmul.f32 %v5363, 0.01
        %v5480 = vmul.f32 %v5366, 0.01
        %v5481 = vmul.f32 %v5371, 0.01
        %v5482 = vmul.f32 %v5374, 0.01
        %v5483 = vmul.f32 %v5379, 0.01
        %v5484 = vmul.f32 %v5382, 0.01
        %v5485 = vmul.f32 %v5387, 0.01
        %v5486 = vmul.f32 %v5390, 0.01
        %v5487 = vmul.f32 %v5395, 0.01
        %v5488 = vmul.f32 %v5398, 0.01
        %v5489 = vmul.f32 %v5403, 0.01
        %v5490 = vmul.f32 %v5406, 0.01
        %v5491 = vmul.f32 %v5411, 0.01
        %v5492 = vmul.f32 %v5414, 0.01
        %v5493 = vmul.f32 %v5419, 0.01
        %v5494 = vmul.f32 %v5422, 0.01
        %v5495 = vmul.f32 %v5427, 0.01
        %v5496 = vmul.f32 %v5430, 0.01
        %v5497 = vsel %vm5433, %v5307, %v5465
        %v5498 = vsel %vm5434, %v5310, %v5466
        %v5499 = vsel %vm5435, %v5315, %v5467
        %v5500 = vsel %vm5436, %v5318, %v5468
        %v5501 = vsel %vm5437, %v5323, %v5469
        %v5502 = vsel %vm5438, %v5326, %v5470
        %v5503 = vsel %vm5439, %v5331, %v5471
        %v5504 = vsel %vm5440, %v5334, %v5472
        %v5505 = vsel %vm5441, %v5339, %v5473
        %v5506 = vsel %vm5442, %v5342, %v5474
        %v5507 = vsel %vm5443, %v5347, %v5475
        %v5508 = vsel %vm5444, %v5350, %v5476
        %v5509 = vsel %vm5445, %v5355, %v5477
        %v5510 = vsel %vm5446, %v5358, %v5478
        %v5511 = vsel %vm5447, %v5363, %v5479
        %v5512 = vsel %vm5448, %v5366, %v5480
        %v5513 = vsel %vm5449, %v5371, %v5481
        %v5514 = vsel %vm5450, %v5374, %v5482
        %v5515 = vsel %vm5451, %v5379, %v5483
        %v5516 = vsel %vm5452, %v5382, %v5484
        %v5517 = vsel %vm5453, %v5387, %v5485
        %v5518 = vsel %vm5454, %v5390, %v5486
        %v5519 = vsel %vm5455, %v5395, %v5487
        %v5520 = vsel %vm5456, %v5398, %v5488
        %v5521 = vsel %vm5457, %v5403, %v5489
        %v5522 = vsel %vm5458, %v5406, %v5490
        %v5523 = vsel %vm5459, %v5411, %v5491
        %v5524 = vsel %vm5460, %v5414, %v5492
        %v5525 = vsel %vm5461, %v5419, %v5493
        %v5526 = vsel %vm5462, %v5422, %v5494
        %v5527 = vsel %vm5463, %v5427, %v5495
        %v5528 = vsel %vm5464, %v5430, %v5496
        %v5529 = vlaneseq
        %v5530 = vshrl.u32 %v5529, 7
        %v5531 = vsub.s32 1, %v5530
        %v5532 = vrot.slane %v301, %v5531
        %v5533 = vmul.f32 %v5497, %v5532
        %v5534 = vmul.f32 %v5498, %v5532
        %v5535 = vmul.f32 %v5499, %v5532
        %v5536 = vmul.f32 %v5500, %v5532
        %v5537 = vmul.f32 %v5501, %v5532
        %v5538 = vmul.f32 %v5502, %v5532
        %v5539 = vmul.f32 %v5503, %v5532
        %v5540 = vmul.f32 %v5504, %v5532
        %v5541 = vmul.f32 %v5505, %v5532
        %v5542 = vmul.f32 %v5506, %v5532
        %v5543 = vmul.f32 %v5507, %v5532
        %v5544 = vmul.f32 %v5508, %v5532
        %v5545 = vmul.f32 %v5509, %v5532
        %v5546 = vmul.f32 %v5510, %v5532
        %v5547 = vmul.f32 %v5511, %v5532
        %v5548 = vmul.f32 %v5512, %v5532
        %v5549 = vmul.f32 %v5513, %v5532
        %v5550 = vmul.f32 %v5514, %v5532
        %v5551 = vmul.f32 %v5515, %v5532
        %v5552 = vmul.f32 %v5516, %v5532
        %v5553 = vmul.f32 %v5517, %v5532
        %v5554 = vmul.f32 %v5518, %v5532
        %v5555 = vmul.f32 %v5519, %v5532
        %v5556 = vmul.f32 %v5520, %v5532
        %v5557 = vmul.f32 %v5521, %v5532
        %v5558 = vmul.f32 %v5522, %v5532
        %v5559 = vmul.f32 %v5523, %v5532
        %v5560 = vmul.f32 %v5524, %v5532
        %v5561 = vmul.f32 %v5525, %v5532
        %v5562 = vmul.f32 %v5526, %v5532
        %v5563 = vmul.f32 %v5527, %v5532
        %v5564 = vmul.f32 %v5528, %v5532
        %v5565 = vlaneseq
        %v5566 = vshrl.u32 %v5565, 7
        %v5567 = vsub.s32 2, %v5566
        %v5568 = vrot.slane %v301, %v5567
        %v5569 = vadd.f32 %v5533, %v5568
        %v5570 = vadd.f32 %v5534, %v5568
        %v5571 = vadd.f32 %v5535, %v5568
        %v5572 = vadd.f32 %v5536, %v5568
        %v5573 = vadd.f32 %v5537, %v5568
        %v5574 = vadd.f32 %v5538, %v5568
        %v5575 = vadd.f32 %v5539, %v5568
        %v5576 = vadd.f32 %v5540, %v5568
        %v5577 = vadd.f32 %v5541, %v5568
        %v5578 = vadd.f32 %v5542, %v5568
        %v5579 = vadd.f32 %v5543, %v5568
        %v5580 = vadd.f32 %v5544, %v5568
        %v5581 = vadd.f32 %v5545, %v5568
        %v5582 = vadd.f32 %v5546, %v5568
        %v5583 = vadd.f32 %v5547, %v5568
        %v5584 = vadd.f32 %v5548, %v5568
        %v5585 = vadd.f32 %v5549, %v5568
        %v5586 = vadd.f32 %v5550, %v5568
        %v5587 = vadd.f32 %v5551, %v5568
        %v5588 = vadd.f32 %v5552, %v5568
        %v5589 = vadd.f32 %v5553, %v5568
        %v5590 = vadd.f32 %v5554, %v5568
        %v5591 = vadd.f32 %v5555, %v5568
        %v5592 = vadd.f32 %v5556, %v5568
        %v5593 = vadd.f32 %v5557, %v5568
        %v5594 = vadd.f32 %v5558, %v5568
        %v5595 = vadd.f32 %v5559, %v5568
        %v5596 = vadd.f32 %v5560, %v5568
        %v5597 = vadd.f32 %v5561, %v5568
        %v5598 = vadd.f32 %v5562, %v5568
        %v5599 = vadd.f32 %v5563, %v5568
        %v5600 = vadd.f32 %v5564, %v5568
        %vm5601 = vcmask 261120
        %v5602 = vsel %vm5601, %v5569, 0.0
        %v5603 = vsel %vm5601, %v5570, 0.0
        %v5604 = vadd.f32 %v5602, %v5603
        %v5605 = vsel %vm5601, %v5571, 0.0
        %v5606 = vadd.f32 %v5604, %v5605
        %v5607 = vsel %vm5601, %v5572, 0.0
        %v5608 = vadd.f32 %v5606, %v5607
        %v5609 = vsel %vm5601, %v5573, 0.0
        %v5610 = vadd.f32 %v5608, %v5609
        %v5611 = vsel %vm5601, %v5574, 0.0
        %v5612 = vadd.f32 %v5610, %v5611
        %v5613 = vsel %vm5601, %v5575, 0.0
        %v5614 = vadd.f32 %v5612, %v5613
        %v5615 = vsel %vm5601, %v5576, 0.0
        %v5616 = vadd.f32 %v5614, %v5615
        %v5617 = vsel %vm5601, %v5577, 0.0
        %v5618 = vadd.f32 %v5616, %v5617
        %v5619 = vsel %vm5601, %v5578, 0.0
        %v5620 = vadd.f32 %v5618, %v5619
        %v5621 = vsel %vm5601, %v5579, 0.0
        %v5622 = vadd.f32 %v5620, %v5621
        %v5623 = vsel %vm5601, %v5580, 0.0
        %v5624 = vadd.f32 %v5622, %v5623
        %v5625 = vsel %vm5601, %v5581, 0.0
        %v5626 = vadd.f32 %v5624, %v5625
        %v5627 = vsel %vm5601, %v5582, 0.0
        %v5628 = vadd.f32 %v5626, %v5627
        %v5629 = vsel %vm5601, %v5583, 0.0
        %v5630 = vadd.f32 %v5628, %v5629
        %v5631 = vsel %vm5601, %v5584, 0.0
        %v5632 = vadd.f32 %v5630, %v5631
        %v5633 = vsel %vm5601, %v5585, 0.0
        %v5634 = vadd.f32 %v5632, %v5633
        %v5635 = vsel %vm5601, %v5586, 0.0
        %v5636 = vadd.f32 %v5634, %v5635
        %v5637 = vsel %vm5601, %v5587, 0.0
        %v5638 = vadd.f32 %v5636, %v5637
        %v5639 = vsel %vm5601, %v5588, 0.0
        %v5640 = vadd.f32 %v5638, %v5639
        %v5641 = vsel %vm5601, %v5589, 0.0
        %v5642 = vadd.f32 %v5640, %v5641
        %v5643 = vsel %vm5601, %v5590, 0.0
        %v5644 = vadd.f32 %v5642, %v5643
        %v5645 = vsel %vm5601, %v5591, 0.0
        %v5646 = vadd.f32 %v5644, %v5645
        %v5647 = vsel %vm5601, %v5592, 0.0
        %v5648 = vadd.f32 %v5646, %v5647
        %v5649 = vsel %vm5601, %v5593, 0.0
        %v5650 = vadd.f32 %v5648, %v5649
        %v5651 = vsel %vm5601, %v5594, 0.0
        %v5652 = vadd.f32 %v5650, %v5651
        %v5653 = vsel %vm5601, %v5595, 0.0
        %v5654 = vadd.f32 %v5652, %v5653
        %v5655 = vsel %vm5601, %v5596, 0.0
        %v5656 = vadd.f32 %v5654, %v5655
        %v5657 = vsel %vm5601, %v5597, 0.0
        %v5658 = vadd.f32 %v5656, %v5657
        %v5659 = vsel %vm5601, %v5598, 0.0
        %v5660 = vadd.f32 %v5658, %v5659
        %v5661 = vsel %vm5601, %v5599, 0.0
        %v5662 = vadd.f32 %v5660, %v5661
        %v5663 = vsel %vm5601, %v5600, 0.0
        %v5664 = vadd.f32 %v5662, %v5663
        %v5665 = vrot.slane %v5664, 4
        %v5666 = vadd.f32 %v5664, %v5665
        %v5667 = vrot.slane %v5666, 2
        %v5668 = vadd.f32 %v5666, %v5667
        %v5669 = vrot.slane %v5668, 1
        %v5670 = vadd.f32 %v5668, %v5669
        %v5671 = vrcp.pop 256.0
        %v5672 = vmul.f32 %v5670, %v5671
        %vm5673 = vcmask 253952
        %5674 = vst.msk [vmem:[%s216] sm:$0x1] %vm5673, %v5672
        %s5675 = sand.u32 %s137, 1
        %s5676 = scalar_lea.sflag [#allocation7], %s5675
        %s5677 = sand.u32 %s137, 1
        %s5678 = scalar_lea.vmem [#allocation6], %s5677
        // Predicated region
        $region41: #{tpu_custom_call.1} parent=39 // pred_check
          %p5679 = pneg %p147
        $region42: #{tpu_custom_call.1} parent=39 // pred_check_branch
          %5681 = sbr.rel (%p5679) target = $region44
        $region43: #{tpu_custom_call.1} parent=39 // pred_region
          %s5683 = ssub.s32 16, 16
          %5684 = vsyncadd %s5676, %s5683
          %s5685 = smul.addr %s19, 16
          %s5686 = scalar_lea.hbm %s5, %s5685
          %s5688 = sshll.u32 %s5678, 4
          %s5689 = int_to_ptr.vmem [resolvable:$true] %s5688
          %5691 = dma.vmem_to_hbm [thread:$0]  %s5689, 16, %s5686, %s5676
        $region44: #{tpu_custom_call.1} parent=39 // pred_fallthru
          _
      $region40: #{tpu_custom_call.1} parent=5 // pred_fallthru
        _
      %p5692 = scmp.le.s32.totalorder 2, %s14
      // Predicated region
      $region45: #{tpu_custom_call.1} parent=5 // pred_check
        %p5693 = pneg %p5692
      $region46: #{tpu_custom_call.1} parent=5 // pred_check_branch
        %5695 = sbr.rel (%p5693) target = $region48
      $region47: #{tpu_custom_call.1} parent=5 // pred_region
        %s5696 = ssub.s32 %s14, 2
        // Predicated region
        $region49: #{tpu_custom_call.1} parent=47 // pred_check
          %p5697 = pneg %p153
        $region50: #{tpu_custom_call.1} parent=47 // pred_check_branch
          %5699 = sbr.rel (%p5697) target = $region52
        $region51: #{tpu_custom_call.1} parent=47 // pred_region
          %s5700 = sand.u32 %s138, 1
          %s5701 = scalar_lea.sflag [#allocation7], %s5700
          %s5702 = sand.u32 %s138, 1
          %s5703 = scalar_lea.vmem [#allocation6], %s5702
          %5704 = dma.done %s5701, 16
        $region52: #{tpu_custom_call.1} parent=47 // pred_fallthru
          _
      $region48: #{tpu_custom_call.1} parent=5 // pred_fallthru
        _
    $region6: #{tpu_custom_call.1} parent=1 // loop_footer
      %s18 = sadd.s32 1, %s14
    $region7: #{tpu_custom_call.1} parent=1 // loop_footer_branch
      %13 = sbr.rel target = $region3
    $region8: #{tpu_custom_call.1} parent=1 // loop_exit
      _
    %5705 = vsyncpa [#allocation7], 1
    %s5706 = scalar_lea.sflag [#allocation7], 1
    %5707 = vsyncpa %s5706, 1

</llo_original>
